<compile_context>
chip_gen: v6e
topology: v6e:2x2x1
jax: 0.10.0
libtpu: 0.0.40
codegen_flags: <defaults>
</compile_context>

<pallas_src>
import functools

import numpy as np
import jax
import jax.numpy as jnp
from jax.experimental import pallas as pl
from jax.experimental.pallas import tpu as pltpu


# ----------------------------------------------------------------------------
# Fused kernel: conv1+pool1 -> conv2+pool2 -> fc1 -> fc2 -> fc3  (one grid step
# processes a block of Bblk images stacked along the sublane/M dimension).
# ----------------------------------------------------------------------------
def cnn_fused_kernel(x_ref, w1c_ref, b1c_ref, sw1_ref, sh1_ref,
                     w2c_ref, b2c_ref, sw2_ref, sh2_ref,
                     wf1_ref, bf1_ref, wf2_ref, bf2_ref, wf3_ref, bf3_ref,
                     o_ref, *, K, Ci1, Co1, Ho1, Wo1, Hp1,
                     Co2, Ho2, Wo2, Hp2, Wp2, Bblk):
    """x_ref : (Bblk, Hin1, Win1*Ci1) channel-fastest slabs
       w*c   : stacked block-diagonal conv weights (K*K*Wo*Ci, Wo*Co), bf16
       sw*/sh*: max-pool even-position / row selection matrices, f32
       wf*   : FC weights (fc1 permuted to HWC-slab order; fc3 zero-padded), bf16
       o_ref : (Bblk, NPAD) lane-dense logits (first out_ columns are real)."""

    def conv_relu_pool(slabs, wc_ref, b_ref, sw_ref, sh_ref, Ci, Co, Ho, Wo):
        # One MXU matmul for all K*K taps and all Bblk images.
        pieces = []
        for xb in slabs:
            taps = [xb[kh:kh + Ho, kw * Ci:(kw + Wo) * Ci]
                    for kh in range(K) for kw in range(K)]
            pieces.append(jnp.concatenate(taps, axis=1))       # (Ho, K*K*Wo*Ci)
        patches = pieces[0] if len(pieces) == 1 else jnp.concatenate(pieces, axis=0)
        acc = jnp.dot(patches.astype(jnp.bfloat16), wc_ref[...],
                      preferred_element_type=jnp.float32)      # (Bblk*Ho, Wo*Co)
        y = jnp.maximum(acc + b_ref[...], 0.0)                 # bias + ReLU in f32
        # width pool: pairwise max of adjacent column blocks + even-position selection
        pw = jnp.maximum(y[:, :(Wo - 1) * Co], y[:, Co:])
        pcol = jnp.dot(pw, sw_ref[...], preferred_element_type=jnp.float32)
        # height pool: pairwise max of adjacent rows + row-selection matmul
        prow = jnp.maximum(pcol[:-1, :], pcol[1:, :])
        return jnp.dot(sh_ref[...], prow, preferred_element_type=jnp.float32)

    # stage 1: output rows are b-major (image-contiguous) for stage-2 patch slicing
    h1 = conv_relu_pool([x_ref[b] for b in range(Bblk)],
                        w1c_ref, b1c_ref, sw1_ref, sh1_ref, Ci1, Co1, Ho1, Wo1)
    # stage 2: output rows are h-major (via sh2) so fc1 needs no in-kernel transpose
    h2 = conv_relu_pool([h1[b * Hp1:(b + 1) * Hp1, :] for b in range(Bblk)],
                        w2c_ref, b2c_ref, sw2_ref, sh2_ref, Co1, Co2, Ho2, Wo2)

    # FC head: flatten(CHW) @ fc1_w.T == sum_h (rows of height h) @ wf1[h-block]
    F2 = Wp2 * Co2
    h = jnp.zeros((Bblk, wf1_ref.shape[1]), jnp.float32)
    for hh in range(Hp2):
        q = h2[hh * Bblk:(hh + 1) * Bblk, :].astype(jnp.bfloat16)
        h = h + jnp.dot(q, wf1_ref[hh * F2:(hh + 1) * F2, :],
                        preferred_element_type=jnp.float32)
    h = jnp.maximum(h + bf1_ref[...], 0.0)
    h = jnp.dot(h.astype(jnp.bfloat16), wf2_ref[...],
                preferred_element_type=jnp.float32) + bf2_ref[...]
    h = jnp.maximum(h, 0.0)
    o_ref[...] = jnp.dot(h.astype(jnp.bfloat16), wf3_ref[...],
                         preferred_element_type=jnp.float32) + bf3_ref[...]


# ----------------------------------------------------------------------------
# One-time preprocessing of PyTorch-layout params into kernel operands.
# ----------------------------------------------------------------------------
def prepare_params(p, B, H, W):
    Co1, Ci1, K, _ = p['conv1_w'].shape
    Co2 = p['conv2_w'].shape[0]
    Ho1, Wo1 = H - K + 1, W - K + 1
    Hp1, Wp1 = Ho1 // 2, Wo1 // 2
    Ho2, Wo2 = Hp1 - K + 1, Wp1 - K + 1
    Hp2, Wp2 = Ho2 // 2, Wo2 // 2
    out_ = p['fc3_w'].shape[0]
    hid1 = p['fc1_w'].shape[0]
    hid2 = p['fc2_w'].shape[0]
    npad = max(128, ((out_ + 127) // 128) * 128)        # lane-dense logits store

    nblk = 2 if (B % 2 == 0) else 1                     # keep both v7x TCs busy
    Bblk = B // nblk

    def block_diag(w, Wo):
        Co, Ci, K_, _ = w.shape
        wt = jnp.transpose(w, (2, 3, 1, 0)).reshape(K_ * K_, Ci, Co)
        eye = jnp.eye(Wo, dtype=jnp.float32)
        bdw = jnp.einsum('tio,jk->tjiko', wt, eye)      # (tap, j, ci, k, co)
        return bdw.reshape(K_ * K_ * Wo * Ci, Wo * Co).astype(jnp.bfloat16)

    def width_sel(Wo, Co):
        Wp = Wo // 2
        m = np.zeros(((Wo - 1) * Co, Wp * Co), np.float32)
        for j in range(Wp):
            for c in range(Co):
                m[2 * j * Co + c, j * Co + c] = 1.0
        return jnp.asarray(m)

    def height_sel(Ho, h_major):
        Hp = Ho // 2
        m = np.zeros((Bblk * Hp, Bblk * Ho - 1), np.float32)
        for b in range(Bblk):
            for h in range(Hp):
                r = h * Bblk + b if h_major else b * Hp + h
                m[r, b * Ho + 2 * h] = 1.0
        return jnp.asarray(m)

    # fc1: permute columns from PyTorch CHW-flatten order to the kernel's HWC slab order
    wf1 = jnp.transpose(p['fc1_w'].reshape(hid1, Co2, Hp2, Wp2), (2, 3, 1, 0))
    wf1 = wf1.reshape(Hp2 * Wp2 * Co2, hid1).astype(jnp.bfloat16)

    wf3 = jnp.zeros((hid2, npad), jnp.float32).at[:, :out_].set(p['fc3_w'].T)
    bf3 = jnp.zeros((1, npad), jnp.float32).at[0, :out_].set(p['fc3_b'])

    prep = dict(
        w1c=block_diag(p['conv1_w'], Wo1),
        b1c=jnp.tile(p['conv1_b'], Wo1).reshape(1, Wo1 * Co1),
        sw1=width_sel(Wo1, Co1),
        sh1=height_sel(Ho1, h_major=False),
        w2c=block_diag(p['conv2_w'], Wo2),
        b2c=jnp.tile(p['conv2_b'], Wo2).reshape(1, Wo2 * Co2),
        sw2=width_sel(Wo2, Co2),
        sh2=height_sel(Ho2, h_major=True),
        wf1=wf1,
        bf1=p['fc1_b'].reshape(1, hid1),
        wf2=p['fc2_w'].T.astype(jnp.bfloat16),
        bf2=p['fc2_b'].reshape(1, hid2),
        wf3=wf3.astype(jnp.bfloat16),
        bf3=bf3,
    )

    # advisory cost hint for XLA scheduling around the custom call
    f1 = (2 * Ho1 * (K * K * Wo1 * Ci1) * (Wo1 * Co1)
          + 2 * Ho1 * (Wo1 - 1) * Co1 * Wp1 * Co1 + 2 * Hp1 * (Ho1 - 1) * Wp1 * Co1)
    f2 = (2 * Ho2 * (K * K * Wo2 * Co1) * (Wo2 * Co2)
          + 2 * Ho2 * (Wo2 - 1) * Co2 * Wp2 * Co2 + 2 * Hp2 * (Ho2 - 1) * Wp2 * Co2)
    ffc = 2 * (Hp2 * Wp2 * Co2 * hid1 + hid1 * hid2 + hid2 * npad)
    flops = int(B * (f1 + f2 + ffc))
    wbytes = sum(int(a.size) * int(a.dtype.itemsize) for a in prep.values())
    bytes_accessed = int(B * H * W * Ci1 * 4 + wbytes + B * npad * 4)

    prep['cfg'] = dict(K=K, Ci1=Ci1, Co1=Co1, Ho1=Ho1, Wo1=Wo1, Hp1=Hp1,
                       Co2=Co2, Ho2=Ho2, Wo2=Wo2, Hp2=Hp2, Wp2=Wp2,
                       Bblk=Bblk, nblk=nblk, npad=npad, out_=out_,
                       flops=flops, bytes_accessed=bytes_accessed, H=H, W=W)
    return prep


# ----------------------------------------------------------------------------
# Forward pass (matches CNN.forward)
# ----------------------------------------------------------------------------
def cnn_forward(x_nchw, prep):
    cfg = prep['cfg']
    B, Cin, H, W = x_nchw.shape
    Bblk, nblk, npad = cfg['Bblk'], cfg['nblk'], cfg['npad']
    assert B == Bblk * nblk and H == cfg['H'] and W == cfg['W']

    # NCHW -> (B, H, W*C) channel-fastest slabs (layout glue only)
    x2d = jnp.transpose(x_nchw, (0, 2, 3, 1)).reshape(B, H, W * Cin)

    kern = functools.partial(
        cnn_fused_kernel, K=cfg['K'], Ci1=cfg['Ci1'], Co1=cfg['Co1'],
        Ho1=cfg['Ho1'], Wo1=cfg['Wo1'], Hp1=cfg['Hp1'], Co2=cfg['Co2'],
        Ho2=cfg['Ho2'], Wo2=cfg['Wo2'], Hp2=cfg['Hp2'], Wp2=cfg['Wp2'],
        Bblk=Bblk)

    def full_spec(a):
        zeros = (0,) * a.ndim
        return pl.BlockSpec(a.shape, lambda i, z=zeros: z)

    weights = (prep['w1c'], prep['b1c'], prep['sw1'], prep['sh1'],
               prep['w2c'], prep['b2c'], prep['sw2'], prep['sh2'],
               prep['wf1'], prep['bf1'], prep['wf2'], prep['bf2'],
               prep['wf3'], prep['bf3'])

    out = pl.pallas_call(
        kern,
        out_shape=jax.ShapeDtypeStruct((nblk, Bblk, npad), jnp.float32),
        grid=(nblk,),
        in_specs=[pl.BlockSpec((Bblk, H, W * Cin), lambda i: (i, 0, 0))]
                 + [full_spec(a) for a in weights],
        out_specs=pl.BlockSpec((None, Bblk, npad), lambda i: (i, 0, 0)),
        compiler_params=pltpu.CompilerParams(dimension_semantics=("parallel",)),
        cost_estimate=pl.CostEstimate(flops=cfg['flops'], transcendentals=0,
                                      bytes_accessed=cfg['bytes_accessed']),
    )(x2d, *weights)

    return out.reshape(B, npad)[:, :cfg['out_']]


# Pure-JAX f32 reference for the numerical check
def ref_forward(x, p):
    def conv(x, w, b):
        y = jax.lax.conv_general_dilated(x, w, (1, 1), 'VALID',
                                         dimension_numbers=('NCHW', 'OIHW', 'NCHW'))
        return jax.nn.relu(y + b[None, :, None, None])

    def pool(x):
        return jax.lax.reduce_window(x, -jnp.inf, jax.lax.max,
                                     (1, 1, 2, 2), (1, 1, 2, 2), 'VALID')

    h = pool(conv(x, p['conv1_w'], p['conv1_b']))
    h = pool(conv(h, p['conv2_w'], p['conv2_b']))
    h = h.reshape(h.shape[0], -1)
    h = jax.nn.relu(h @ p['fc1_w'].T + p['fc1_b'])
    h = jax.nn.relu(h @ p['fc2_w'].T + p['fc2_b'])
    return h @ p['fc3_w'].T + p['fc3_b']


if __name__ == "__main__":
    in_, out_ = 1, 10
    B, H, W = 2, 28, 28          # 28x28 required by FC_01 (16*4*4 flatten features)

    key = jax.random.PRNGKey(0)
    ks = jax.random.split(key, 11)

    def u(k, shape, fan_in):     # PyTorch-style uniform(-1/sqrt(fan_in), 1/sqrt(fan_in))
        bound = 1.0 / float(np.sqrt(fan_in))
        return jax.random.uniform(k, shape, jnp.float32, -bound, bound)

    params = {
        'conv1_w': u(ks[0], (8, in_, 5, 5), in_ * 25),
        'conv1_b': u(ks[1], (8,), in_ * 25),
        'conv2_w': u(ks[2], (16, 8, 5, 5), 8 * 25),
        'conv2_b': u(ks[3], (16,), 8 * 25),
        'fc1_w':   u(ks[4], (128, 16 * 4 * 4), 16 * 4 * 4),
        'fc1_b':   u(ks[5], (128,), 16 * 4 * 4),
        'fc2_w':   u(ks[6], (64, 128), 128),
        'fc2_b':   u(ks[7], (64,), 128),
        'fc3_w':   u(ks[8], (out_, 64), 64),
        'fc3_b':   u(ks[9], (out_,), 64),
    }

    x = jax.random.normal(ks[10], (B, in_, H, W), jnp.float32)

    prep = prepare_params(params, B, H, W)            # one-time weight preprocessing
    fwd = jax.jit(lambda xx: cnn_forward(xx, prep))

    out = jax.block_until_ready(fwd(x))
    ref = jax.block_until_ready(ref_forward(x, params))

    assert out.shape == (B, out_)
    # bf16 matmul operands (f32 accumulation) -> relaxed tolerance vs the f32 reference
    np.testing.assert_allclose(np.asarray(out), np.asarray(ref), rtol=2e-2, atol=2e-2)
    print("KERNEL_OK")
</pallas_src>

<mosaic_0001>
module attributes {stable_mosaic.version = 11 : i64} {
  func.func @cnn_fused_kernel(%arg0: i32, %arg1: memref<1x28x28xf32, #tpu.memory_space<vmem>>, %arg2: memref<600x192xbf16, #tpu.memory_space<vmem>>, %arg3: memref<1x192xf32, #tpu.memory_space<vmem>>, %arg4: memref<184x96xf32, #tpu.memory_space<vmem>>, %arg5: memref<12x23xf32, #tpu.memory_space<vmem>>, %arg6: memref<1600x128xbf16, #tpu.memory_space<vmem>>, %arg7: memref<1x128xf32, #tpu.memory_space<vmem>>, %arg8: memref<112x64xf32, #tpu.memory_space<vmem>>, %arg9: memref<4x7xf32, #tpu.memory_space<vmem>>, %arg10: memref<256x128xbf16, #tpu.memory_space<vmem>>, %arg11: memref<1x128xf32, #tpu.memory_space<vmem>>, %arg12: memref<128x64xbf16, #tpu.memory_space<vmem>>, %arg13: memref<1x64xf32, #tpu.memory_space<vmem>>, %arg14: memref<64x128xbf16, #tpu.memory_space<vmem>>, %arg15: memref<1x128xf32, #tpu.memory_space<vmem>>, %arg16: memref<1x1x128xf32, #tpu.memory_space<vmem>>) attributes {dimension_semantics = [#tpu.dimension_semantics<parallel>], iteration_bounds = array<i64: 2>, scalar_prefetch = 0 : i64, scratch_operands = 0 : i64, tpu.core_type = #tpu.core_type<tc>, window_params = [{transform_indices = @transform_0, window_bounds = array<i64: 1, 28, 28>}, {pipeline_mode = #tpu.pipeline_mode<synchronous>, transform_indices = @transform_1, window_bounds = array<i64: 600, 192>}, {pipeline_mode = #tpu.pipeline_mode<synchronous>, transform_indices = @transform_2, window_bounds = array<i64: 1, 192>}, {pipeline_mode = #tpu.pipeline_mode<synchronous>, transform_indices = @transform_3, window_bounds = array<i64: 184, 96>}, {pipeline_mode = #tpu.pipeline_mode<synchronous>, transform_indices = @transform_4, window_bounds = array<i64: 12, 23>}, {pipeline_mode = #tpu.pipeline_mode<synchronous>, transform_indices = @transform_5, window_bounds = array<i64: 1600, 128>}, {pipeline_mode = #tpu.pipeline_mode<synchronous>, transform_indices = @transform_6, window_bounds = array<i64: 1, 128>}, {pipeline_mode = #tpu.pipeline_mode<synchronous>, transform_indices = @transform_7, window_bounds = array<i64: 112, 64>}, {pipeline_mode = #tpu.pipeline_mode<synchronous>, transform_indices = @transform_8, window_bounds = array<i64: 4, 7>}, {pipeline_mode = #tpu.pipeline_mode<synchronous>, transform_indices = @transform_9, window_bounds = array<i64: 256, 128>}, {pipeline_mode = #tpu.pipeline_mode<synchronous>, transform_indices = @transform_10, window_bounds = array<i64: 1, 128>}, {pipeline_mode = #tpu.pipeline_mode<synchronous>, transform_indices = @transform_11, window_bounds = array<i64: 128, 64>}, {pipeline_mode = #tpu.pipeline_mode<synchronous>, transform_indices = @transform_12, window_bounds = array<i64: 1, 64>}, {pipeline_mode = #tpu.pipeline_mode<synchronous>, transform_indices = @transform_13, window_bounds = array<i64: 64, 128>}, {pipeline_mode = #tpu.pipeline_mode<synchronous>, transform_indices = @transform_14, window_bounds = array<i64: 1, 128>}, {transform_indices = @transform_15, window_bounds = array<i64: 1, 1, 128>}]} {
    %c0 = arith.constant 0 : index
    %c0_0 = arith.constant 0 : index
    %c0_1 = arith.constant 0 : index
    %0 = vector.load %arg1[%c0, %c0_0, %c0_1] : memref<1x28x28xf32, #tpu.memory_space<vmem>>, vector<1x28x28xf32>
    %1 = vector.shape_cast %0 : vector<1x28x28xf32> to vector<28x28xf32>
    %2 = vector.extract_strided_slice %1 {offsets = [0, 0], sizes = [24, 24], strides = [1, 1]} : vector<28x28xf32> to vector<24x24xf32>
    %3 = vector.extract_strided_slice %1 {offsets = [0, 1], sizes = [24, 24], strides = [1, 1]} : vector<28x28xf32> to vector<24x24xf32>
    %4 = vector.extract_strided_slice %1 {offsets = [0, 2], sizes = [24, 24], strides = [1, 1]} : vector<28x28xf32> to vector<24x24xf32>
    %5 = vector.extract_strided_slice %1 {offsets = [0, 3], sizes = [24, 24], strides = [1, 1]} : vector<28x28xf32> to vector<24x24xf32>
    %6 = vector.extract_strided_slice %1 {offsets = [0, 4], sizes = [24, 24], strides = [1, 1]} : vector<28x28xf32> to vector<24x24xf32>
    %7 = vector.extract_strided_slice %1 {offsets = [1, 0], sizes = [24, 24], strides = [1, 1]} : vector<28x28xf32> to vector<24x24xf32>
    %8 = vector.extract_strided_slice %1 {offsets = [1, 1], sizes = [24, 24], strides = [1, 1]} : vector<28x28xf32> to vector<24x24xf32>
    %9 = vector.extract_strided_slice %1 {offsets = [1, 2], sizes = [24, 24], strides = [1, 1]} : vector<28x28xf32> to vector<24x24xf32>
    %10 = vector.extract_strided_slice %1 {offsets = [1, 3], sizes = [24, 24], strides = [1, 1]} : vector<28x28xf32> to vector<24x24xf32>
    %11 = vector.extract_strided_slice %1 {offsets = [1, 4], sizes = [24, 24], strides = [1, 1]} : vector<28x28xf32> to vector<24x24xf32>
    %12 = vector.extract_strided_slice %1 {offsets = [2, 0], sizes = [24, 24], strides = [1, 1]} : vector<28x28xf32> to vector<24x24xf32>
    %13 = vector.extract_strided_slice %1 {offsets = [2, 1], sizes = [24, 24], strides = [1, 1]} : vector<28x28xf32> to vector<24x24xf32>
    %14 = vector.extract_strided_slice %1 {offsets = [2, 2], sizes = [24, 24], strides = [1, 1]} : vector<28x28xf32> to vector<24x24xf32>
    %15 = vector.extract_strided_slice %1 {offsets = [2, 3], sizes = [24, 24], strides = [1, 1]} : vector<28x28xf32> to vector<24x24xf32>
    %16 = vector.extract_strided_slice %1 {offsets = [2, 4], sizes = [24, 24], strides = [1, 1]} : vector<28x28xf32> to vector<24x24xf32>
    %17 = vector.extract_strided_slice %1 {offsets = [3, 0], sizes = [24, 24], strides = [1, 1]} : vector<28x28xf32> to vector<24x24xf32>
    %18 = vector.extract_strided_slice %1 {offsets = [3, 1], sizes = [24, 24], strides = [1, 1]} : vector<28x28xf32> to vector<24x24xf32>
    %19 = vector.extract_strided_slice %1 {offsets = [3, 2], sizes = [24, 24], strides = [1, 1]} : vector<28x28xf32> to vector<24x24xf32>
    %20 = vector.extract_strided_slice %1 {offsets = [3, 3], sizes = [24, 24], strides = [1, 1]} : vector<28x28xf32> to vector<24x24xf32>
    %21 = vector.extract_strided_slice %1 {offsets = [3, 4], sizes = [24, 24], strides = [1, 1]} : vector<28x28xf32> to vector<24x24xf32>
    %22 = vector.extract_strided_slice %1 {offsets = [4, 0], sizes = [24, 24], strides = [1, 1]} : vector<28x28xf32> to vector<24x24xf32>
    %23 = vector.extract_strided_slice %1 {offsets = [4, 1], sizes = [24, 24], strides = [1, 1]} : vector<28x28xf32> to vector<24x24xf32>
    %24 = vector.extract_strided_slice %1 {offsets = [4, 2], sizes = [24, 24], strides = [1, 1]} : vector<28x28xf32> to vector<24x24xf32>
    %25 = vector.extract_strided_slice %1 {offsets = [4, 3], sizes = [24, 24], strides = [1, 1]} : vector<28x28xf32> to vector<24x24xf32>
    %26 = vector.extract_strided_slice %1 {offsets = [4, 4], sizes = [24, 24], strides = [1, 1]} : vector<28x28xf32> to vector<24x24xf32>
    %27 = tpu.concatenate %2, %3, %4, %5, %6, %7, %8, %9, %10, %11, %12, %13, %14, %15, %16, %17 in 1 : vector<24x24xf32>, vector<24x24xf32>, vector<24x24xf32>, vector<24x24xf32>, vector<24x24xf32>, vector<24x24xf32>, vector<24x24xf32>, vector<24x24xf32>, vector<24x24xf32>, vector<24x24xf32>, vector<24x24xf32>, vector<24x24xf32>, vector<24x24xf32>, vector<24x24xf32>, vector<24x24xf32>, vector<24x24xf32> -> vector<24x384xf32>
    %28 = tpu.concatenate %18, %19, %20, %21, %22, %23, %24, %25, %26 in 1 : vector<24x24xf32>, vector<24x24xf32>, vector<24x24xf32>, vector<24x24xf32>, vector<24x24xf32>, vector<24x24xf32>, vector<24x24xf32>, vector<24x24xf32>, vector<24x24xf32> -> vector<24x216xf32>
    %29 = tpu.concatenate %27, %28 in 1 : vector<24x384xf32>, vector<24x216xf32> -> vector<24x600xf32>
    %30 = arith.truncf %29 : vector<24x600xf32> to vector<24x600xbf16>
    %c0_2 = arith.constant 0 : index
    %c0_3 = arith.constant 0 : index
    %31 = vector.load %arg2[%c0_2, %c0_3] : memref<600x192xbf16, #tpu.memory_space<vmem>>, vector<600x192xbf16>
    %cst = arith.constant dense<0.000000e+00> : vector<24x192xf32>
    %32 = tpu.matmul %30, %31, %cst {dimension_numbers = #tpu.dot_dimension_numbers<[1], [0], [0], [1], [0, 0, 1, 1], [], []>} : vector<24x600xbf16>, vector<600x192xbf16>, vector<24x192xf32> -> vector<24x192xf32>
    %c0_4 = arith.constant 0 : index
    %c0_5 = arith.constant 0 : index
    %33 = vector.load %arg3[%c0_4, %c0_5] : memref<1x192xf32, #tpu.memory_space<vmem>>, vector<1x192xf32>
    %34 = vector.broadcast %33 : vector<1x192xf32> to vector<24x192xf32>
    %35 = arith.addf %32, %34 : vector<24x192xf32>
    %cst_6 = arith.constant 0.000000e+00 : f32
    %36 = vector.broadcast %cst_6 : f32 to vector<24x192xf32>
    %37 = arith.maximumf %35, %36 : vector<24x192xf32>
    %38 = vector.extract_strided_slice %37 {offsets = [0, 0], sizes = [24, 184], strides = [1, 1]} : vector<24x192xf32> to vector<24x184xf32>
    %39 = vector.extract_strided_slice %37 {offsets = [0, 8], sizes = [24, 184], strides = [1, 1]} : vector<24x192xf32> to vector<24x184xf32>
    %40 = arith.maximumf %38, %39 : vector<24x184xf32>
    %c0_7 = arith.constant 0 : index
    %c0_8 = arith.constant 0 : index
    %41 = vector.load %arg4[%c0_7, %c0_8] : memref<184x96xf32, #tpu.memory_space<vmem>>, vector<184x96xf32>
    %cst_9 = arith.constant dense<0.000000e+00> : vector<24x96xf32>
    %42 = tpu.matmul %40, %41, %cst_9 {dimension_numbers = #tpu.dot_dimension_numbers<[1], [0], [0], [1], [0, 0, 1, 1], [], []>} : vector<24x184xf32>, vector<184x96xf32>, vector<24x96xf32> -> vector<24x96xf32>
    %43 = vector.extract_strided_slice %42 {offsets = [0, 0], sizes = [23, 96], strides = [1, 1]} : vector<24x96xf32> to vector<23x96xf32>
    %44 = vector.extract_strided_slice %42 {offsets = [1, 0], sizes = [23, 96], strides = [1, 1]} : vector<24x96xf32> to vector<23x96xf32>
    %45 = arith.maximumf %43, %44 : vector<23x96xf32>
    %c0_10 = arith.constant 0 : index
    %c0_11 = arith.constant 0 : index
    %46 = vector.load %arg5[%c0_10, %c0_11] : memref<12x23xf32, #tpu.memory_space<vmem>>, vector<12x23xf32>
    %cst_12 = arith.constant dense<0.000000e+00> : vector<12x96xf32>
    %47 = tpu.matmul %46, %45, %cst_12 {dimension_numbers = #tpu.dot_dimension_numbers<[1], [0], [0], [1], [0, 0, 1, 1], [], []>} : vector<12x23xf32>, vector<23x96xf32>, vector<12x96xf32> -> vector<12x96xf32>
    %48 = vector.extract_strided_slice %47 {offsets = [0, 0], sizes = [8, 64], strides = [1, 1]} : vector<12x96xf32> to vector<8x64xf32>
    %49 = vector.extract_strided_slice %47 {offsets = [0, 8], sizes = [8, 64], strides = [1, 1]} : vector<12x96xf32> to vector<8x64xf32>
    %50 = vector.extract_strided_slice %47 {offsets = [0, 16], sizes = [8, 64], strides = [1, 1]} : vector<12x96xf32> to vector<8x64xf32>
    %51 = vector.extract_strided_slice %47 {offsets = [0, 24], sizes = [8, 64], strides = [1, 1]} : vector<12x96xf32> to vector<8x64xf32>
    %52 = vector.extract_strided_slice %47 {offsets = [0, 32], sizes = [8, 64], strides = [1, 1]} : vector<12x96xf32> to vector<8x64xf32>
    %53 = vector.extract_strided_slice %47 {offsets = [1, 0], sizes = [8, 64], strides = [1, 1]} : vector<12x96xf32> to vector<8x64xf32>
    %54 = vector.extract_strided_slice %47 {offsets = [1, 8], sizes = [8, 64], strides = [1, 1]} : vector<12x96xf32> to vector<8x64xf32>
    %55 = vector.extract_strided_slice %47 {offsets = [1, 16], sizes = [8, 64], strides = [1, 1]} : vector<12x96xf32> to vector<8x64xf32>
    %56 = vector.extract_strided_slice %47 {offsets = [1, 24], sizes = [8, 64], strides = [1, 1]} : vector<12x96xf32> to vector<8x64xf32>
    %57 = vector.extract_strided_slice %47 {offsets = [1, 32], sizes = [8, 64], strides = [1, 1]} : vector<12x96xf32> to vector<8x64xf32>
    %58 = vector.extract_strided_slice %47 {offsets = [2, 0], sizes = [8, 64], strides = [1, 1]} : vector<12x96xf32> to vector<8x64xf32>
    %59 = vector.extract_strided_slice %47 {offsets = [2, 8], sizes = [8, 64], strides = [1, 1]} : vector<12x96xf32> to vector<8x64xf32>
    %60 = vector.extract_strided_slice %47 {offsets = [2, 16], sizes = [8, 64], strides = [1, 1]} : vector<12x96xf32> to vector<8x64xf32>
    %61 = vector.extract_strided_slice %47 {offsets = [2, 24], sizes = [8, 64], strides = [1, 1]} : vector<12x96xf32> to vector<8x64xf32>
    %62 = vector.extract_strided_slice %47 {offsets = [2, 32], sizes = [8, 64], strides = [1, 1]} : vector<12x96xf32> to vector<8x64xf32>
    %63 = vector.extract_strided_slice %47 {offsets = [3, 0], sizes = [8, 64], strides = [1, 1]} : vector<12x96xf32> to vector<8x64xf32>
    %64 = vector.extract_strided_slice %47 {offsets = [3, 8], sizes = [8, 64], strides = [1, 1]} : vector<12x96xf32> to vector<8x64xf32>
    %65 = vector.extract_strided_slice %47 {offsets = [3, 16], sizes = [8, 64], strides = [1, 1]} : vector<12x96xf32> to vector<8x64xf32>
    %66 = vector.extract_strided_slice %47 {offsets = [3, 24], sizes = [8, 64], strides = [1, 1]} : vector<12x96xf32> to vector<8x64xf32>
    %67 = vector.extract_strided_slice %47 {offsets = [3, 32], sizes = [8, 64], strides = [1, 1]} : vector<12x96xf32> to vector<8x64xf32>
    %68 = vector.extract_strided_slice %47 {offsets = [4, 0], sizes = [8, 64], strides = [1, 1]} : vector<12x96xf32> to vector<8x64xf32>
    %69 = vector.extract_strided_slice %47 {offsets = [4, 8], sizes = [8, 64], strides = [1, 1]} : vector<12x96xf32> to vector<8x64xf32>
    %70 = vector.extract_strided_slice %47 {offsets = [4, 16], sizes = [8, 64], strides = [1, 1]} : vector<12x96xf32> to vector<8x64xf32>
    %71 = vector.extract_strided_slice %47 {offsets = [4, 24], sizes = [8, 64], strides = [1, 1]} : vector<12x96xf32> to vector<8x64xf32>
    %72 = vector.extract_strided_slice %47 {offsets = [4, 32], sizes = [8, 64], strides = [1, 1]} : vector<12x96xf32> to vector<8x64xf32>
    %73 = tpu.concatenate %48, %49, %50, %51, %52, %53, %54, %55, %56, %57, %58, %59, %60, %61, %62, %63 in 1 : vector<8x64xf32>, vector<8x64xf32>, vector<8x64xf32>, vector<8x64xf32>, vector<8x64xf32>, vector<8x64xf32>, vector<8x64xf32>, vector<8x64xf32>, vector<8x64xf32>, vector<8x64xf32>, vector<8x64xf32>, vector<8x64xf32>, vector<8x64xf32>, vector<8x64xf32>, vector<8x64xf32>, vector<8x64xf32> -> vector<8x1024xf32>
    %74 = tpu.concatenate %64, %65, %66, %67, %68, %69, %70, %71, %72 in 1 : vector<8x64xf32>, vector<8x64xf32>, vector<8x64xf32>, vector<8x64xf32>, vector<8x64xf32>, vector<8x64xf32>, vector<8x64xf32>, vector<8x64xf32>, vector<8x64xf32> -> vector<8x576xf32>
    %75 = tpu.concatenate %73, %74 in 1 : vector<8x1024xf32>, vector<8x576xf32> -> vector<8x1600xf32>
    %76 = arith.truncf %75 : vector<8x1600xf32> to vector<8x1600xbf16>
    %c0_13 = arith.constant 0 : index
    %c0_14 = arith.constant 0 : index
    %77 = vector.load %arg6[%c0_13, %c0_14] : memref<1600x128xbf16, #tpu.memory_space<vmem>>, vector<1600x128xbf16>
    %cst_15 = arith.constant dense<0.000000e+00> : vector<8x128xf32>
    %78 = tpu.matmul %76, %77, %cst_15 {dimension_numbers = #tpu.dot_dimension_numbers<[1], [0], [0], [1], [0, 0, 1, 1], [], []>} : vector<8x1600xbf16>, vector<1600x128xbf16>, vector<8x128xf32> -> vector<8x128xf32>
    %c0_16 = arith.constant 0 : index
    %c0_17 = arith.constant 0 : index
    %79 = vector.load %arg7[%c0_16, %c0_17] : memref<1x128xf32, #tpu.memory_space<vmem>>, vector<1x128xf32>
    %80 = vector.broadcast %79 : vector<1x128xf32> to vector<8x128xf32>
    %81 = arith.addf %78, %80 : vector<8x128xf32>
    %cst_18 = arith.constant 0.000000e+00 : f32
    %82 = vector.broadcast %cst_18 : f32 to vector<8x128xf32>
    %83 = arith.maximumf %81, %82 : vector<8x128xf32>
    %84 = vector.extract_strided_slice %83 {offsets = [0, 0], sizes = [8, 112], strides = [1, 1]} : vector<8x128xf32> to vector<8x112xf32>
    %85 = vector.extract_strided_slice %83 {offsets = [0, 16], sizes = [8, 112], strides = [1, 1]} : vector<8x128xf32> to vector<8x112xf32>
    %86 = arith.maximumf %84, %85 : vector<8x112xf32>
    %c0_19 = arith.constant 0 : index
    %c0_20 = arith.constant 0 : index
    %87 = vector.load %arg8[%c0_19, %c0_20] : memref<112x64xf32, #tpu.memory_space<vmem>>, vector<112x64xf32>
    %cst_21 = arith.constant dense<0.000000e+00> : vector<8x64xf32>
    %88 = tpu.matmul %86, %87, %cst_21 {dimension_numbers = #tpu.dot_dimension_numbers<[1], [0], [0], [1], [0, 0, 1, 1], [], []>} : vector<8x112xf32>, vector<112x64xf32>, vector<8x64xf32> -> vector<8x64xf32>
    %89 = vector.extract_strided_slice %88 {offsets = [0, 0], sizes = [7, 64], strides = [1, 1]} : vector<8x64xf32> to vector<7x64xf32>
    %90 = vector.extract_strided_slice %88 {offsets = [1, 0], sizes = [7, 64], strides = [1, 1]} : vector<8x64xf32> to vector<7x64xf32>
    %91 = arith.maximumf %89, %90 : vector<7x64xf32>
    %c0_22 = arith.constant 0 : index
    %c0_23 = arith.constant 0 : index
    %92 = vector.load %arg9[%c0_22, %c0_23] : memref<4x7xf32, #tpu.memory_space<vmem>>, vector<4x7xf32>
    %cst_24 = arith.constant dense<0.000000e+00> : vector<4x64xf32>
    %93 = tpu.matmul %92, %91, %cst_24 {dimension_numbers = #tpu.dot_dimension_numbers<[1], [0], [0], [1], [0, 0, 1, 1], [], []>} : vector<4x7xf32>, vector<7x64xf32>, vector<4x64xf32> -> vector<4x64xf32>
    %cst_25 = arith.constant 0.000000e+00 : f32
    %94 = vector.broadcast %cst_25 : f32 to vector<1x128xf32>
    %95 = vector.extract_strided_slice %93 {offsets = [0, 0], sizes = [1, 64], strides = [1, 1]} : vector<4x64xf32> to vector<1x64xf32>
    %96 = arith.truncf %95 : vector<1x64xf32> to vector<1x64xbf16>
    %c0_26 = arith.constant 0 : index
    %c0_27 = arith.constant 0 : index
    %97 = vector.load %arg10[%c0_26, %c0_27] : memref<256x128xbf16, #tpu.memory_space<vmem>>, vector<64x128xbf16>
    %cst_28 = arith.constant dense<0.000000e+00> : vector<1x128xf32>
    %98 = tpu.matmul %96, %97, %cst_28 {dimension_numbers = #tpu.dot_dimension_numbers<[1], [0], [0], [1], [0, 0, 1, 1], [], []>} : vector<1x64xbf16>, vector<64x128xbf16>, vector<1x128xf32> -> vector<1x128xf32>
    %99 = arith.addf %94, %98 : vector<1x128xf32>
    %100 = vector.extract_strided_slice %93 {offsets = [1, 0], sizes = [1, 64], strides = [1, 1]} : vector<4x64xf32> to vector<1x64xf32>
    %101 = arith.truncf %100 : vector<1x64xf32> to vector<1x64xbf16>
    %c64 = arith.constant 64 : index
    %c0_29 = arith.constant 0 : index
    %102 = vector.load %arg10[%c64, %c0_29] : memref<256x128xbf16, #tpu.memory_space<vmem>>, vector<64x128xbf16>
    %cst_30 = arith.constant dense<0.000000e+00> : vector<1x128xf32>
    %103 = tpu.matmul %101, %102, %cst_30 {dimension_numbers = #tpu.dot_dimension_numbers<[1], [0], [0], [1], [0, 0, 1, 1], [], []>} : vector<1x64xbf16>, vector<64x128xbf16>, vector<1x128xf32> -> vector<1x128xf32>
    %104 = arith.addf %99, %103 : vector<1x128xf32>
    %105 = vector.extract_strided_slice %93 {offsets = [2, 0], sizes = [1, 64], strides = [1, 1]} : vector<4x64xf32> to vector<1x64xf32>
    %106 = arith.truncf %105 : vector<1x64xf32> to vector<1x64xbf16>
    %c128 = arith.constant 128 : index
    %c0_31 = arith.constant 0 : index
    %107 = vector.load %arg10[%c128, %c0_31] : memref<256x128xbf16, #tpu.memory_space<vmem>>, vector<64x128xbf16>
    %cst_32 = arith.constant dense<0.000000e+00> : vector<1x128xf32>
    %108 = tpu.matmul %106, %107, %cst_32 {dimension_numbers = #tpu.dot_dimension_numbers<[1], [0], [0], [1], [0, 0, 1, 1], [], []>} : vector<1x64xbf16>, vector<64x128xbf16>, vector<1x128xf32> -> vector<1x128xf32>
    %109 = arith.addf %104, %108 : vector<1x128xf32>
    %110 = vector.extract_strided_slice %93 {offsets = [3, 0], sizes = [1, 64], strides = [1, 1]} : vector<4x64xf32> to vector<1x64xf32>
    %111 = arith.truncf %110 : vector<1x64xf32> to vector<1x64xbf16>
    %c192 = arith.constant 192 : index
    %c0_33 = arith.constant 0 : index
    %112 = vector.load %arg10[%c192, %c0_33] : memref<256x128xbf16, #tpu.memory_space<vmem>>, vector<64x128xbf16>
    %cst_34 = arith.constant dense<0.000000e+00> : vector<1x128xf32>
    %113 = tpu.matmul %111, %112, %cst_34 {dimension_numbers = #tpu.dot_dimension_numbers<[1], [0], [0], [1], [0, 0, 1, 1], [], []>} : vector<1x64xbf16>, vector<64x128xbf16>, vector<1x128xf32> -> vector<1x128xf32>
    %114 = arith.addf %109, %113 : vector<1x128xf32>
    %c0_35 = arith.constant 0 : index
    %c0_36 = arith.constant 0 : index
    %115 = vector.load %arg11[%c0_35, %c0_36] : memref<1x128xf32, #tpu.memory_space<vmem>>, vector<1x128xf32>
    %116 = arith.addf %114, %115 : vector<1x128xf32>
    %cst_37 = arith.constant 0.000000e+00 : f32
    %117 = vector.broadcast %cst_37 : f32 to vector<1x128xf32>
    %118 = arith.maximumf %116, %117 : vector<1x128xf32>
    %119 = arith.truncf %118 : vector<1x128xf32> to vector<1x128xbf16>
    %c0_38 = arith.constant 0 : index
    %c0_39 = arith.constant 0 : index
    %120 = vector.load %arg12[%c0_38, %c0_39] : memref<128x64xbf16, #tpu.memory_space<vmem>>, vector<128x64xbf16>
    %cst_40 = arith.constant dense<0.000000e+00> : vector<1x64xf32>
    %121 = tpu.matmul %119, %120, %cst_40 {dimension_numbers = #tpu.dot_dimension_numbers<[1], [0], [0], [1], [0, 0, 1, 1], [], []>} : vector<1x128xbf16>, vector<128x64xbf16>, vector<1x64xf32> -> vector<1x64xf32>
    %c0_41 = arith.constant 0 : index
    %c0_42 = arith.constant 0 : index
    %122 = vector.load %arg13[%c0_41, %c0_42] : memref<1x64xf32, #tpu.memory_space<vmem>>, vector<1x64xf32>
    %123 = arith.addf %121, %122 : vector<1x64xf32>
    %cst_43 = arith.constant 0.000000e+00 : f32
    %124 = vector.broadcast %cst_43 : f32 to vector<1x64xf32>
    %125 = arith.maximumf %123, %124 : vector<1x64xf32>
    %126 = arith.truncf %125 : vector<1x64xf32> to vector<1x64xbf16>
    %c0_44 = arith.constant 0 : index
    %c0_45 = arith.constant 0 : index
    %127 = vector.load %arg14[%c0_44, %c0_45] : memref<64x128xbf16, #tpu.memory_space<vmem>>, vector<64x128xbf16>
    %cst_46 = arith.constant dense<0.000000e+00> : vector<1x128xf32>
    %128 = tpu.matmul %126, %127, %cst_46 {dimension_numbers = #tpu.dot_dimension_numbers<[1], [0], [0], [1], [0, 0, 1, 1], [], []>} : vector<1x64xbf16>, vector<64x128xbf16>, vector<1x128xf32> -> vector<1x128xf32>
    %c0_47 = arith.constant 0 : index
    %c0_48 = arith.constant 0 : index
    %129 = vector.load %arg15[%c0_47, %c0_48] : memref<1x128xf32, #tpu.memory_space<vmem>>, vector<1x128xf32>
    %130 = arith.addf %128, %129 : vector<1x128xf32>
    %c0_49 = arith.constant 0 : index
    %c0_50 = arith.constant 0 : index
    %c0_51 = arith.constant 0 : index
    %131 = vector.load %arg16[%c0_49, %c0_50, %c0_51] : memref<1x1x128xf32, #tpu.memory_space<vmem>>, vector<1x1x128xf32>
    %132 = vector.shape_cast %131 : vector<1x1x128xf32> to vector<1x128xf32>
    %133 = vector.shape_cast %130 : vector<1x128xf32> to vector<1x1x128xf32>
    tpu.vector_store %arg16[%c0_49, %c0_50, %c0_51], %133 {strides = array<i32>} : memref<1x1x128xf32, #tpu.memory_space<vmem>>, vector<1x1x128xf32>,
    return
  }
  func.func @transform_0(%arg0: i32) -> (i32, i32, i32) {
    %c0_i32 = arith.constant 0 : i32
    %c0_i32_0 = arith.constant 0 : i32
    %c0_i32_1 = arith.constant 0 : i32
    return %arg0, %c0_i32, %c0_i32_0 : i32, i32, i32
  }
  func.func @transform_1(%arg0: i32) -> (i32, i32) {
    %c0_i32 = arith.constant 0 : i32
    %c0_i32_0 = arith.constant 0 : i32
    %c0_i32_1 = arith.constant 0 : i32
    return %c0_i32, %c0_i32_0 : i32, i32
  }
  func.func @transform_2(%arg0: i32) -> (i32, i32) {
    %c0_i32 = arith.constant 0 : i32
    %c0_i32_0 = arith.constant 0 : i32
    %c0_i32_1 = arith.constant 0 : i32
    return %c0_i32, %c0_i32_0 : i32, i32
  }
  func.func @transform_3(%arg0: i32) -> (i32, i32) {
    %c0_i32 = arith.constant 0 : i32
    %c0_i32_0 = arith.constant 0 : i32
    %c0_i32_1 = arith.constant 0 : i32
    return %c0_i32, %c0_i32_0 : i32, i32
  }
  func.func @transform_4(%arg0: i32) -> (i32, i32) {
    %c0_i32 = arith.constant 0 : i32
    %c0_i32_0 = arith.constant 0 : i32
    %c0_i32_1 = arith.constant 0 : i32
    return %c0_i32, %c0_i32_0 : i32, i32
  }
  func.func @transform_5(%arg0: i32) -> (i32, i32) {
    %c0_i32 = arith.constant 0 : i32
    %c0_i32_0 = arith.constant 0 : i32
    %c0_i32_1 = arith.constant 0 : i32
    return %c0_i32, %c0_i32_0 : i32, i32
  }
  func.func @transform_6(%arg0: i32) -> (i32, i32) {
    %c0_i32 = arith.constant 0 : i32
    %c0_i32_0 = arith.constant 0 : i32
    %c0_i32_1 = arith.constant 0 : i32
    return %c0_i32, %c0_i32_0 : i32, i32
  }
  func.func @transform_7(%arg0: i32) -> (i32, i32) {
    %c0_i32 = arith.constant 0 : i32
    %c0_i32_0 = arith.constant 0 : i32
    %c0_i32_1 = arith.constant 0 : i32
    return %c0_i32, %c0_i32_0 : i32, i32
  }
  func.func @transform_8(%arg0: i32) -> (i32, i32) {
    %c0_i32 = arith.constant 0 : i32
    %c0_i32_0 = arith.constant 0 : i32
    %c0_i32_1 = arith.constant 0 : i32
    return %c0_i32, %c0_i32_0 : i32, i32
  }
  func.func @transform_9(%arg0: i32) -> (i32, i32) {
    %c0_i32 = arith.constant 0 : i32
    %c0_i32_0 = arith.constant 0 : i32
    %c0_i32_1 = arith.constant 0 : i32
    return %c0_i32, %c0_i32_0 : i32, i32
  }
  func.func @transform_10(%arg0: i32) -> (i32, i32) {
    %c0_i32 = arith.constant 0 : i32
    %c0_i32_0 = arith.constant 0 : i32
    %c0_i32_1 = arith.constant 0 : i32
    return %c0_i32, %c0_i32_0 : i32, i32
  }
  func.func @transform_11(%arg0: i32) -> (i32, i32) {
    %c0_i32 = arith.constant 0 : i32
    %c0_i32_0 = arith.constant 0 : i32
    %c0_i32_1 = arith.constant 0 : i32
    return %c0_i32, %c0_i32_0 : i32, i32
  }
  func.func @transform_12(%arg0: i32) -> (i32, i32) {
    %c0_i32 = arith.constant 0 : i32
    %c0_i32_0 = arith.constant 0 : i32
    %c0_i32_1 = arith.constant 0 : i32
    return %c0_i32, %c0_i32_0 : i32, i32
  }
  func.func @transform_13(%arg0: i32) -> (i32, i32) {
    %c0_i32 = arith.constant 0 : i32
    %c0_i32_0 = arith.constant 0 : i32
    %c0_i32_1 = arith.constant 0 : i32
    return %c0_i32, %c0_i32_0 : i32, i32
  }
  func.func @transform_14(%arg0: i32) -> (i32, i32) {
    %c0_i32 = arith.constant 0 : i32
    %c0_i32_0 = arith.constant 0 : i32
    %c0_i32_1 = arith.constant 0 : i32
    return %c0_i32, %c0_i32_0 : i32, i32
  }
  func.func @transform_15(%arg0: i32) -> (i32, i32, i32) {
    %c0_i32 = arith.constant 0 : i32
    %c0_i32_0 = arith.constant 0 : i32
    %c0_i32_1 = arith.constant 0 : i32
    return %arg0, %c0_i32, %c0_i32_0 : i32, i32, i32
  }
}

</mosaic_0001>

<llo_original>
// kernel: _lambda_.1
$region0: #{_lambda_.1}
  #allocation0 [shape = 'u32[]', space=smem, size = 0x4, offset = 0x4, fixed_abs, tag = 'smem constant byte address 0x4 - core index']
  #allocation1 [shape = 'u32[144,128]{1,0:T(1,128)}', space=vmem, size = 0x12000, scoped, tag = 'internal scratch']
  %s0 = inlined_call_operand.vmem [shape: f32[2,28,28], index: 0, kind: input, shape index: {}]
  %s1 = inlined_call_operand.hbm [shape: bf16[600,192], index: 1, kind: input, shape index: {}]
  %s2 = inlined_call_operand.vmem [shape: f32[1,192], index: 2, kind: input, shape index: {}]
  %s3 = inlined_call_operand.vmem [shape: f32[184,96], index: 3, kind: input, shape index: {}]
  %s4 = inlined_call_operand.hbm [shape: f32[12,23], index: 4, kind: input, shape index: {}]
  %s5 = inlined_call_operand.hbm [shape: bf16[1600,128], index: 5, kind: input, shape index: {}]
  %s6 = inlined_call_operand.hbm [shape: f32[1,128], index: 6, kind: input, shape index: {}]
  %s7 = inlined_call_operand.hbm [shape: f32[112,64], index: 7, kind: input, shape index: {}]
  %s8 = inlined_call_operand.hbm [shape: f32[4,7], index: 8, kind: input, shape index: {}]
  %s9 = inlined_call_operand.hbm [shape: bf16[256,128], index: 9, kind: input, shape index: {}]
  %s10 = inlined_call_operand.hbm [shape: f32[1,128], index: 10, kind: input, shape index: {}]
  %s11 = inlined_call_operand.vmem [shape: bf16[128,64], index: 11, kind: input, shape index: {}]
  %s12 = inlined_call_operand.vmem [shape: f32[1,64], index: 12, kind: input, shape index: {}]
  %s13 = inlined_call_operand.hbm [shape: bf16[64,128], index: 13, kind: input, shape index: {}]
  %s14 = inlined_call_operand.vmem [shape: f32[1,128], index: 14, kind: input, shape index: {}]
  %s15 = inlined_call_operand.hbm [shape: f32[2,1,128], index: 15, kind: output, shape index: {}]
  %s16 = sld [smem:[#allocation0]]
  $region129: #{_lambda_.1} parent=0
    _
  %s18 = ssub.s32 1, %s16
  %s19 = scalar_select 0, %s18, %s16
  $region1: #{_lambda_.1} parent=0
    #allocation2 [shape = 'u8[307200]{0}', space=vmem, size = 0x4b000, scoped, tag = 'input window, operand 1, single buffered']
    #allocation3 [shape = 's32[2]{0}', space=sflag, size = 0x8, scoped, tag = 'scoped memory for _lambda_.1']
    #allocation4 [shape = 's32[2]{0}', space=sflag, size = 0x8, scoped, tag = 'scoped memory for _lambda_.1']
    #allocation5 [shape = 'u8[8192]{0}', space=vmem, size = 0x2000, scoped, tag = 'input window, operand 4, single buffered']
    #allocation6 [shape = 's32[1]{0}', space=sflag, size = 0x4, scoped, tag = 'scoped memory for _lambda_.1']
    #allocation7 [shape = 'u8[409600]{0}', space=vmem, size = 0x64000, scoped, tag = 'input window, operand 5, single buffered']
    #allocation8 [shape = 'u8[512]{0}', space=vmem, size = 0x400, scoped, tag = 'input window, operand 6, single buffered']
    #allocation9 [shape = 's32[1]{0}', space=sflag, size = 0x4, scoped, tag = 'scoped memory for _lambda_.1']
    #allocation10 [shape = 'u8[57344]{0}', space=vmem, size = 0xe000, scoped, tag = 'input window, operand 7, single buffered']
    #allocation11 [shape = 'u8[2048]{0}', space=vmem, size = 0x800, scoped, tag = 'input window, operand 8, single buffered']
    #allocation12 [shape = 's32[1]{0}', space=sflag, size = 0x4, scoped, tag = 'scoped memory for _lambda_.1']
    #allocation13 [shape = 'u8[65536]{0}', space=vmem, size = 0x10000, scoped, tag = 'input window, operand 9, single buffered']
    #allocation14 [shape = 'u8[512]{0}', space=vmem, size = 0x400, scoped, tag = 'input window, operand 10, single buffered']
    #allocation15 [shape = 's32[1]{0}', space=sflag, size = 0x4, scoped, tag = 'scoped memory for _lambda_.1']
    #allocation16 [shape = 'u8[16384]{0}', space=vmem, size = 0x4000, scoped, tag = 'input window, operand 13, single buffered']
    #allocation17 [shape = 'u8[1024]{0}', space=vmem, size = 0x400, scoped, tag = 'output window, operand 0']
    %20 = vsyncpa [#allocation3], 0
    %21 = vsyncpa [#allocation6], 0
    %22 = vsyncpa [#allocation9], 0
    %23 = vsyncpa [#allocation12], 0
    %24 = vsyncpa [#allocation15], 0
    %25 = vsyncpa [#allocation4], 0
    %s26 = scalar_lea.sflag [#allocation4], 1
    %27 = vsyncpa %s26, 0
    loop: start=0, step=1, limit=4
    $region2: #{_lambda_.1} parent=1 // loop_pre_header
      _
    $region3: #{_lambda_.1} parent=1 // loop_header
      %s29 = sphi 0, %s33
      %p30 = scmp.ge.s32.totalorder %s29, 4
      %s39 = sphi 0, %s41
      %s42 = sphi 0, %s39
      %s43 = sphi 0, %s42
      %s59 = sphi 0, %s43
      %s63 = sphi 0, %s63
      %s65 = sphi 0, %s63
      %s66 = sphi 0, %s65
      %s80 = sphi 0, %s66
      %s84 = sphi 0, %s84
      %s86 = sphi 0, %s84
      %s87 = sphi 0, %s86
      %s101 = sphi 0, %s87
      %s105 = sphi 0, %s105
      %s107 = sphi 0, %s105
      %s108 = sphi 0, %s107
      %s122 = sphi 0, %s108
      %s126 = sphi 0, %s126
      %s128 = sphi 0, %s126
      %s129 = sphi 0, %s128
      %s143 = sphi 0, %s129
      %s147 = sphi 0, %s147
      %s149 = sphi 0, %s147
      %s150 = sphi 0, %s149
      %s164 = sphi 0, %s150
      %s168 = sphi 0, %s168
      %s170 = sphi 0, %s168
      %s171 = sphi 0, %s170
      %s185 = sphi 0, %s171
      %s189 = sphi 0, %s189
      %s191 = sphi 0, %s189
      %s192 = sphi 0, %s191
      %s206 = sphi 0, %s192
      %s210 = sphi 0, %s210
      %s212 = sphi 0, %s210
      %s213 = sphi 0, %s212
      %s227 = sphi 0, %s213
      %s231 = sphi 0, %s231
      %s233 = sphi 0, %s231
      %s234 = sphi 0, %s233
      %s248 = sphi 0, %s234
      %s252 = sphi 0, %s252
      %s254 = sphi 0, %s252
      %s255 = sphi 0, %s254
      %s269 = sphi 0, %s255
      %s273 = sphi 0, %s273
      %s275 = sphi 0, %s273
      %s276 = sphi 0, %s275
      %s290 = sphi 0, %s276
      %s294 = sphi 0, %s294
      %s296 = sphi 0, %s294
      %s297 = sphi 0, %s296
      %s311 = sphi 0, %s297
      %s315 = sphi 0, %s315
      %s317 = sphi 0, %s315
      %s318 = sphi 0, %s317
      %s332 = sphi 0, %s318
      %s336 = sphi 0, %s336
      %s338 = sphi 0, %s336
      %s339 = sphi 0, %s338
      %s353 = sphi 0, %s339
      %s359 = sphi 0, %s361
      %s362 = sphi 0, %s359
      %s363 = sphi 0, %s362
      %s379 = sphi 0, %s363
    $region4: #{_lambda_.1} parent=1 // loop_header_branch
      %32 = sbr.rel (%p30) target = $region8
    $region5: #{_lambda_.1} parent=1 // loop_body
      %s34 = ssub.s32 %s29, 1
      %s35 = ssub.s32 %s29, 2
      %s36 = sadd.s32 %s29, 1
      %s37 = ssub.s32 %s29, %s36
      %p38 = scmp.eq.s32.totalorder %s37, 0
      %s40 = sadd.s32 %s39, 1
      %s41 = scalar_select %p38, %s39, %s40
      %p44 = pneg %p38
      %p45 = scmp.eq.s32.totalorder %s29, 1
      %p46 = por %p44, %p45
      %p47 = scmp.ne.s32.totalorder %s39, %s42
      %p48 = scmp.eq.s32.totalorder %s29, 0
      %p49 = por %p47, %p48
      %p50 = scmp.ne.s32.totalorder %s39, %s42
      %p51 = scmp.eq.s32.totalorder %s34, 1
      %p52 = por %p50, %p51
      %p53 = scmp.ne.s32.totalorder %s42, %s43
      %p54 = scmp.eq.s32.totalorder %s34, 0
      %p55 = por %p53, %p54
      %p56 = scmp.ne.s32.totalorder %s42, %s43
      %p57 = scmp.eq.s32.totalorder %s35, 1
      %p58 = por %p56, %p57
      %p60 = scmp.ne.s32.totalorder %s43, %s59
      %p61 = scmp.eq.s32.totalorder %s35, 0
      %p62 = por %p60, %p61
      %s64 = sadd.s32 %s63, 1
      %p67 = scmp.eq.s32.totalorder %s29, 1
      %p68 = scmp.ne.s32.totalorder %s63, %s65
      %p69 = scmp.eq.s32.totalorder %s29, 0
      %p70 = por %p68, %p69
      %p71 = scmp.ne.s32.totalorder %s63, %s65
      %p72 = scmp.eq.s32.totalorder %s34, 1
      %p73 = por %p71, %p72
      %p74 = scmp.ne.s32.totalorder %s65, %s66
      %p75 = scmp.eq.s32.totalorder %s34, 0
      %p76 = por %p74, %p75
      %p77 = scmp.ne.s32.totalorder %s65, %s66
      %p78 = scmp.eq.s32.totalorder %s35, 1
      %p79 = por %p77, %p78
      %p81 = scmp.ne.s32.totalorder %s66, %s80
      %p82 = scmp.eq.s32.totalorder %s35, 0
      %p83 = por %p81, %p82
      %s85 = sadd.s32 %s84, 1
      %p88 = scmp.eq.s32.totalorder %s29, 1
      %p89 = scmp.ne.s32.totalorder %s84, %s86
      %p90 = scmp.eq.s32.totalorder %s29, 0
      %p91 = por %p89, %p90
      %p92 = scmp.ne.s32.totalorder %s84, %s86
      %p93 = scmp.eq.s32.totalorder %s34, 1
      %p94 = por %p92, %p93
      %p95 = scmp.ne.s32.totalorder %s86, %s87
      %p96 = scmp.eq.s32.totalorder %s34, 0
      %p97 = por %p95, %p96
      %p98 = scmp.ne.s32.totalorder %s86, %s87
      %p99 = scmp.eq.s32.totalorder %s35, 1
      %p100 = por %p98, %p99
      %p102 = scmp.ne.s32.totalorder %s87, %s101
      %p103 = scmp.eq.s32.totalorder %s35, 0
      %p104 = por %p102, %p103
      %s106 = sadd.s32 %s105, 1
      %p109 = scmp.eq.s32.totalorder %s29, 1
      %p110 = scmp.ne.s32.totalorder %s105, %s107
      %p111 = scmp.eq.s32.totalorder %s29, 0
      %p112 = por %p110, %p111
      %p113 = scmp.ne.s32.totalorder %s105, %s107
      %p114 = scmp.eq.s32.totalorder %s34, 1
      %p115 = por %p113, %p114
      %p116 = scmp.ne.s32.totalorder %s107, %s108
      %p117 = scmp.eq.s32.totalorder %s34, 0
      %p118 = por %p116, %p117
      %p119 = scmp.ne.s32.totalorder %s107, %s108
      %p120 = scmp.eq.s32.totalorder %s35, 1
      %p121 = por %p119, %p120
      %p123 = scmp.ne.s32.totalorder %s108, %s122
      %p124 = scmp.eq.s32.totalorder %s35, 0
      %p125 = por %p123, %p124
      %s127 = sadd.s32 %s126, 1
      %p130 = scmp.eq.s32.totalorder %s29, 1
      %p131 = scmp.ne.s32.totalorder %s126, %s128
      %p132 = scmp.eq.s32.totalorder %s29, 0
      %p133 = por %p131, %p132
      %p134 = scmp.ne.s32.totalorder %s126, %s128
      %p135 = scmp.eq.s32.totalorder %s34, 1
      %p136 = por %p134, %p135
      %p137 = scmp.ne.s32.totalorder %s128, %s129
      %p138 = scmp.eq.s32.totalorder %s34, 0
      %p139 = por %p137, %p138
      %p140 = scmp.ne.s32.totalorder %s128, %s129
      %p141 = scmp.eq.s32.totalorder %s35, 1
      %p142 = por %p140, %p141
      %p144 = scmp.ne.s32.totalorder %s129, %s143
      %p145 = scmp.eq.s32.totalorder %s35, 0
      %p146 = por %p144, %p145
      %s148 = sadd.s32 %s147, 1
      %p151 = scmp.eq.s32.totalorder %s29, 1
      %p152 = scmp.ne.s32.totalorder %s147, %s149
      %p153 = scmp.eq.s32.totalorder %s29, 0
      %p154 = por %p152, %p153
      %p155 = scmp.ne.s32.totalorder %s147, %s149
      %p156 = scmp.eq.s32.totalorder %s34, 1
      %p157 = por %p155, %p156
      %p158 = scmp.ne.s32.totalorder %s149, %s150
      %p159 = scmp.eq.s32.totalorder %s34, 0
      %p160 = por %p158, %p159
      %p161 = scmp.ne.s32.totalorder %s149, %s150
      %p162 = scmp.eq.s32.totalorder %s35, 1
      %p163 = por %p161, %p162
      %p165 = scmp.ne.s32.totalorder %s150, %s164
      %p166 = scmp.eq.s32.totalorder %s35, 0
      %p167 = por %p165, %p166
      %s169 = sadd.s32 %s168, 1
      %p172 = scmp.eq.s32.totalorder %s29, 1
      %p173 = scmp.ne.s32.totalorder %s168, %s170
      %p174 = scmp.eq.s32.totalorder %s29, 0
      %p175 = por %p173, %p174
      %p176 = scmp.ne.s32.totalorder %s168, %s170
      %p177 = scmp.eq.s32.totalorder %s34, 1
      %p178 = por %p176, %p177
      %p179 = scmp.ne.s32.totalorder %s170, %s171
      %p180 = scmp.eq.s32.totalorder %s34, 0
      %p181 = por %p179, %p180
      %p182 = scmp.ne.s32.totalorder %s170, %s171
      %p183 = scmp.eq.s32.totalorder %s35, 1
      %p184 = por %p182, %p183
      %p186 = scmp.ne.s32.totalorder %s171, %s185
      %p187 = scmp.eq.s32.totalorder %s35, 0
      %p188 = por %p186, %p187
      %s190 = sadd.s32 %s189, 1
      %p193 = scmp.eq.s32.totalorder %s29, 1
      %p194 = scmp.ne.s32.totalorder %s189, %s191
      %p195 = scmp.eq.s32.totalorder %s29, 0
      %p196 = por %p194, %p195
      %p197 = scmp.ne.s32.totalorder %s189, %s191
      %p198 = scmp.eq.s32.totalorder %s34, 1
      %p199 = por %p197, %p198
      %p200 = scmp.ne.s32.totalorder %s191, %s192
      %p201 = scmp.eq.s32.totalorder %s34, 0
      %p202 = por %p200, %p201
      %p203 = scmp.ne.s32.totalorder %s191, %s192
      %p204 = scmp.eq.s32.totalorder %s35, 1
      %p205 = por %p203, %p204
      %p207 = scmp.ne.s32.totalorder %s192, %s206
      %p208 = scmp.eq.s32.totalorder %s35, 0
      %p209 = por %p207, %p208
      %s211 = sadd.s32 %s210, 1
      %p214 = scmp.eq.s32.totalorder %s29, 1
      %p215 = scmp.ne.s32.totalorder %s210, %s212
      %p216 = scmp.eq.s32.totalorder %s29, 0
      %p217 = por %p215, %p216
      %p218 = scmp.ne.s32.totalorder %s210, %s212
      %p219 = scmp.eq.s32.totalorder %s34, 1
      %p220 = por %p218, %p219
      %p221 = scmp.ne.s32.totalorder %s212, %s213
      %p222 = scmp.eq.s32.totalorder %s34, 0
      %p223 = por %p221, %p222
      %p224 = scmp.ne.s32.totalorder %s212, %s213
      %p225 = scmp.eq.s32.totalorder %s35, 1
      %p226 = por %p224, %p225
      %p228 = scmp.ne.s32.totalorder %s213, %s227
      %p229 = scmp.eq.s32.totalorder %s35, 0
      %p230 = por %p228, %p229
      %s232 = sadd.s32 %s231, 1
      %p235 = scmp.eq.s32.totalorder %s29, 1
      %p236 = scmp.ne.s32.totalorder %s231, %s233
      %p237 = scmp.eq.s32.totalorder %s29, 0
      %p238 = por %p236, %p237
      %p239 = scmp.ne.s32.totalorder %s231, %s233
      %p240 = scmp.eq.s32.totalorder %s34, 1
      %p241 = por %p239, %p240
      %p242 = scmp.ne.s32.totalorder %s233, %s234
      %p243 = scmp.eq.s32.totalorder %s34, 0
      %p244 = por %p242, %p243
      %p245 = scmp.ne.s32.totalorder %s233, %s234
      %p246 = scmp.eq.s32.totalorder %s35, 1
      %p247 = por %p245, %p246
      %p249 = scmp.ne.s32.totalorder %s234, %s248
      %p250 = scmp.eq.s32.totalorder %s35, 0
      %p251 = por %p249, %p250
      %s253 = sadd.s32 %s252, 1
      %p256 = scmp.eq.s32.totalorder %s29, 1
      %p257 = scmp.ne.s32.totalorder %s252, %s254
      %p258 = scmp.eq.s32.totalorder %s29, 0
      %p259 = por %p257, %p258
      %p260 = scmp.ne.s32.totalorder %s252, %s254
      %p261 = scmp.eq.s32.totalorder %s34, 1
      %p262 = por %p260, %p261
      %p263 = scmp.ne.s32.totalorder %s254, %s255
      %p264 = scmp.eq.s32.totalorder %s34, 0
      %p265 = por %p263, %p264
      %p266 = scmp.ne.s32.totalorder %s254, %s255
      %p267 = scmp.eq.s32.totalorder %s35, 1
      %p268 = por %p266, %p267
      %p270 = scmp.ne.s32.totalorder %s255, %s269
      %p271 = scmp.eq.s32.totalorder %s35, 0
      %p272 = por %p270, %p271
      %s274 = sadd.s32 %s273, 1
      %p277 = scmp.eq.s32.totalorder %s29, 1
      %p278 = scmp.ne.s32.totalorder %s273, %s275
      %p279 = scmp.eq.s32.totalorder %s29, 0
      %p280 = por %p278, %p279
      %p281 = scmp.ne.s32.totalorder %s273, %s275
      %p282 = scmp.eq.s32.totalorder %s34, 1
      %p283 = por %p281, %p282
      %p284 = scmp.ne.s32.totalorder %s275, %s276
      %p285 = scmp.eq.s32.totalorder %s34, 0
      %p286 = por %p284, %p285
      %p287 = scmp.ne.s32.totalorder %s275, %s276
      %p288 = scmp.eq.s32.totalorder %s35, 1
      %p289 = por %p287, %p288
      %p291 = scmp.ne.s32.totalorder %s276, %s290
      %p292 = scmp.eq.s32.totalorder %s35, 0
      %p293 = por %p291, %p292
      %s295 = sadd.s32 %s294, 1
      %p298 = scmp.eq.s32.totalorder %s29, 1
      %p299 = scmp.ne.s32.totalorder %s294, %s296
      %p300 = scmp.eq.s32.totalorder %s29, 0
      %p301 = por %p299, %p300
      %p302 = scmp.ne.s32.totalorder %s294, %s296
      %p303 = scmp.eq.s32.totalorder %s34, 1
      %p304 = por %p302, %p303
      %p305 = scmp.ne.s32.totalorder %s296, %s297
      %p306 = scmp.eq.s32.totalorder %s34, 0
      %p307 = por %p305, %p306
      %p308 = scmp.ne.s32.totalorder %s296, %s297
      %p309 = scmp.eq.s32.totalorder %s35, 1
      %p310 = por %p308, %p309
      %p312 = scmp.ne.s32.totalorder %s297, %s311
      %p313 = scmp.eq.s32.totalorder %s35, 0
      %p314 = por %p312, %p313
      %s316 = sadd.s32 %s315, 1
      %p319 = scmp.eq.s32.totalorder %s29, 1
      %p320 = scmp.ne.s32.totalorder %s315, %s317
      %p321 = scmp.eq.s32.totalorder %s29, 0
      %p322 = por %p320, %p321
      %p323 = scmp.ne.s32.totalorder %s315, %s317
      %p324 = scmp.eq.s32.totalorder %s34, 1
      %p325 = por %p323, %p324
      %p326 = scmp.ne.s32.totalorder %s317, %s318
      %p327 = scmp.eq.s32.totalorder %s34, 0
      %p328 = por %p326, %p327
      %p329 = scmp.ne.s32.totalorder %s317, %s318
      %p330 = scmp.eq.s32.totalorder %s35, 1
      %p331 = por %p329, %p330
      %p333 = scmp.ne.s32.totalorder %s318, %s332
      %p334 = scmp.eq.s32.totalorder %s35, 0
      %p335 = por %p333, %p334
      %s337 = sadd.s32 %s336, 1
      %p340 = scmp.eq.s32.totalorder %s29, 1
      %p341 = scmp.ne.s32.totalorder %s336, %s338
      %p342 = scmp.eq.s32.totalorder %s29, 0
      %p343 = por %p341, %p342
      %p344 = scmp.ne.s32.totalorder %s336, %s338
      %p345 = scmp.eq.s32.totalorder %s34, 1
      %p346 = por %p344, %p345
      %p347 = scmp.ne.s32.totalorder %s338, %s339
      %p348 = scmp.eq.s32.totalorder %s34, 0
      %p349 = por %p347, %p348
      %p350 = scmp.ne.s32.totalorder %s338, %s339
      %p351 = scmp.eq.s32.totalorder %s35, 1
      %p352 = por %p350, %p351
      %p354 = scmp.ne.s32.totalorder %s339, %s353
      %p355 = scmp.eq.s32.totalorder %s35, 0
      %p356 = por %p354, %p355
      %s357 = ssub.s32 %s29, %s36
      %p358 = scmp.eq.s32.totalorder %s357, 0
      %s360 = sadd.s32 %s359, 1
      %s361 = scalar_select %p358, %s359, %s360
      %p364 = pneg %p358
      %p365 = scmp.eq.s32.totalorder %s29, 1
      %p366 = por %p364, %p365
      %p367 = scmp.ne.s32.totalorder %s359, %s362
      %p368 = scmp.eq.s32.totalorder %s29, 0
      %p369 = por %p367, %p368
      %p370 = scmp.ne.s32.totalorder %s359, %s362
      %p371 = scmp.eq.s32.totalorder %s34, 1
      %p372 = por %p370, %p371
      %p373 = scmp.ne.s32.totalorder %s362, %s363
      %p374 = scmp.eq.s32.totalorder %s34, 0
      %p375 = por %p373, %p374
      %p376 = scmp.ne.s32.totalorder %s362, %s363
      %p377 = scmp.eq.s32.totalorder %s35, 1
      %p378 = por %p376, %p377
      %p380 = scmp.ne.s32.totalorder %s363, %s379
      %p381 = scmp.eq.s32.totalorder %s35, 0
      %p382 = por %p380, %p381
      %p383 = scmp.le.s32.totalorder 1, %s29
      %p384 = scmp.lt.s32.totalorder %s29, 3
      %p385 = pnand %p383, %p384
      %p386 = pneg %p385
      // Predicated region
      $region9: #{_lambda_.1} parent=5 // pred_check
        _
      $region10: #{_lambda_.1} parent=5 // pred_check_branch
        %388 = sbr.rel (%p385) target = $region12
      $region11: #{_lambda_.1} parent=5 // pred_region
        %s389 = ssub.s32 %s29, 1
        // Predicated region
        $region13: #{_lambda_.1} parent=11 // pred_check
          %p390 = pneg %p76
        $region14: #{_lambda_.1} parent=11 // pred_check_branch
          %392 = sbr.rel (%p390) target = $region16
        $region15: #{_lambda_.1} parent=11 // pred_region
          %s394 = ssub.s32 9600, 9600
          %395 = vsyncadd [#allocation3], %s394
          %s396 = sshll.u32 [#allocation2], 4
          %s397 = int_to_ptr.vmem [resolvable:$true] %s396
          %402 = dma.hbm_to_vmem [thread:$0]  %s1, 9600, %s397, [#allocation3], 128, 128, 8
        $region16: #{_lambda_.1} parent=11 // pred_fallthru
          _
        // Predicated region
        $region17: #{_lambda_.1} parent=11 // pred_check
          %p403 = pneg %p97
        $region18: #{_lambda_.1} parent=11 // pred_check_branch
          %405 = sbr.rel (%p403) target = $region20
        $region19: #{_lambda_.1} parent=11 // pred_region
          _
        $region20: #{_lambda_.1} parent=11 // pred_fallthru
          _
        // Predicated region
        $region21: #{_lambda_.1} parent=11 // pred_check
          %p406 = pneg %p118
        $region22: #{_lambda_.1} parent=11 // pred_check_branch
          %408 = sbr.rel (%p406) target = $region24
        $region23: #{_lambda_.1} parent=11 // pred_region
          _
        $region24: #{_lambda_.1} parent=11 // pred_fallthru
          _
        // Predicated region
        $region25: #{_lambda_.1} parent=11 // pred_check
          %p409 = pneg %p139
        $region26: #{_lambda_.1} parent=11 // pred_check_branch
          %411 = sbr.rel (%p409) target = $region28
        $region27: #{_lambda_.1} parent=11 // pred_region
          %s413 = ssub.s32 256, 256
          %414 = vsyncadd [#allocation6], %s413
          %s415 = sshll.u32 [#allocation5], 4
          %s416 = int_to_ptr.vmem [resolvable:$true] %s415
          %421 = dma.hbm_to_vmem [thread:$0]  %s4, 256, %s416, [#allocation6], 128, 128, 8
        $region28: #{_lambda_.1} parent=11 // pred_fallthru
          _
        // Predicated region
        $region29: #{_lambda_.1} parent=11 // pred_check
          %p422 = pneg %p160
        $region30: #{_lambda_.1} parent=11 // pred_check_branch
          %424 = sbr.rel (%p422) target = $region32
        $region31: #{_lambda_.1} parent=11 // pred_region
          %s426 = ssub.s32 12800, 12800
          %427 = vsyncadd [#allocation6], %s426
          %s428 = sshll.u32 [#allocation7], 4
          %s429 = int_to_ptr.vmem [resolvable:$true] %s428
          %434 = dma.hbm_to_vmem [thread:$0]  %s5, 12800, %s429, [#allocation6], 64, 64, 4
        $region32: #{_lambda_.1} parent=11 // pred_fallthru
          _
        // Predicated region
        $region33: #{_lambda_.1} parent=11 // pred_check
          %p435 = pneg %p181
        $region34: #{_lambda_.1} parent=11 // pred_check_branch
          %437 = sbr.rel (%p435) target = $region36
        $region35: #{_lambda_.1} parent=11 // pred_region
          %s439 = ssub.s32 16, 16
          %440 = vsyncadd [#allocation9], %s439
          %s442 = sshll.u32 [#allocation8], 4
          %s443 = int_to_ptr.vmem [resolvable:$true] %s442
          %445 = dma.hbm_to_vmem [thread:$0]  %s6, 16, %s443, [#allocation9]
        $region36: #{_lambda_.1} parent=11 // pred_fallthru
          _
        // Predicated region
        $region37: #{_lambda_.1} parent=11 // pred_check
          %p446 = pneg %p202
        $region38: #{_lambda_.1} parent=11 // pred_check_branch
          %448 = sbr.rel (%p446) target = $region40
        $region39: #{_lambda_.1} parent=11 // pred_region
          %s450 = ssub.s32 1792, 1792
          %451 = vsyncadd [#allocation9], %s450
          %s452 = sshll.u32 [#allocation10], 4
          %s453 = int_to_ptr.vmem [resolvable:$true] %s452
          %458 = dma.hbm_to_vmem [thread:$0]  %s7, 1792, %s453, [#allocation9], 128, 128, 8
        $region40: #{_lambda_.1} parent=11 // pred_fallthru
          _
        // Predicated region
        $region41: #{_lambda_.1} parent=11 // pred_check
          %p459 = pneg %p223
        $region42: #{_lambda_.1} parent=11 // pred_check_branch
          %461 = sbr.rel (%p459) target = $region44
        $region43: #{_lambda_.1} parent=11 // pred_region
          %s463 = ssub.s32 64, 64
          %464 = vsyncadd [#allocation12], %s463
          %s466 = sshll.u32 [#allocation11], 4
          %s467 = int_to_ptr.vmem [resolvable:$true] %s466
          %469 = dma.hbm_to_vmem [thread:$0]  %s8, 64, %s467, [#allocation12]
        $region44: #{_lambda_.1} parent=11 // pred_fallthru
          _
        // Predicated region
        $region45: #{_lambda_.1} parent=11 // pred_check
          %p470 = pneg %p244
        $region46: #{_lambda_.1} parent=11 // pred_check_branch
          %472 = sbr.rel (%p470) target = $region48
        $region47: #{_lambda_.1} parent=11 // pred_region
          %s474 = ssub.s32 2048, 2048
          %475 = vsyncadd [#allocation12], %s474
          %s476 = sshll.u32 [#allocation13], 4
          %s477 = int_to_ptr.vmem [resolvable:$true] %s476
          %482 = dma.hbm_to_vmem [thread:$0]  %s9, 2048, %s477, [#allocation12], 64, 64, 4
        $region48: #{_lambda_.1} parent=11 // pred_fallthru
          _
        // Predicated region
        $region49: #{_lambda_.1} parent=11 // pred_check
          %p483 = pneg %p265
        $region50: #{_lambda_.1} parent=11 // pred_check_branch
          %485 = sbr.rel (%p483) target = $region52
        $region51: #{_lambda_.1} parent=11 // pred_region
          %s487 = ssub.s32 16, 16
          %488 = vsyncadd [#allocation15], %s487
          %s490 = sshll.u32 [#allocation14], 4
          %s491 = int_to_ptr.vmem [resolvable:$true] %s490
          %493 = dma.hbm_to_vmem [thread:$0]  %s10, 16, %s491, [#allocation15]
        $region52: #{_lambda_.1} parent=11 // pred_fallthru
          _
        // Predicated region
        $region53: #{_lambda_.1} parent=11 // pred_check
          %p494 = pneg %p286
        $region54: #{_lambda_.1} parent=11 // pred_check_branch
          %496 = sbr.rel (%p494) target = $region56
        $region55: #{_lambda_.1} parent=11 // pred_region
          _
        $region56: #{_lambda_.1} parent=11 // pred_fallthru
          _
        // Predicated region
        $region57: #{_lambda_.1} parent=11 // pred_check
          %p497 = pneg %p307
        $region58: #{_lambda_.1} parent=11 // pred_check_branch
          %499 = sbr.rel (%p497) target = $region60
        $region59: #{_lambda_.1} parent=11 // pred_region
          _
        $region60: #{_lambda_.1} parent=11 // pred_fallthru
          _
        // Predicated region
        $region61: #{_lambda_.1} parent=11 // pred_check
          %p500 = pneg %p328
        $region62: #{_lambda_.1} parent=11 // pred_check_branch
          %502 = sbr.rel (%p500) target = $region64
        $region63: #{_lambda_.1} parent=11 // pred_region
          %s504 = ssub.s32 512, 512
          %505 = vsyncadd [#allocation15], %s504
          %s506 = sshll.u32 [#allocation16], 4
          %s507 = int_to_ptr.vmem [resolvable:$true] %s506
          %512 = dma.hbm_to_vmem [thread:$0]  %s13, 512, %s507, [#allocation15], 64, 64, 4
        $region64: #{_lambda_.1} parent=11 // pred_fallthru
          _
        // Predicated region
        $region65: #{_lambda_.1} parent=11 // pred_check
          %p513 = pneg %p349
        $region66: #{_lambda_.1} parent=11 // pred_check_branch
          %515 = sbr.rel (%p513) target = $region68
        $region67: #{_lambda_.1} parent=11 // pred_region
          _
        $region68: #{_lambda_.1} parent=11 // pred_fallthru
          _
      $region12: #{_lambda_.1} parent=5 // pred_fallthru
        _
      %p516 = scmp.lt.s32.totalorder %s29, 2
      // Predicated region
      $region69: #{_lambda_.1} parent=5 // pred_check
        %p517 = pneg %p516
      $region70: #{_lambda_.1} parent=5 // pred_check_branch
        %519 = sbr.rel (%p517) target = $region72
      $region71: #{_lambda_.1} parent=5 // pred_region
        // Predicated region
        $region73: #{_lambda_.1} parent=71 // pred_check
          %p520 = pneg %p49
        $region74: #{_lambda_.1} parent=71 // pred_check_branch
          %522 = sbr.rel (%p520) target = $region76
        $region75: #{_lambda_.1} parent=71 // pred_region
          %p523 = scmp.lt.s32.totalorder %s29, 1
          %s524 = scalar_select %p523, %s29, 1
          %s525 = smul.addr %s524, 4
          %s526 = smul.addr %s525, 8
          %s527 = scalar_lea.vmem %s0, %s526
        $region76: #{_lambda_.1} parent=71 // pred_fallthru
          _
      $region72: #{_lambda_.1} parent=5 // pred_fallthru
        _
      %p528 = scmp.le.s32.totalorder 1, %s29
      %p529 = scmp.lt.s32.totalorder %s29, 3
      %p530 = pnand %p528, %p529
      %p531 = pneg %p530
      // Predicated region
      $region77: #{_lambda_.1} parent=5 // pred_check
        _
      $region78: #{_lambda_.1} parent=5 // pred_check_branch
        %533 = sbr.rel (%p530) target = $region80
      $region79: #{_lambda_.1} parent=5 // pred_region
        %s534 = ssub.s32 %s29, 1
        // Predicated region
        $region81: #{_lambda_.1} parent=79 // pred_check
          %p535 = pneg %p76
        $region82: #{_lambda_.1} parent=79 // pred_check_branch
          %537 = sbr.rel (%p535) target = $region84
        $region83: #{_lambda_.1} parent=79 // pred_region
          %538 = dma.done [#allocation3], 9600
        $region84: #{_lambda_.1} parent=79 // pred_fallthru
          _
        // Predicated region
        $region85: #{_lambda_.1} parent=79 // pred_check
          %p539 = pneg %p139
        $region86: #{_lambda_.1} parent=79 // pred_check_branch
          %541 = sbr.rel (%p539) target = $region88
        $region87: #{_lambda_.1} parent=79 // pred_region
          %542 = dma.done [#allocation6], 256
        $region88: #{_lambda_.1} parent=79 // pred_fallthru
          _
        // Predicated region
        $region89: #{_lambda_.1} parent=79 // pred_check
          %p543 = pneg %p160
        $region90: #{_lambda_.1} parent=79 // pred_check_branch
          %545 = sbr.rel (%p543) target = $region92
        $region91: #{_lambda_.1} parent=79 // pred_region
          %546 = dma.done [#allocation6], 12800
        $region92: #{_lambda_.1} parent=79 // pred_fallthru
          _
        // Predicated region
        $region93: #{_lambda_.1} parent=79 // pred_check
          %p547 = pneg %p181
        $region94: #{_lambda_.1} parent=79 // pred_check_branch
          %549 = sbr.rel (%p547) target = $region96
        $region95: #{_lambda_.1} parent=79 // pred_region
          %550 = dma.done [#allocation9], 16
        $region96: #{_lambda_.1} parent=79 // pred_fallthru
          _
        // Predicated region
        $region97: #{_lambda_.1} parent=79 // pred_check
          %p551 = pneg %p202
        $region98: #{_lambda_.1} parent=79 // pred_check_branch
          %553 = sbr.rel (%p551) target = $region100
        $region99: #{_lambda_.1} parent=79 // pred_region
          %554 = dma.done [#allocation9], 1792
        $region100: #{_lambda_.1} parent=79 // pred_fallthru
          _
        // Predicated region
        $region101: #{_lambda_.1} parent=79 // pred_check
          %p555 = pneg %p223
        $region102: #{_lambda_.1} parent=79 // pred_check_branch
          %557 = sbr.rel (%p555) target = $region104
        $region103: #{_lambda_.1} parent=79 // pred_region
          %558 = dma.done [#allocation12], 64
        $region104: #{_lambda_.1} parent=79 // pred_fallthru
          _
        // Predicated region
        $region105: #{_lambda_.1} parent=79 // pred_check
          %p559 = pneg %p244
        $region106: #{_lambda_.1} parent=79 // pred_check_branch
          %561 = sbr.rel (%p559) target = $region108
        $region107: #{_lambda_.1} parent=79 // pred_region
          %562 = dma.done [#allocation12], 2048
        $region108: #{_lambda_.1} parent=79 // pred_fallthru
          _
        // Predicated region
        $region109: #{_lambda_.1} parent=79 // pred_check
          %p563 = pneg %p265
        $region110: #{_lambda_.1} parent=79 // pred_check_branch
          %565 = sbr.rel (%p563) target = $region112
        $region111: #{_lambda_.1} parent=79 // pred_region
          %566 = dma.done [#allocation15], 16
        $region112: #{_lambda_.1} parent=79 // pred_fallthru
          _
        // Predicated region
        $region113: #{_lambda_.1} parent=79 // pred_check
          %p567 = pneg %p328
        $region114: #{_lambda_.1} parent=79 // pred_check_branch
          %569 = sbr.rel (%p567) target = $region116
        $region115: #{_lambda_.1} parent=79 // pred_region
          %570 = dma.done [#allocation15], 512
        $region116: #{_lambda_.1} parent=79 // pred_fallthru
          _
        %p571 = scmp.lt.s32.totalorder %s34, 1
        %s572 = scalar_select %p571, %s34, 1
        %s573 = smul.addr %s572, 4
        %s574 = smul.addr %s573, 8
        %s575 = scalar_lea.vmem %s0, %s574
        %p576 = pneg %p55
        %p577 = pneg %p52
        %p578 = pneg %p76
        %p579 = pneg %p73
        %p580 = pneg %p97
        %p581 = pneg %p94
        %p582 = pneg %p118
        %p583 = pneg %p115
        %p584 = pneg %p139
        %p585 = pneg %p136
        %p586 = pneg %p160
        %p587 = pneg %p157
        %p588 = pneg %p181
        %p589 = pneg %p178
        %p590 = pneg %p202
        %p591 = pneg %p199
        %p592 = pneg %p223
        %p593 = pneg %p220
        %p594 = pneg %p244
        %p595 = pneg %p241
        %p596 = pneg %p265
        %p597 = pneg %p262
        %p598 = pneg %p286
        %p599 = pneg %p283
        %p600 = pneg %p307
        %p601 = pneg %p304
        %p602 = pneg %p328
        %p603 = pneg %p325
        %p604 = pneg %p349
        %p605 = pneg %p346
        %p606 = pneg %p375
        %p607 = pneg %p372
        %s608 = sand.u32 %s362, 1
        %s609 = scalar_lea.sflag [#allocation4], %s608
        %s610 = sand.u32 %s362, 1
        %s611 = scalar_lea.vmem [#allocation17], %s610
        %p612 = scmp.lt.s32.totalorder %s34, 1
        %s613 = scalar_select %p612, %s34, 1
        %s614 = smul.addr %s613, 4
        %s615 = smul.addr %s614, 8
        %s616 = scalar_lea.vmem %s0, %s615
        %v618 = vld [vmem:[%s616] sm:$0xff]
        %v619 = vld [vmem:[%s616 + $0x8] sm:$0xff]
        %v620 = vld [vmem:[%s616 + $0x10] sm:$0xff]
        %v621 = vld [vmem:[%s616 + $0x18] sm:$0xf]
        %625 = vrot.lane.b32.xlu0 %v618, 23
        %v626 = vpop.permute.xlu0 %625
        %627 = vrot.lane.b32.xlu0 %v619, 23
        %v628 = vpop.permute.xlu0 %627
        %629 = vrot.lane.b32.xlu0 %v620, 23
        %v630 = vpop.permute.xlu0 %629
        %634 = vrot.lane.b32.xlu0 %v618, 46
        %v635 = vpop.permute.xlu0 %634
        %636 = vrot.lane.b32.xlu0 %v619, 46
        %v637 = vpop.permute.xlu0 %636
        %638 = vrot.lane.b32.xlu0 %v620, 46
        %v639 = vpop.permute.xlu0 %638
        %643 = vrot.lane.b32.xlu0 %v618, 69
        %v644 = vpop.permute.xlu0 %643
        %645 = vrot.lane.b32.xlu0 %v619, 69
        %v646 = vpop.permute.xlu0 %645
        %647 = vrot.lane.b32.xlu0 %v620, 69
        %v648 = vpop.permute.xlu0 %647
        %652 = vrot.lane.b32.xlu0 %v618, 92
        %v653 = vpop.permute.xlu0 %652
        %654 = vrot.lane.b32.xlu0 %v619, 92
        %v655 = vpop.permute.xlu0 %654
        %656 = vrot.lane.b32.xlu0 %v620, 92
        %v657 = vpop.permute.xlu0 %656
        %vm662 = vcmask 1046528
        %v663 = vrot.slane %v618, 1
        %v664 = vrot.slane %v619, 1
        %v665 = vsel %vm662, %v663, %v664
        %v666 = vrot.slane %v620, 1
        %v667 = vsel %vm662, %v664, %v666
        %v668 = vrot.slane %v621, 1
        %v669 = vsel %vm662, %v666, %v668
        %670 = vrot.lane.b32.xlu0 %v665, 120
        %v671 = vpop.permute.xlu0 %670
        %672 = vrot.lane.b32.xlu0 %v667, 120
        %v673 = vpop.permute.xlu0 %672
        %674 = vrot.lane.b32.xlu0 %v669, 120
        %v675 = vpop.permute.xlu0 %674
        %679 = vrot.lane.b32.xlu0 %v665, 15
        %v680 = vpop.permute.xlu0 %679
        %681 = vrot.lane.b32.xlu0 %v667, 15
        %v682 = vpop.permute.xlu0 %681
        %683 = vrot.lane.b32.xlu0 %v669, 15
        %v684 = vpop.permute.xlu0 %683
        %688 = vrot.lane.b32.xlu0 %v665, 38
        %v689 = vpop.permute.xlu0 %688
        %690 = vrot.lane.b32.xlu0 %v667, 38
        %v691 = vpop.permute.xlu0 %690
        %692 = vrot.lane.b32.xlu0 %v669, 38
        %v693 = vpop.permute.xlu0 %692
        %697 = vrot.lane.b32.xlu0 %v665, 61
        %v698 = vpop.permute.xlu0 %697
        %699 = vrot.lane.b32.xlu0 %v667, 61
        %v700 = vpop.permute.xlu0 %699
        %701 = vrot.lane.b32.xlu0 %v669, 61
        %v702 = vpop.permute.xlu0 %701
        %706 = vrot.lane.b32.xlu0 %v665, 84
        %v707 = vpop.permute.xlu0 %706
        %708 = vrot.lane.b32.xlu0 %v667, 84
        %v709 = vpop.permute.xlu0 %708
        %710 = vrot.lane.b32.xlu0 %v669, 84
        %v711 = vpop.permute.xlu0 %710
        %vm715 = vcmask 1045504
        %v716 = vrot.slane %v618, 2
        %v717 = vrot.slane %v619, 2
        %v718 = vsel %vm715, %v716, %v717
        %v719 = vrot.slane %v620, 2
        %v720 = vsel %vm715, %v717, %v719
        %v721 = vrot.slane %v621, 2
        %v722 = vsel %vm715, %v719, %v721
        %723 = vrot.lane.b32.xlu0 %v718, 112
        %v724 = vpop.permute.xlu0 %723
        %725 = vrot.lane.b32.xlu0 %v720, 112
        %v726 = vpop.permute.xlu0 %725
        %727 = vrot.lane.b32.xlu0 %v722, 112
        %v728 = vpop.permute.xlu0 %727
        %732 = vrot.lane.b32.xlu0 %v718, 7
        %v733 = vpop.permute.xlu0 %732
        %734 = vrot.lane.b32.xlu0 %v720, 7
        %v735 = vpop.permute.xlu0 %734
        %736 = vrot.lane.b32.xlu0 %v722, 7
        %v737 = vpop.permute.xlu0 %736
        %741 = vrot.lane.b32.xlu0 %v718, 30
        %v742 = vpop.permute.xlu0 %741
        %743 = vrot.lane.b32.xlu0 %v720, 30
        %v744 = vpop.permute.xlu0 %743
        %745 = vrot.lane.b32.xlu0 %v722, 30
        %v746 = vpop.permute.xlu0 %745
        %750 = vrot.lane.b32.xlu0 %v718, 53
        %v751 = vpop.permute.xlu0 %750
        %752 = vrot.lane.b32.xlu0 %v720, 53
        %v753 = vpop.permute.xlu0 %752
        %754 = vrot.lane.b32.xlu0 %v722, 53
        %v755 = vpop.permute.xlu0 %754
        %759 = vrot.lane.b32.xlu0 %v718, 76
        %v760 = vpop.permute.xlu0 %759
        %761 = vrot.lane.b32.xlu0 %v720, 76
        %v762 = vpop.permute.xlu0 %761
        %763 = vrot.lane.b32.xlu0 %v722, 76
        %v764 = vpop.permute.xlu0 %763
        %vm768 = vcmask 1044480
        %v769 = vrot.slane %v618, 3
        %v770 = vrot.slane %v619, 3
        %v771 = vsel %vm768, %v769, %v770
        %v772 = vrot.slane %v620, 3
        %v773 = vsel %vm768, %v770, %v772
        %v774 = vrot.slane %v621, 3
        %v775 = vsel %vm768, %v772, %v774
        %776 = vrot.lane.b32.xlu0 %v771, 104
        %v777 = vpop.permute.xlu0 %776
        %778 = vrot.lane.b32.xlu0 %v773, 104
        %v779 = vpop.permute.xlu0 %778
        %780 = vrot.lane.b32.xlu0 %v775, 104
        %v781 = vpop.permute.xlu0 %780
        %vm785 = vcmask 195584
        %v786 = vsel %vm785, %v618, %v626
        %v787 = vsel %vm785, %v619, %v628
        %v788 = vsel %vm785, %v620, %v630
        %vm789 = vcmask 392192
        %v790 = vsel %vm789, %v786, %v635
        %v791 = vsel %vm789, %v787, %v637
        %v792 = vsel %vm789, %v788, %v639
        %vm793 = vcmask 588800
        %v794 = vsel %vm793, %v790, %v644
        %v795 = vsel %vm793, %v791, %v646
        %v796 = vsel %vm793, %v792, %v648
        %vm797 = vcmask 785408
        %v798 = vsel %vm797, %v794, %v653
        %v799 = vsel %vm797, %v795, %v655
        %v800 = vsel %vm797, %v796, %v657
        %vm801 = vcmask 982016
        %v802 = vsel %vm801, %v798, %v671
        %v803 = vsel %vm801, %v799, %v673
        %v804 = vsel %vm801, %v800, %v675
        %vm805 = vcmask 130048
        %v806 = vsel %vm805, %v671, %v680
        %v807 = vsel %vm805, %v673, %v682
        %v808 = vsel %vm805, %v675, %v684
        %vm809 = vcmask 326656
        %v810 = vsel %vm809, %v806, %v689
        %v811 = vsel %vm809, %v807, %v691
        %v812 = vsel %vm809, %v808, %v693
        %vm813 = vcmask 523264
        %v814 = vsel %vm813, %v810, %v698
        %v815 = vsel %vm813, %v811, %v700
        %v816 = vsel %vm813, %v812, %v702
        %vm817 = vcmask 719872
        %v818 = vsel %vm817, %v814, %v707
        %v819 = vsel %vm817, %v815, %v709
        %v820 = vsel %vm817, %v816, %v711
        %vm821 = vcmask 916480
        %v822 = vsel %vm821, %v818, %v724
        %v823 = vsel %vm821, %v819, %v726
        %v824 = vsel %vm821, %v820, %v728
        %vm825 = vcmask 64512
        %v826 = vsel %vm825, %v724, %v733
        %v827 = vsel %vm825, %v726, %v735
        %v828 = vsel %vm825, %v728, %v737
        %vm829 = vcmask 261120
        %v830 = vsel %vm829, %v826, %v742
        %v831 = vsel %vm829, %v827, %v744
        %v832 = vsel %vm829, %v828, %v746
        %vm833 = vcmask 457728
        %v834 = vsel %vm833, %v830, %v751
        %v835 = vsel %vm833, %v831, %v753
        %v836 = vsel %vm833, %v832, %v755
        %vm837 = vcmask 654336
        %v838 = vsel %vm837, %v834, %v760
        %v839 = vsel %vm837, %v835, %v762
        %v840 = vsel %vm837, %v836, %v764
        %vm841 = vcmask 850944
        %v842 = vsel %vm841, %v838, %v777
        %v843 = vsel %vm841, %v839, %v779
        %v844 = vsel %vm841, %v840, %v781
        %845 = vrot.lane.b32.xlu0 %v618, 127
        %v846 = vpop.permute.xlu0 %845
        %847 = vrot.lane.b32.xlu0 %v619, 127
        %v848 = vpop.permute.xlu0 %847
        %849 = vrot.lane.b32.xlu0 %v620, 127
        %v850 = vpop.permute.xlu0 %849
        %851 = vrot.lane.b32.xlu0 %v621, 127
        %v852 = vpop.permute.xlu0 %851
        %857 = vrot.lane.b32.xlu0 %v618, 22
        %v858 = vpop.permute.xlu0 %857
        %859 = vrot.lane.b32.xlu0 %v619, 22
        %v860 = vpop.permute.xlu0 %859
        %861 = vrot.lane.b32.xlu0 %v620, 22
        %v862 = vpop.permute.xlu0 %861
        %863 = vrot.lane.b32.xlu0 %v621, 22
        %v864 = vpop.permute.xlu0 %863
        %869 = vrot.lane.b32.xlu0 %v618, 45
        %v870 = vpop.permute.xlu0 %869
        %871 = vrot.lane.b32.xlu0 %v619, 45
        %v872 = vpop.permute.xlu0 %871
        %873 = vrot.lane.b32.xlu0 %v620, 45
        %v874 = vpop.permute.xlu0 %873
        %875 = vrot.lane.b32.xlu0 %v621, 45
        %v876 = vpop.permute.xlu0 %875
        %881 = vrot.lane.b32.xlu0 %v618, 68
        %v882 = vpop.permute.xlu0 %881
        %883 = vrot.lane.b32.xlu0 %v619, 68
        %v884 = vpop.permute.xlu0 %883
        %885 = vrot.lane.b32.xlu0 %v620, 68
        %v886 = vpop.permute.xlu0 %885
        %887 = vrot.lane.b32.xlu0 %v621, 68
        %v888 = vpop.permute.xlu0 %887
        %893 = vrot.lane.b32.xlu0 %v665, 96
        %v894 = vpop.permute.xlu0 %893
        %895 = vrot.lane.b32.xlu0 %v667, 96
        %v896 = vpop.permute.xlu0 %895
        %897 = vrot.lane.b32.xlu0 %v669, 96
        %v898 = vpop.permute.xlu0 %897
        %899 = vrot.lane.b32.xlu0 %v668, 96
        %v900 = vpop.permute.xlu0 %899
        %905 = vrot.lane.b32.xlu0 %v665, 119
        %v906 = vpop.permute.xlu0 %905
        %907 = vrot.lane.b32.xlu0 %v667, 119
        %v908 = vpop.permute.xlu0 %907
        %909 = vrot.lane.b32.xlu0 %v669, 119
        %v910 = vpop.permute.xlu0 %909
        %911 = vrot.lane.b32.xlu0 %v668, 119
        %v912 = vpop.permute.xlu0 %911
        %917 = vrot.lane.b32.xlu0 %v665, 14
        %v918 = vpop.permute.xlu0 %917
        %919 = vrot.lane.b32.xlu0 %v667, 14
        %v920 = vpop.permute.xlu0 %919
        %921 = vrot.lane.b32.xlu0 %v669, 14
        %v922 = vpop.permute.xlu0 %921
        %923 = vrot.lane.b32.xlu0 %v668, 14
        %v924 = vpop.permute.xlu0 %923
        %929 = vrot.lane.b32.xlu0 %v665, 37
        %v930 = vpop.permute.xlu0 %929
        %931 = vrot.lane.b32.xlu0 %v667, 37
        %v932 = vpop.permute.xlu0 %931
        %933 = vrot.lane.b32.xlu0 %v669, 37
        %v934 = vpop.permute.xlu0 %933
        %935 = vrot.lane.b32.xlu0 %v668, 37
        %v936 = vpop.permute.xlu0 %935
        %941 = vrot.lane.b32.xlu0 %v665, 60
        %v942 = vpop.permute.xlu0 %941
        %943 = vrot.lane.b32.xlu0 %v667, 60
        %v944 = vpop.permute.xlu0 %943
        %945 = vrot.lane.b32.xlu0 %v669, 60
        %v946 = vpop.permute.xlu0 %945
        %947 = vrot.lane.b32.xlu0 %v668, 60
        %v948 = vpop.permute.xlu0 %947
        %v953 = vsel %vm785, %v846, %v858
        %v954 = vsel %vm785, %v848, %v860
        %v955 = vsel %vm785, %v850, %v862
        %v956 = vsel %vm785, %v852, %v864
        %v957 = vsel %vm789, %v953, %v870
        %v958 = vsel %vm789, %v954, %v872
        %v959 = vsel %vm789, %v955, %v874
        %v960 = vsel %vm789, %v956, %v876
        %v961 = vsel %vm793, %v957, %v882
        %v962 = vsel %vm793, %v958, %v884
        %v963 = vsel %vm793, %v959, %v886
        %v964 = vsel %vm793, %v960, %v888
        %v965 = vsel %vm797, %v961, %v894
        %v966 = vsel %vm797, %v962, %v896
        %v967 = vsel %vm797, %v963, %v898
        %v968 = vsel %vm797, %v964, %v900
        %v969 = vsel %vm801, %v965, %v906
        %v970 = vsel %vm801, %v966, %v908
        %v971 = vsel %vm801, %v967, %v910
        %v972 = vsel %vm801, %v968, %v912
        %v973 = vsel %vm805, %v906, %v918
        %v974 = vsel %vm805, %v908, %v920
        %v975 = vsel %vm805, %v910, %v922
        %v976 = vsel %vm805, %v912, %v924
        %v977 = vsel %vm809, %v973, %v930
        %v978 = vsel %vm809, %v974, %v932
        %v979 = vsel %vm809, %v975, %v934
        %v980 = vsel %vm809, %v976, %v936
        %v981 = vsel %vm813, %v977, %v942
        %v982 = vsel %vm813, %v978, %v944
        %v983 = vsel %vm813, %v979, %v946
        %v984 = vsel %vm813, %v980, %v948
        %v993 = vrot.slane %v969, 3
        %v994 = vrot.slane %v970, 3
        %v995 = vsel %vm768, %v993, %v994
        %v996 = vrot.slane %v981, 3
        %v997 = vrot.slane %v982, 3
        %v998 = vsel %vm768, %v996, %v997
        %v999 = vrot.slane %v971, 3
        %v1000 = vsel %vm768, %v994, %v999
        %v1001 = vrot.slane %v983, 3
        %v1002 = vsel %vm768, %v997, %v1001
        %v1003 = vrot.slane %v972, 3
        %v1004 = vsel %vm768, %v999, %v1003
        %v1005 = vrot.slane %v984, 3
        %v1006 = vsel %vm768, %v1001, %v1005
        %v1013 = vpack.c.bf16 %v803, %v802
        %v1014 = vpack.c.bf16 %v823, %v822
        %v1015 = vpack.c.bf16 %v843, %v842
        %v1016 = vpack.c.bf16 %v1000, %v995
        %v1017 = vpack.c.bf16 %v1002, %v998
        %v1018 = vpack.c.bf16 %v804, %v804
        %v1019 = vpack.c.bf16 %v824, %v824
        %v1020 = vpack.c.bf16 %v844, %v844
        %v1021 = vpack.c.bf16 %v1004, %v1004
        %v1022 = vpack.c.bf16 %v1006, %v1006
        %v1023 = vld [vmem:[#allocation2] sm:$0xff]
        %v1024 = vld [vmem:[#allocation2 + $0x8] sm:$0xff]
        %v1025 = vld [vmem:[#allocation2 + $0x10] sm:$0xff]
        %v1026 = vld [vmem:[#allocation2 + $0x18] sm:$0xff]
        %v1027 = vld [vmem:[#allocation2 + $0x20] sm:$0xff]
        %v1028 = vld [vmem:[#allocation2 + $0x28] sm:$0xff]
        %v1029 = vld [vmem:[#allocation2 + $0x30] sm:$0xff]
        %v1030 = vld [vmem:[#allocation2 + $0x38] sm:$0xff]
        %v1031 = vld [vmem:[#allocation2 + $0x40] sm:$0xff]
        %v1032 = vld [vmem:[#allocation2 + $0x48] sm:$0xff]
        %v1033 = vld [vmem:[#allocation2 + $0x50] sm:$0xff]
        %v1034 = vld [vmem:[#allocation2 + $0x58] sm:$0xff]
        %v1035 = vld [vmem:[#allocation2 + $0x60] sm:$0xff]
        %v1036 = vld [vmem:[#allocation2 + $0x68] sm:$0xff]
        %v1037 = vld [vmem:[#allocation2 + $0x70] sm:$0xff]
        %v1038 = vld [vmem:[#allocation2 + $0x78] sm:$0xff]
        %v1039 = vld [vmem:[#allocation2 + $0x80] sm:$0xff]
        %v1040 = vld [vmem:[#allocation2 + $0x88] sm:$0xff]
        %v1041 = vld [vmem:[#allocation2 + $0x90] sm:$0xff]
        %v1042 = vld [vmem:[#allocation2 + $0x98] sm:$0xff]
        %v1043 = vld [vmem:[#allocation2 + $0xa0] sm:$0xff]
        %v1044 = vld [vmem:[#allocation2 + $0xa8] sm:$0xff]
        %v1045 = vld [vmem:[#allocation2 + $0xb0] sm:$0xff]
        %v1046 = vld [vmem:[#allocation2 + $0xb8] sm:$0xff]
        %v1047 = vld [vmem:[#allocation2 + $0xc0] sm:$0xff]
        %v1048 = vld [vmem:[#allocation2 + $0xc8] sm:$0xff]
        %v1049 = vld [vmem:[#allocation2 + $0xd0] sm:$0xff]
        %v1050 = vld [vmem:[#allocation2 + $0xd8] sm:$0xff]
        %v1051 = vld [vmem:[#allocation2 + $0xe0] sm:$0xff]
        %v1052 = vld [vmem:[#allocation2 + $0xe8] sm:$0xff]
        %v1053 = vld [vmem:[#allocation2 + $0xf0] sm:$0xff]
        %v1054 = vld [vmem:[#allocation2 + $0xf8] sm:$0xff]
        %v1055 = vld [vmem:[#allocation2 + $0x100] sm:$0xff]
        %v1056 = vld [vmem:[#allocation2 + $0x108] sm:$0xff]
        %v1057 = vld [vmem:[#allocation2 + $0x110] sm:$0xff]
        %v1058 = vld [vmem:[#allocation2 + $0x118] sm:$0xff]
        %v1059 = vld [vmem:[#allocation2 + $0x120] sm:$0xff]
        %v1060 = vld [vmem:[#allocation2 + $0x128] sm:$0xff]
        %v1061 = vld [vmem:[#allocation2 + $0x130] sm:$0xff]
        %v1062 = vld [vmem:[#allocation2 + $0x138] sm:$0xff]
        %v1063 = vld [vmem:[#allocation2 + $0x140] sm:$0xff]
        %v1064 = vld [vmem:[#allocation2 + $0x148] sm:$0xff]
        %v1065 = vld [vmem:[#allocation2 + $0x150] sm:$0xff]
        %v1066 = vld [vmem:[#allocation2 + $0x158] sm:$0xff]
        %v1067 = vld [vmem:[#allocation2 + $0x160] sm:$0xff]
        %v1068 = vld [vmem:[#allocation2 + $0x168] sm:$0xff]
        %v1069 = vld [vmem:[#allocation2 + $0x170] sm:$0xff]
        %v1070 = vld [vmem:[#allocation2 + $0x178] sm:$0xff]
        %v1071 = vld [vmem:[#allocation2 + $0x180] sm:$0xff]
        %v1072 = vld [vmem:[#allocation2 + $0x188] sm:$0xff]
        %v1073 = vld [vmem:[#allocation2 + $0x190] sm:$0xff]
        %v1074 = vld [vmem:[#allocation2 + $0x198] sm:$0xff]
        %v1075 = vld [vmem:[#allocation2 + $0x1a0] sm:$0xff]
        %v1076 = vld [vmem:[#allocation2 + $0x1a8] sm:$0xff]
        %v1077 = vld [vmem:[#allocation2 + $0x1b0] sm:$0xff]
        %v1078 = vld [vmem:[#allocation2 + $0x1b8] sm:$0xff]
        %v1079 = vld [vmem:[#allocation2 + $0x1c0] sm:$0xff]
        %v1080 = vld [vmem:[#allocation2 + $0x1c8] sm:$0xff]
        %v1081 = vld [vmem:[#allocation2 + $0x1d0] sm:$0xff]
        %v1082 = vld [vmem:[#allocation2 + $0x1d8] sm:$0xff]
        %v1083 = vld [vmem:[#allocation2 + $0x1e0] sm:$0xff]
        %v1084 = vld [vmem:[#allocation2 + $0x1e8] sm:$0xff]
        %v1085 = vld [vmem:[#allocation2 + $0x1f0] sm:$0xff]
        %v1086 = vld [vmem:[#allocation2 + $0x1f8] sm:$0xff]
        %v1087 = vld [vmem:[#allocation2 + $0x200] sm:$0xff]
        %v1088 = vld [vmem:[#allocation2 + $0x208] sm:$0xff]
        %v1089 = vld [vmem:[#allocation2 + $0x210] sm:$0xff]
        %v1090 = vld [vmem:[#allocation2 + $0x218] sm:$0xff]
        %v1091 = vld [vmem:[#allocation2 + $0x220] sm:$0xff]
        %v1092 = vld [vmem:[#allocation2 + $0x228] sm:$0xff]
        %v1093 = vld [vmem:[#allocation2 + $0x230] sm:$0xff]
        %v1094 = vld [vmem:[#allocation2 + $0x238] sm:$0xff]
        %v1095 = vld [vmem:[#allocation2 + $0x240] sm:$0xff]
        %v1096 = vld [vmem:[#allocation2 + $0x248] sm:$0xff]
        %v1097 = vld [vmem:[#allocation2 + $0x250] sm:$0xff]
        %v1098 = vld [vmem:[%s2] sm:$0x3]
        %v1100 = vlaneseq
        %v1101 = vshrl.u32 %v1100, 7
        %v1102 = vsub.s32 0, %v1101
        %v1103 = vrot.slane %v1098, %v1102
        %v1104 = vlaneseq
        %v1105 = vshrl.u32 %v1104, 7
        %v1106 = vsub.s32 1, %v1105
        %v1107 = vrot.slane %v1098, %v1106
        %v1185 = vunpack.c.l.b16 %v1023
        %v1186 = vunpack.c.h.b16 %v1023
        %v1187 = vunpack.c.l.b16 %v1024
        %v1188 = vunpack.c.h.b16 %v1024
        %v1189 = vunpack.c.l.b16 %v1025
        %v1190 = vunpack.c.h.b16 %v1025
        %v1191 = vunpack.c.l.b16 %v1026
        %v1192 = vunpack.c.h.b16 %v1026
        %v1193 = vunpack.c.l.b16 %v1027
        %v1194 = vunpack.c.h.b16 %v1027
        %v1195 = vunpack.c.l.b16 %v1028
        %v1196 = vunpack.c.h.b16 %v1028
        %v1197 = vunpack.c.l.b16 %v1029
        %v1198 = vunpack.c.h.b16 %v1029
        %v1199 = vunpack.c.l.b16 %v1030
        %v1200 = vunpack.c.h.b16 %v1030
        %v1201 = vunpack.c.l.b16 %v1031
        %v1202 = vunpack.c.h.b16 %v1031
        %v1203 = vunpack.c.l.b16 %v1032
        %v1204 = vunpack.c.h.b16 %v1032
        %v1205 = vunpack.c.l.b16 %v1033
        %v1206 = vunpack.c.h.b16 %v1033
        %v1207 = vunpack.c.l.b16 %v1034
        %v1208 = vunpack.c.h.b16 %v1034
        %v1209 = vunpack.c.l.b16 %v1035
        %v1210 = vunpack.c.h.b16 %v1035
        %v1211 = vunpack.c.l.b16 %v1036
        %v1212 = vunpack.c.h.b16 %v1036
        %v1213 = vunpack.c.l.b16 %v1037
        %v1214 = vunpack.c.h.b16 %v1037
        %v1215 = vunpack.c.l.b16 %v1038
        %v1216 = vunpack.c.h.b16 %v1038
        %v1217 = vunpack.c.l.b16 %v1039
        %v1218 = vunpack.c.h.b16 %v1039
        %v1219 = vunpack.c.l.b16 %v1040
        %v1220 = vunpack.c.h.b16 %v1040
        %v1221 = vunpack.c.l.b16 %v1041
        %v1222 = vunpack.c.h.b16 %v1041
        %v1223 = vunpack.c.l.b16 %v1042
        %v1224 = vunpack.c.h.b16 %v1042
        %v1225 = vunpack.c.l.b16 %v1043
        %v1226 = vunpack.c.h.b16 %v1043
        %v1227 = vunpack.c.l.b16 %v1044
        %v1228 = vunpack.c.h.b16 %v1044
        %v1229 = vunpack.c.l.b16 %v1045
        %v1230 = vunpack.c.h.b16 %v1045
        %v1231 = vunpack.c.l.b16 %v1046
        %v1232 = vunpack.c.h.b16 %v1046
        %v1233 = vunpack.c.l.b16 %v1047
        %v1234 = vunpack.c.h.b16 %v1047
        %v1235 = vunpack.c.l.b16 %v1048
        %v1236 = vunpack.c.h.b16 %v1048
        %v1237 = vunpack.c.l.b16 %v1049
        %v1238 = vunpack.c.h.b16 %v1049
        %v1239 = vunpack.c.l.b16 %v1050
        %v1240 = vunpack.c.h.b16 %v1050
        %v1241 = vunpack.c.l.b16 %v1051
        %v1242 = vunpack.c.h.b16 %v1051
        %v1243 = vunpack.c.l.b16 %v1052
        %v1244 = vunpack.c.h.b16 %v1052
        %v1245 = vunpack.c.l.b16 %v1053
        %v1246 = vunpack.c.h.b16 %v1053
        %v1247 = vunpack.c.l.b16 %v1054
        %v1248 = vunpack.c.h.b16 %v1054
        %v1249 = vunpack.c.l.b16 %v1055
        %v1250 = vunpack.c.h.b16 %v1055
        %v1251 = vunpack.c.l.b16 %v1056
        %v1252 = vunpack.c.h.b16 %v1056
        %v1253 = vunpack.c.l.b16 %v1057
        %v1254 = vunpack.c.h.b16 %v1057
        %v1255 = vunpack.c.l.b16 %v1058
        %v1256 = vunpack.c.h.b16 %v1058
        %v1257 = vunpack.c.l.b16 %v1059
        %v1258 = vunpack.c.h.b16 %v1059
        %v1259 = vunpack.c.l.b16 %v1060
        %v1260 = vunpack.c.h.b16 %v1060
        %v1261 = vunpack.c.l.b16 %v1061
        %v1262 = vunpack.c.h.b16 %v1061
        %v1263 = vunpack.c.l.b16 %v1062
        %v1264 = vunpack.c.h.b16 %v1062
        %v1265 = vunpack.c.l.b16 %v1063
        %v1266 = vunpack.c.h.b16 %v1063
        %v1267 = vunpack.c.l.b16 %v1064
        %v1268 = vunpack.c.h.b16 %v1064
        %v1269 = vunpack.c.l.b16 %v1065
        %v1270 = vunpack.c.h.b16 %v1065
        %v1271 = vunpack.c.l.b16 %v1066
        %v1272 = vunpack.c.h.b16 %v1066
        %v1273 = vunpack.c.l.b16 %v1067
        %v1274 = vunpack.c.h.b16 %v1067
        %v1275 = vunpack.c.l.b16 %v1068
        %v1276 = vunpack.c.h.b16 %v1068
        %v1277 = vunpack.c.l.b16 %v1069
        %v1278 = vunpack.c.h.b16 %v1069
        %v1279 = vunpack.c.l.b16 %v1070
        %v1280 = vunpack.c.h.b16 %v1070
        %v1281 = vunpack.c.l.b16 %v1071
        %v1282 = vunpack.c.h.b16 %v1071
        %v1283 = vunpack.c.l.b16 %v1072
        %v1284 = vunpack.c.h.b16 %v1072
        %v1285 = vunpack.c.l.b16 %v1073
        %v1286 = vunpack.c.h.b16 %v1073
        %v1287 = vunpack.c.l.b16 %v1074
        %v1288 = vunpack.c.h.b16 %v1074
        %v1289 = vunpack.c.l.b16 %v1075
        %v1290 = vunpack.c.h.b16 %v1075
        %v1291 = vunpack.c.l.b16 %v1076
        %v1292 = vunpack.c.h.b16 %v1076
        %v1293 = vunpack.c.l.b16 %v1077
        %v1294 = vunpack.c.h.b16 %v1077
        %v1295 = vunpack.c.l.b16 %v1078
        %v1296 = vunpack.c.h.b16 %v1078
        %v1297 = vunpack.c.l.b16 %v1079
        %v1298 = vunpack.c.h.b16 %v1079
        %v1299 = vunpack.c.l.b16 %v1080
        %v1300 = vunpack.c.h.b16 %v1080
        %v1301 = vunpack.c.l.b16 %v1081
        %v1302 = vunpack.c.h.b16 %v1081
        %v1303 = vunpack.c.l.b16 %v1082
        %v1304 = vunpack.c.h.b16 %v1082
        %v1305 = vunpack.c.l.b16 %v1083
        %v1306 = vunpack.c.h.b16 %v1083
        %v1307 = vunpack.c.l.b16 %v1084
        %v1308 = vunpack.c.h.b16 %v1084
        %v1309 = vunpack.c.l.b16 %v1085
        %v1310 = vunpack.c.h.b16 %v1085
        %v1311 = vunpack.c.l.b16 %v1086
        %v1312 = vunpack.c.h.b16 %v1086
        %v1313 = vunpack.c.l.b16 %v1087
        %v1314 = vunpack.c.h.b16 %v1087
        %v1315 = vunpack.c.l.b16 %v1088
        %v1316 = vunpack.c.h.b16 %v1088
        %v1317 = vunpack.c.l.b16 %v1089
        %v1318 = vunpack.c.h.b16 %v1089
        %v1319 = vunpack.c.l.b16 %v1090
        %v1320 = vunpack.c.h.b16 %v1090
        %v1321 = vunpack.c.l.b16 %v1091
        %v1322 = vunpack.c.h.b16 %v1091
        %v1323 = vunpack.c.l.b16 %v1092
        %v1324 = vunpack.c.h.b16 %v1092
        %v1325 = vunpack.c.l.b16 %v1093
        %v1326 = vunpack.c.h.b16 %v1093
        %v1327 = vunpack.c.l.b16 %v1094
        %v1328 = vunpack.c.h.b16 %v1094
        %v1329 = vunpack.c.l.b16 %v1095
        %v1330 = vunpack.c.h.b16 %v1095
        %v1331 = vunpack.c.l.b16 %v1096
        %v1332 = vunpack.c.h.b16 %v1096
        %v1333 = vunpack.c.l.b16 %v1097
        %v1334 = vunpack.c.h.b16 %v1097
        %v1335 = vpack.c.b16 %v1187, %v1185
        %v1336 = vpack.c.b16 %v1188, %v1186
        %v1337 = vpack.c.b16 %v1191, %v1189
        %v1338 = vpack.c.b16 %v1192, %v1190
        %v1339 = vpack.c.b16 %v1195, %v1193
        %v1340 = vpack.c.b16 %v1196, %v1194
        %v1341 = vpack.c.b16 %v1199, %v1197
        %v1342 = vpack.c.b16 %v1200, %v1198
        %v1343 = vpack.c.b16 %v1203, %v1201
        %v1344 = vpack.c.b16 %v1204, %v1202
        %v1345 = vpack.c.b16 %v1207, %v1205
        %v1346 = vpack.c.b16 %v1208, %v1206
        %v1347 = vpack.c.b16 %v1211, %v1209
        %v1348 = vpack.c.b16 %v1212, %v1210
        %v1349 = vpack.c.b16 %v1215, %v1213
        %v1350 = vpack.c.b16 %v1216, %v1214
        %v1351 = vpack.c.b16 %v1219, %v1217
        %v1352 = vpack.c.b16 %v1220, %v1218
        %v1353 = vpack.c.b16 %v1223, %v1221
        %v1354 = vpack.c.b16 %v1224, %v1222
        %v1355 = vpack.c.b16 %v1227, %v1225
        %v1356 = vpack.c.b16 %v1228, %v1226
        %v1357 = vpack.c.b16 %v1231, %v1229
        %v1358 = vpack.c.b16 %v1232, %v1230
        %v1359 = vpack.c.b16 %v1235, %v1233
        %v1360 = vpack.c.b16 %v1236, %v1234
        %v1361 = vpack.c.b16 %v1239, %v1237
        %v1362 = vpack.c.b16 %v1240, %v1238
        %v1363 = vpack.c.b16 %v1243, %v1241
        %v1364 = vpack.c.b16 %v1244, %v1242
        %v1365 = vpack.c.b16 %v1247, %v1245
        %v1366 = vpack.c.b16 %v1248, %v1246
        %v1367 = vpack.c.b16 %v1251, %v1249
        %v1368 = vpack.c.b16 %v1252, %v1250
        %v1369 = vpack.c.b16 %v1255, %v1253
        %v1370 = vpack.c.b16 %v1256, %v1254
        %v1371 = vpack.c.b16 %v1259, %v1257
        %v1372 = vpack.c.b16 %v1260, %v1258
        %v1373 = vpack.c.b16 %v1263, %v1261
        %v1374 = vpack.c.b16 %v1264, %v1262
        %v1375 = vpack.c.b16 %v1267, %v1265
        %v1376 = vpack.c.b16 %v1268, %v1266
        %v1377 = vpack.c.b16 %v1271, %v1269
        %v1378 = vpack.c.b16 %v1272, %v1270
        %v1379 = vpack.c.b16 %v1275, %v1273
        %v1380 = vpack.c.b16 %v1276, %v1274
        %v1381 = vpack.c.b16 %v1279, %v1277
        %v1382 = vpack.c.b16 %v1280, %v1278
        %v1383 = vpack.c.b16 %v1283, %v1281
        %v1384 = vpack.c.b16 %v1284, %v1282
        %v1385 = vpack.c.b16 %v1287, %v1285
        %v1386 = vpack.c.b16 %v1288, %v1286
        %v1387 = vpack.c.b16 %v1291, %v1289
        %v1388 = vpack.c.b16 %v1292, %v1290
        %v1389 = vpack.c.b16 %v1295, %v1293
        %v1390 = vpack.c.b16 %v1296, %v1294
        %v1391 = vpack.c.b16 %v1299, %v1297
        %v1392 = vpack.c.b16 %v1300, %v1298
        %v1393 = vpack.c.b16 %v1303, %v1301
        %v1394 = vpack.c.b16 %v1304, %v1302
        %v1395 = vpack.c.b16 %v1307, %v1305
        %v1396 = vpack.c.b16 %v1308, %v1306
        %v1397 = vpack.c.b16 %v1311, %v1309
        %v1398 = vpack.c.b16 %v1312, %v1310
        %v1399 = vpack.c.b16 %v1315, %v1313
        %v1400 = vpack.c.b16 %v1316, %v1314
        %v1401 = vpack.c.b16 %v1319, %v1317
        %v1402 = vpack.c.b16 %v1320, %v1318
        %v1403 = vpack.c.b16 %v1323, %v1321
        %v1404 = vpack.c.b16 %v1324, %v1322
        %v1405 = vpack.c.b16 %v1327, %v1325
        %v1406 = vpack.c.b16 %v1328, %v1326
        %v1407 = vpack.c.b16 %v1331, %v1329
        %v1408 = vpack.c.b16 %v1332, %v1330
        %v1409 = vpack.c.b16 %v1333, %v1333
        %v1410 = vpack.c.b16 %v1334, %v1334
        %v1486 = vsel %vm817, %v1017, 0
        %v1489 = vsel %vm817, %v1022, 0
        %vm1491 = vcmask 1043456
        %v1493 = vsel %vm1491, %v1409, 0
        %v1496 = vsel %vm1491, %v1410, 0
        %1498 = vmatprep.subr.bf16.mxu0 %v1350
        %1499 = vmatpush1.bf16.msra.mxu0 %v1349
        %1500 = vmatprep.subr.bf16.mxu0 %v1348
        %1501 = vmatpush1.bf16.msra.mxu0 %v1347
        %1502 = vmatprep.subr.bf16.mxu0 %v1346
        %1503 = vmatpush1.bf16.msra.mxu0 %v1345
        %1504 = vmatprep.subr.bf16.mxu0 %v1344
        %1505 = vmatpush1.bf16.msra.mxu0 %v1343
        %1506 = vmatprep.subr.bf16.mxu0 %v1342
        %1507 = vmatpush1.bf16.msra.mxu0 %v1341
        %1508 = vmatprep.subr.bf16.mxu0 %v1340
        %1509 = vmatpush1.bf16.msra.mxu0 %v1339
        %1510 = vmatprep.subr.bf16.mxu0 %v1338
        %1511 = vmatpush1.bf16.msra.mxu0 %v1337
        %1512 = vmatprep.subr.bf16.mxu0 %v1336
        %1513 = vmatpush1.bf16.msra.mxu0 %v1335
        %1514 = vmatprep.subr.bf16.mxu0 %v1366
        %1515 = vmatpush2.bf16.msra.mxu0 %v1365
        %1516 = vmatprep.subr.bf16.mxu0 %v1364
        %1517 = vmatpush2.bf16.msra.mxu0 %v1363
        %1518 = vmatprep.subr.bf16.mxu0 %v1362
        %1519 = vmatpush2.bf16.msra.mxu0 %v1361
        %1520 = vmatprep.subr.bf16.mxu0 %v1360
        %1521 = vmatpush2.bf16.msra.mxu0 %v1359
        %1522 = vmatprep.subr.bf16.mxu0 %v1358
        %1523 = vmatpush2.bf16.msra.mxu0 %v1357
        %1524 = vmatprep.subr.bf16.mxu0 %v1356
        %1525 = vmatpush2.bf16.msra.mxu0 %v1355
        %1526 = vmatprep.subr.bf16.mxu0 %v1354
        %1527 = vmatpush2.bf16.msra.mxu0 %v1353
        %1528 = vmatprep.subr.bf16.mxu0 %v1352
        %1529 = vmatpush2.bf16.msra.mxu0 %v1351
        %1530 = vmatprep.mubr.bf16.mxu0 %v1014
        %1531 = vmatmul.mubr.bf16.gmra.mxu0 %v1013
        %v1532 = vpop.f32.mrf.mxu0
        %v1533 = vadd.f32 %v1103, %v1532
        %v1534 = vpop.f32.mrf.mxu0
        %v1535 = vadd.f32 %v1107, %v1534
        %v1536 = vpop.f32.mrf.mxu0
        %v1537 = vadd.f32 %v1103, %v1536
        %v1538 = vpop.f32.mrf.mxu0
        %v1539 = vadd.f32 %v1107, %v1538
        %1540 = vmatprep.mubr.bf16.mxu0 %v1019
        %1541 = vmatmul.mubr.bf16.gmra.mxu0 %v1018
        %v1542 = vpop.f32.mrf.mxu0
        %v1543 = vadd.f32 %v1103, %v1542
        %v1544 = vpop.f32.mrf.mxu0
        %v1545 = vadd.f32 %v1107, %v1544
        %v1546 = vpop.f32.mrf.mxu0
        %v1547 = vpop.f32.mrf.mxu0
        %1548 = vdwg.mxu0
        %1549 = vmatprep.subr.bf16.mxu0 %v1382
        %1550 = vmatpush1.bf16.msra.mxu0 %v1381
        %1551 = vmatprep.subr.bf16.mxu0 %v1380
        %1552 = vmatpush1.bf16.msra.mxu0 %v1379
        %1553 = vmatprep.subr.bf16.mxu0 %v1378
        %1554 = vmatpush1.bf16.msra.mxu0 %v1377
        %1555 = vmatprep.subr.bf16.mxu0 %v1376
        %1556 = vmatpush1.bf16.msra.mxu0 %v1375
        %1557 = vmatprep.subr.bf16.mxu0 %v1374
        %1558 = vmatpush1.bf16.msra.mxu0 %v1373
        %1559 = vmatprep.subr.bf16.mxu0 %v1372
        %1560 = vmatpush1.bf16.msra.mxu0 %v1371
        %1561 = vmatprep.subr.bf16.mxu0 %v1370
        %1562 = vmatpush1.bf16.msra.mxu0 %v1369
        %1563 = vmatprep.subr.bf16.mxu0 %v1368
        %1564 = vmatpush1.bf16.msra.mxu0 %v1367
        %1565 = vmatprep.subr.bf16.mxu0 %v1398
        %1566 = vmatpush2.bf16.msra.mxu0 %v1397
        %1567 = vmatprep.subr.bf16.mxu0 %v1396
        %1568 = vmatpush2.bf16.msra.mxu0 %v1395
        %1569 = vmatprep.subr.bf16.mxu0 %v1394
        %1570 = vmatpush2.bf16.msra.mxu0 %v1393
        %1571 = vmatprep.subr.bf16.mxu0 %v1392
        %1572 = vmatpush2.bf16.msra.mxu0 %v1391
        %1573 = vmatprep.subr.bf16.mxu0 %v1390
        %1574 = vmatpush2.bf16.msra.mxu0 %v1389
        %1575 = vmatprep.subr.bf16.mxu0 %v1388
        %1576 = vmatpush2.bf16.msra.mxu0 %v1387
        %1577 = vmatprep.subr.bf16.mxu0 %v1386
        %1578 = vmatpush2.bf16.msra.mxu0 %v1385
        %1579 = vmatprep.subr.bf16.mxu0 %v1384
        %1580 = vmatpush2.bf16.msra.mxu0 %v1383
        %1581 = vmatprep.mubr.bf16.mxu0 %v1016
        %1582 = vmatmul.mubr.bf16.gmra.mxu0 %v1015
        %v1583 = vpop.f32.mrf.mxu0
        %v1584 = vadd.f32 %v1533, %v1583
        %v1585 = vpop.f32.mrf.mxu0
        %v1586 = vadd.f32 %v1535, %v1585
        %v1587 = vpop.f32.mrf.mxu0
        %v1588 = vadd.f32 %v1537, %v1587
        %v1589 = vpop.f32.mrf.mxu0
        %v1590 = vadd.f32 %v1539, %v1589
        %1591 = vmatprep.mubr.bf16.mxu0 %v1021
        %1592 = vmatmul.mubr.bf16.gmra.mxu0 %v1020
        %v1593 = vpop.f32.mrf.mxu0
        %v1594 = vadd.f32 %v1543, %v1593
        %v1595 = vpop.f32.mrf.mxu0
        %v1596 = vadd.f32 %v1545, %v1595
        %v1597 = vpop.f32.mrf.mxu0
        %v1598 = vpop.f32.mrf.mxu0
        %1599 = vdwg.mxu0
        %1600 = vmatprep.subr.bf16.mxu0 0
        %1601 = vmatpush1.bf16.msra.mxu0 0
        %1602 = vmatprep.subr.bf16.mxu0 0
        %1603 = vmatpush1.bf16.msra.mxu0 0
        %1604 = vmatprep.subr.bf16.mxu0 %v1496
        %1605 = vmatpush1.bf16.msra.mxu0 %v1493
        %1606 = vmatprep.subr.bf16.mxu0 %v1408
        %1607 = vmatpush1.bf16.msra.mxu0 %v1407
        %1608 = vmatprep.subr.bf16.mxu0 %v1406
        %1609 = vmatpush1.bf16.msra.mxu0 %v1405
        %1610 = vmatprep.subr.bf16.mxu0 %v1404
        %1611 = vmatpush1.bf16.msra.mxu0 %v1403
        %1612 = vmatprep.subr.bf16.mxu0 %v1402
        %1613 = vmatpush1.bf16.msra.mxu0 %v1401
        %1614 = vmatprep.subr.bf16.mxu0 %v1400
        %1615 = vmatpush1.bf16.msra.mxu0 %v1399
        %1616 = vmatprep.subr.bf16.mxu0 0
        %1617 = vmatpush2.bf16.msra.mxu0 0
        %1618 = vmatprep.subr.bf16.mxu0 0
        %1619 = vmatpush2.bf16.msra.mxu0 0
        %1620 = vmatprep.subr.bf16.mxu0 0
        %1621 = vmatpush2.bf16.msra.mxu0 0
        %1622 = vmatprep.subr.bf16.mxu0 0
        %1623 = vmatpush2.bf16.msra.mxu0 0
        %1624 = vmatprep.subr.bf16.mxu0 0
        %1625 = vmatpush2.bf16.msra.mxu0 0
        %1626 = vmatprep.subr.bf16.mxu0 0
        %1627 = vmatpush2.bf16.msra.mxu0 0
        %1628 = vmatprep.subr.bf16.mxu0 0
        %1629 = vmatpush2.bf16.msra.mxu0 0
        %1630 = vmatprep.subr.bf16.mxu0 0
        %1631 = vmatpush2.bf16.msra.mxu0 0
        %1632 = vmatprep.mubr.bf16.mxu0 0
        %1633 = vmatmul.mubr.bf16.gmra.mxu0 %v1486
        %v1634 = vpop.f32.mrf.mxu0
        %v1635 = vadd.f32 %v1584, %v1634
        %v1636 = vpop.f32.mrf.mxu0
        %v1637 = vadd.f32 %v1586, %v1636
        %v1638 = vpop.f32.mrf.mxu0
        %v1639 = vadd.f32 %v1588, %v1638
        %v1640 = vpop.f32.mrf.mxu0
        %v1641 = vadd.f32 %v1590, %v1640
        %1642 = vmatprep.mubr.bf16.mxu0 0
        %1643 = vmatmul.mubr.bf16.gmra.mxu0 %v1489
        %v1644 = vpop.f32.mrf.mxu0
        %v1645 = vadd.f32 %v1594, %v1644
        %v1646 = vpop.f32.mrf.mxu0
        %v1647 = vadd.f32 %v1596, %v1646
        %v1648 = vpop.f32.mrf.mxu0
        %v1649 = vpop.f32.mrf.mxu0
        %1650 = vdwg.mxu0
        %v1651 = vmax.f32 %v1635, 0.0
        %v1652 = vmax.f32 %v1637, 0.0
        %v1653 = vmax.f32 %v1639, 0.0
        %v1654 = vmax.f32 %v1641, 0.0
        %v1655 = vmax.f32 %v1645, 0.0
        %v1656 = vmax.f32 %v1647, 0.0
        %1663 = vrot.lane.b32.xlu0 %v1651, 120
        %v1664 = vpop.permute.xlu0 %1663
        %1665 = vrot.lane.b32.xlu0 %v1652, 120
        %v1666 = vpop.permute.xlu0 %1665
        %1667 = vrot.lane.b32.xlu0 %v1653, 120
        %v1668 = vpop.permute.xlu0 %1667
        %1669 = vrot.lane.b32.xlu0 %v1654, 120
        %v1670 = vpop.permute.xlu0 %1669
        %1671 = vrot.lane.b32.xlu0 %v1655, 120
        %v1672 = vpop.permute.xlu0 %1671
        %1673 = vrot.lane.b32.xlu0 %v1656, 120
        %v1674 = vpop.permute.xlu0 %1673
        %v1675 = vsel %vm801, %v1664, %v1666
        %v1676 = vsel %vm801, %v1668, %v1670
        %v1677 = vsel %vm801, %v1672, %v1674
        %v1684 = vmax.f32 %v1651, %v1675
        %v1685 = vmax.f32 %v1652, %v1666
        %v1686 = vmax.f32 %v1653, %v1676
        %v1687 = vmax.f32 %v1654, %v1670
        %v1688 = vmax.f32 %v1655, %v1677
        %v1689 = vmax.f32 %v1656, %v1674
        %v1690 = vld [vmem:[%s3] sm:$0xff]
        %v1691 = vld [vmem:[%s3 + $0x8] sm:$0xff]
        %v1692 = vld [vmem:[%s3 + $0x10] sm:$0xff]
        %v1693 = vld [vmem:[%s3 + $0x18] sm:$0xff]
        %v1694 = vld [vmem:[%s3 + $0x20] sm:$0xff]
        %v1695 = vld [vmem:[%s3 + $0x28] sm:$0xff]
        %v1696 = vld [vmem:[%s3 + $0x30] sm:$0xff]
        %v1697 = vld [vmem:[%s3 + $0x38] sm:$0xff]
        %v1698 = vld [vmem:[%s3 + $0x40] sm:$0xff]
        %v1699 = vld [vmem:[%s3 + $0x48] sm:$0xff]
        %v1700 = vld [vmem:[%s3 + $0x50] sm:$0xff]
        %v1701 = vld [vmem:[%s3 + $0x58] sm:$0xff]
        %v1702 = vld [vmem:[%s3 + $0x60] sm:$0xff]
        %v1703 = vld [vmem:[%s3 + $0x68] sm:$0xff]
        %v1704 = vld [vmem:[%s3 + $0x70] sm:$0xff]
        %v1705 = vld [vmem:[%s3 + $0x78] sm:$0xff]
        %v1706 = vld [vmem:[%s3 + $0x80] sm:$0xff]
        %v1707 = vld [vmem:[%s3 + $0x88] sm:$0xff]
        %v1708 = vld [vmem:[%s3 + $0x90] sm:$0xff]
        %v1709 = vld [vmem:[%s3 + $0x98] sm:$0xff]
        %v1710 = vld [vmem:[%s3 + $0xa0] sm:$0xff]
        %v1711 = vld [vmem:[%s3 + $0xa8] sm:$0xff]
        %v1712 = vld [vmem:[%s3 + $0xb0] sm:$0xff]
        %v1714 = vsel %vm833, %v1685, 0
        %v1717 = vsel %vm833, %v1687, 0
        %v1720 = vsel %vm833, %v1689, 0
        %1722 = vmatprep.subr.mxu0 0.0
        %1723 = vmatpush1.msra.mxu0 %v1705
        %1724 = vmatprep.subr.mxu0 0.0
        %1725 = vmatpush1.msra.mxu0 %v1704
        %1726 = vmatprep.subr.mxu0 0.0
        %1727 = vmatpush1.msra.mxu0 %v1703
        %1728 = vmatprep.subr.mxu0 0.0
        %1729 = vmatpush1.msra.mxu0 %v1702
        %1730 = vmatprep.subr.mxu0 0.0
        %1731 = vmatpush1.msra.mxu0 %v1701
        %1732 = vmatprep.subr.mxu0 0.0
        %1733 = vmatpush1.msra.mxu0 %v1700
        %1734 = vmatprep.subr.mxu0 0.0
        %1735 = vmatpush1.msra.mxu0 %v1699
        %1736 = vmatprep.subr.mxu0 0.0
        %1737 = vmatpush1.msra.mxu0 %v1698
        %1738 = vmatprep.subr.mxu0 0.0
        %1739 = vmatpush1.msra.mxu0 %v1697
        %1740 = vmatprep.subr.mxu0 0.0
        %1741 = vmatpush1.msra.mxu0 %v1696
        %1742 = vmatprep.subr.mxu0 0.0
        %1743 = vmatpush1.msra.mxu0 %v1695
        %1744 = vmatprep.subr.mxu0 0.0
        %1745 = vmatpush1.msra.mxu0 %v1694
        %1746 = vmatprep.subr.mxu0 0.0
        %1747 = vmatpush1.msra.mxu0 %v1693
        %1748 = vmatprep.subr.mxu0 0.0
        %1749 = vmatpush1.msra.mxu0 %v1692
        %1750 = vmatprep.subr.mxu0 0.0
        %1751 = vmatpush1.msra.mxu0 %v1691
        %1752 = vmatprep.subr.mxu0 0.0
        %1753 = vmatpush1.msra.mxu0 %v1690
        %1754 = vmatprep.subr.mxu0 0.0
        %1755 = vmatpush2.msra.mxu0 0.0
        %1756 = vmatprep.subr.mxu0 0.0
        %1757 = vmatpush2.msra.mxu0 0.0
        %1758 = vmatprep.subr.mxu0 0.0
        %1759 = vmatpush2.msra.mxu0 0.0
        %1760 = vmatprep.subr.mxu0 0.0
        %1761 = vmatpush2.msra.mxu0 0.0
        %1762 = vmatprep.subr.mxu0 0.0
        %1763 = vmatpush2.msra.mxu0 0.0
        %1764 = vmatprep.subr.mxu0 0.0
        %1765 = vmatpush2.msra.mxu0 0.0
        %1766 = vmatprep.subr.mxu0 0.0
        %1767 = vmatpush2.msra.mxu0 0.0
        %1768 = vmatprep.subr.mxu0 0.0
        %1769 = vmatpush2.msra.mxu0 0.0
        %1770 = vmatprep.subr.mxu0 0.0
        %1771 = vmatpush2.msra.mxu0 0.0
        %1772 = vmatprep.subr.mxu0 0.0
        %1773 = vmatpush2.msra.mxu0 %v1712
        %1774 = vmatprep.subr.mxu0 0.0
        %1775 = vmatpush2.msra.mxu0 %v1711
        %1776 = vmatprep.subr.mxu0 0.0
        %1777 = vmatpush2.msra.mxu0 %v1710
        %1778 = vmatprep.subr.mxu0 0.0
        %1779 = vmatpush2.msra.mxu0 %v1709
        %1780 = vmatprep.subr.mxu0 0.0
        %1781 = vmatpush2.msra.mxu0 %v1708
        %1782 = vmatprep.subr.mxu0 0.0
        %1783 = vmatpush2.msra.mxu0 %v1707
        %1784 = vmatprep.subr.mxu0 0.0
        %1785 = vmatpush2.msra.mxu0 %v1706
        %1786 = vmatprep.mubr.f32.mxu0 %v1714
        %1787 = vmatmul.mubr.f32.gmra.mxu0 %v1684
        %v1788 = vpop.f32.mrf.mxu0
        %v1789 = vadd.f32 0.0, %v1788
        %v1790 = vpop.f32.mrf.mxu0
        %1791 = vmatprep.mubr.f32.mxu0 %v1717
        %1792 = vmatmul.mubr.f32.gmra.mxu0 %v1686
        %v1793 = vpop.f32.mrf.mxu0
        %v1794 = vadd.f32 0.0, %v1793
        %v1795 = vpop.f32.mrf.mxu0
        %1796 = vmatprep.mubr.f32.mxu0 %v1720
        %1797 = vmatmul.mubr.f32.gmra.mxu0 %v1688
        %v1798 = vpop.f32.mrf.mxu0
        %v1799 = vadd.f32 0.0, %v1798
        %v1800 = vpop.f32.mrf.mxu0
        %1801 = vdwg.mxu0
        %v1805 = vrot.slane %v1789, 1
        %v1806 = vrot.slane %v1794, 1
        %v1807 = vsel %vm662, %v1805, %v1806
        %v1808 = vrot.slane %v1799, 1
        %v1809 = vsel %vm662, %v1806, %v1808
        %v1813 = vmax.f32 %v1789, %v1807
        %v1814 = vmax.f32 %v1794, %v1809
        %v1815 = vmax.f32 %v1799, %v1808
        %v1816 = vld [vmem:[#allocation5] sm:$0xff]
        %v1817 = vld [vmem:[#allocation5 + $0x8] sm:$0xf]
        %vm1818 = vcmask 187392
        %v1820 = vsel %vm1818, %v1816, 0
        %v1823 = vsel %vm1818, %v1817, 0
        %v1826 = vsel %vm662, %v1815, 0
        %1828 = vmatprep.subr.mxu0 0.0
        %1829 = vmatpush1.msra.mxu0 0.0
        %1830 = vmatprep.subr.mxu0 0.0
        %1831 = vmatpush1.msra.mxu0 0.0
        %1832 = vmatprep.subr.mxu0 0.0
        %1833 = vmatpush1.msra.mxu0 0.0
        %1834 = vmatprep.subr.mxu0 0.0
        %1835 = vmatpush1.msra.mxu0 0.0
        %1836 = vmatprep.subr.mxu0 0.0
        %1837 = vmatpush1.msra.mxu0 0.0
        %1838 = vmatprep.subr.mxu0 0.0
        %1839 = vmatpush1.msra.mxu0 0.0
        %1840 = vmatprep.subr.mxu0 0.0
        %1841 = vmatpush1.msra.mxu0 0.0
        %1842 = vmatprep.subr.mxu0 0.0
        %1843 = vmatpush1.msra.mxu0 0.0
        %1844 = vmatprep.subr.mxu0 0.0
        %1845 = vmatpush1.msra.mxu0 0.0
        %1846 = vmatprep.subr.mxu0 0.0
        %1847 = vmatpush1.msra.mxu0 0.0
        %1848 = vmatprep.subr.mxu0 0.0
        %1849 = vmatpush1.msra.mxu0 0.0
        %1850 = vmatprep.subr.mxu0 0.0
        %1851 = vmatpush1.msra.mxu0 0.0
        %1852 = vmatprep.subr.mxu0 0.0
        %1853 = vmatpush1.msra.mxu0 0.0
        %1854 = vmatprep.subr.mxu0 0.0
        %1855 = vmatpush1.msra.mxu0 %v1826
        %1856 = vmatprep.subr.mxu0 0.0
        %1857 = vmatpush1.msra.mxu0 %v1814
        %1858 = vmatprep.subr.mxu0 0.0
        %1859 = vmatpush1.msra.mxu0 %v1813
        %1860 = vmatprep.subr.mxu0 0.0
        %1861 = vmatpush2.msra.mxu0 0.0
        %1862 = vmatprep.subr.mxu0 0.0
        %1863 = vmatpush2.msra.mxu0 0.0
        %1864 = vmatprep.subr.mxu0 0.0
        %1865 = vmatpush2.msra.mxu0 0.0
        %1866 = vmatprep.subr.mxu0 0.0
        %1867 = vmatpush2.msra.mxu0 0.0
        %1868 = vmatprep.subr.mxu0 0.0
        %1869 = vmatpush2.msra.mxu0 0.0
        %1870 = vmatprep.subr.mxu0 0.0
        %1871 = vmatpush2.msra.mxu0 0.0
        %1872 = vmatprep.subr.mxu0 0.0
        %1873 = vmatpush2.msra.mxu0 0.0
        %1874 = vmatprep.subr.mxu0 0.0
        %1875 = vmatpush2.msra.mxu0 0.0
        %1876 = vmatprep.subr.mxu0 0.0
        %1877 = vmatpush2.msra.mxu0 0.0
        %1878 = vmatprep.subr.mxu0 0.0
        %1879 = vmatpush2.msra.mxu0 0.0
        %1880 = vmatprep.subr.mxu0 0.0
        %1881 = vmatpush2.msra.mxu0 0.0
        %1882 = vmatprep.subr.mxu0 0.0
        %1883 = vmatpush2.msra.mxu0 0.0
        %1884 = vmatprep.subr.mxu0 0.0
        %1885 = vmatpush2.msra.mxu0 0.0
        %1886 = vmatprep.subr.mxu0 0.0
        %1887 = vmatpush2.msra.mxu0 0.0
        %1888 = vmatprep.subr.mxu0 0.0
        %1889 = vmatpush2.msra.mxu0 0.0
        %1890 = vmatprep.subr.mxu0 0.0
        %1891 = vmatpush2.msra.mxu0 0.0
        %1892 = vmatprep.mubr.f32.mxu0 0.0
        %1893 = vmatmul.mubr.f32.gmra.mxu0 %v1820
        %v1894 = vpop.f32.mrf.mxu0
        %v1895 = vadd.f32 0.0, %v1894
        %v1896 = vpop.f32.mrf.mxu0
        %1897 = vmatprep.mubr.f32.mxu0 0.0
        %1898 = vmatmul.mubr.f32.gmra.mxu0 %v1823
        %v1899 = vpop.f32.mrf.mxu0
        %v1900 = vadd.f32 0.0, %v1899
        %v1901 = vpop.f32.mrf.mxu0
        %1902 = vdwg.mxu0
        %1904 = vrot.lane.b32.xlu0 %v1895, 56
        %v1905 = vpop.permute.xlu0 %1904
        %1907 = vrot.lane.b32.xlu0 %v1895, 112
        %v1908 = vpop.permute.xlu0 %1907
        %1910 = vrot.lane.b32.xlu0 %v1895, 40
        %v1911 = vpop.permute.xlu0 %1910
        %1913 = vrot.lane.b32.xlu0 %v1895, 96
        %v1914 = vpop.permute.xlu0 %1913
        %v1917 = vrot.slane %v1895, 1
        %v1918 = vrot.slane %v1900, 1
        %v1919 = vsel %vm662, %v1917, %v1918
        %1920 = vrot.lane.b32.xlu0 %v1919, 64
        %v1921 = vpop.permute.xlu0 %1920
        %1923 = vrot.lane.b32.xlu0 %v1919, 120
        %v1924 = vpop.permute.xlu0 %1923
        %1926 = vrot.lane.b32.xlu0 %v1919, 48
        %v1927 = vpop.permute.xlu0 %1926
        %1929 = vrot.lane.b32.xlu0 %v1919, 104
        %v1930 = vpop.permute.xlu0 %1929
        %1932 = vrot.lane.b32.xlu0 %v1919, 32
        %v1933 = vpop.permute.xlu0 %1932
        %v1935 = vrot.slane %v1895, 2
        %v1936 = vrot.slane %v1900, 2
        %v1937 = vsel %vm715, %v1935, %v1936
        %1939 = vrot.lane.b32.xlu0 %v1937, 56
        %v1940 = vpop.permute.xlu0 %1939
        %1942 = vrot.lane.b32.xlu0 %v1937, 112
        %v1943 = vpop.permute.xlu0 %1942
        %1945 = vrot.lane.b32.xlu0 %v1937, 40
        %v1946 = vpop.permute.xlu0 %1945
        %1948 = vrot.lane.b32.xlu0 %v1937, 96
        %v1949 = vpop.permute.xlu0 %1948
        %v1951 = vrot.slane %v1895, 3
        %v1952 = vrot.slane %v1900, 3
        %v1953 = vsel %vm768, %v1951, %v1952
        %1954 = vrot.lane.b32.xlu0 %v1953, 64
        %v1955 = vpop.permute.xlu0 %1954
        %v1957 = vsel %vm813, %v1895, %v1905
        %v1958 = vsel %vm813, %v1908, %v1911
        %v1959 = vsel %vm813, %v1914, %v1921
        %v1960 = vsel %vm813, %v1924, %v1927
        %v1961 = vsel %vm813, %v1930, %v1933
        %v1962 = vsel %vm813, %v1937, %v1940
        %v1963 = vsel %vm813, %v1943, %v1946
        %v1964 = vsel %vm813, %v1949, %v1955
        %1965 = vrot.lane.b32.xlu0 %v1895, 120
        %v1966 = vpop.permute.xlu0 %1965
        %1967 = vrot.lane.b32.xlu0 %v1900, 120
        %v1968 = vpop.permute.xlu0 %1967
        %1971 = vrot.lane.b32.xlu0 %v1895, 48
        %v1972 = vpop.permute.xlu0 %1971
        %1973 = vrot.lane.b32.xlu0 %v1900, 48
        %v1974 = vpop.permute.xlu0 %1973
        %1977 = vrot.lane.b32.xlu0 %v1895, 104
        %v1978 = vpop.permute.xlu0 %1977
        %1979 = vrot.lane.b32.xlu0 %v1900, 104
        %v1980 = vpop.permute.xlu0 %1979
        %1983 = vrot.lane.b32.xlu0 %v1895, 32
        %v1984 = vpop.permute.xlu0 %1983
        %1985 = vrot.lane.b32.xlu0 %v1900, 32
        %v1986 = vpop.permute.xlu0 %1985
        %1991 = vrot.lane.b32.xlu0 %v1919, 56
        %v1992 = vpop.permute.xlu0 %1991
        %1993 = vrot.lane.b32.xlu0 %v1918, 56
        %v1994 = vpop.permute.xlu0 %1993
        %1997 = vrot.lane.b32.xlu0 %v1919, 112
        %v1998 = vpop.permute.xlu0 %1997
        %1999 = vrot.lane.b32.xlu0 %v1918, 112
        %v2000 = vpop.permute.xlu0 %1999
        %2003 = vrot.lane.b32.xlu0 %v1919, 40
        %v2004 = vpop.permute.xlu0 %2003
        %2005 = vrot.lane.b32.xlu0 %v1918, 40
        %v2006 = vpop.permute.xlu0 %2005
        %2009 = vrot.lane.b32.xlu0 %v1919, 96
        %v2010 = vpop.permute.xlu0 %2009
        %2011 = vrot.lane.b32.xlu0 %v1918, 96
        %v2012 = vpop.permute.xlu0 %2011
        %v2013 = vsel %vm813, %v1966, %v1972
        %v2014 = vsel %vm813, %v1968, %v1974
        %v2015 = vsel %vm813, %v1978, %v1984
        %v2016 = vsel %vm813, %v1980, %v1986
        %v2017 = vsel %vm813, %v1919, %v1992
        %v2018 = vsel %vm813, %v1918, %v1994
        %v2019 = vsel %vm813, %v1998, %v2004
        %v2020 = vsel %vm813, %v2000, %v2006
        %v2029 = vrot.slane %v2013, 3
        %v2030 = vrot.slane %v2014, 3
        %v2031 = vsel %vm768, %v2029, %v2030
        %v2032 = vrot.slane %v2015, 3
        %v2033 = vrot.slane %v2016, 3
        %v2034 = vsel %vm768, %v2032, %v2033
        %v2035 = vrot.slane %v2017, 3
        %v2036 = vrot.slane %v2018, 3
        %v2037 = vsel %vm768, %v2035, %v2036
        %v2038 = vrot.slane %v2019, 3
        %v2039 = vrot.slane %v2020, 3
        %v2040 = vsel %vm768, %v2038, %v2039
        %v2041 = vrot.slane %v2010, 3
        %v2042 = vrot.slane %v2012, 3
        %v2043 = vsel %vm768, %v2041, %v2042
        %v2049 = vpack.c.bf16 %v1957, %v1957
        %v2050 = vpack.c.bf16 %v1958, %v1958
        %v2051 = vpack.c.bf16 %v1959, %v1959
        %v2052 = vpack.c.bf16 %v1960, %v1960
        %v2053 = vpack.c.bf16 %v1961, %v1961
        %v2054 = vpack.c.bf16 %v1962, %v1962
        %v2055 = vpack.c.bf16 %v1963, %v1963
        %v2056 = vpack.c.bf16 %v1964, %v1964
        %v2057 = vpack.c.bf16 %v2031, %v2031
        %v2058 = vpack.c.bf16 %v2034, %v2034
        %v2059 = vpack.c.bf16 %v2037, %v2037
        %v2060 = vpack.c.bf16 %v2040, %v2040
        %v2061 = vpack.c.bf16 %v2043, %v2043
        %v2062 = vld [vmem:[#allocation7] sm:$0xf]
        %v2063 = vld [vmem:[#allocation7 + $0x4] sm:$0xf]
        %v2064 = vld [vmem:[#allocation7 + $0x8] sm:$0xf]
        %v2065 = vld [vmem:[#allocation7 + $0xc] sm:$0xf]
        %v2066 = vld [vmem:[#allocation7 + $0x10] sm:$0xf]
        %v2067 = vld [vmem:[#allocation7 + $0x14] sm:$0xf]
        %v2068 = vld [vmem:[#allocation7 + $0x18] sm:$0xf]
        %v2069 = vld [vmem:[#allocation7 + $0x1c] sm:$0xf]
        %v2070 = vld [vmem:[#allocation7 + $0x20] sm:$0xf]
        %v2071 = vld [vmem:[#allocation7 + $0x24] sm:$0xf]
        %v2072 = vld [vmem:[#allocation7 + $0x28] sm:$0xf]
        %v2073 = vld [vmem:[#allocation7 + $0x2c] sm:$0xf]
        %v2074 = vld [vmem:[#allocation7 + $0x30] sm:$0xf]
        %v2075 = vld [vmem:[#allocation7 + $0x34] sm:$0xf]
        %v2076 = vld [vmem:[#allocation7 + $0x38] sm:$0xf]
        %v2077 = vld [vmem:[#allocation7 + $0x3c] sm:$0xf]
        %v2078 = vld [vmem:[#allocation7 + $0x40] sm:$0xf]
        %v2079 = vld [vmem:[#allocation7 + $0x44] sm:$0xf]
        %v2080 = vld [vmem:[#allocation7 + $0x48] sm:$0xf]
        %v2081 = vld [vmem:[#allocation7 + $0x4c] sm:$0xf]
        %v2082 = vld [vmem:[#allocation7 + $0x50] sm:$0xf]
        %v2083 = vld [vmem:[#allocation7 + $0x54] sm:$0xf]
        %v2084 = vld [vmem:[#allocation7 + $0x58] sm:$0xf]
        %v2085 = vld [vmem:[#allocation7 + $0x5c] sm:$0xf]
        %v2086 = vld [vmem:[#allocation7 + $0x60] sm:$0xf]
        %v2087 = vld [vmem:[#allocation7 + $0x64] sm:$0xf]
        %v2088 = vld [vmem:[#allocation7 + $0x68] sm:$0xf]
        %v2089 = vld [vmem:[#allocation7 + $0x6c] sm:$0xf]
        %v2090 = vld [vmem:[#allocation7 + $0x70] sm:$0xf]
        %v2091 = vld [vmem:[#allocation7 + $0x74] sm:$0xf]
        %v2092 = vld [vmem:[#allocation7 + $0x78] sm:$0xf]
        %v2093 = vld [vmem:[#allocation7 + $0x7c] sm:$0xf]
        %v2094 = vld [vmem:[#allocation7 + $0x80] sm:$0xf]
        %v2095 = vld [vmem:[#allocation7 + $0x84] sm:$0xf]
        %v2096 = vld [vmem:[#allocation7 + $0x88] sm:$0xf]
        %v2097 = vld [vmem:[#allocation7 + $0x8c] sm:$0xf]
        %v2098 = vld [vmem:[#allocation7 + $0x90] sm:$0xf]
        %v2099 = vld [vmem:[#allocation7 + $0x94] sm:$0xf]
        %v2100 = vld [vmem:[#allocation7 + $0x98] sm:$0xf]
        %v2101 = vld [vmem:[#allocation7 + $0x9c] sm:$0xf]
        %v2102 = vld [vmem:[#allocation7 + $0xa0] sm:$0xf]
        %v2103 = vld [vmem:[#allocation7 + $0xa4] sm:$0xf]
        %v2104 = vld [vmem:[#allocation7 + $0xa8] sm:$0xf]
        %v2105 = vld [vmem:[#allocation7 + $0xac] sm:$0xf]
        %v2106 = vld [vmem:[#allocation7 + $0xb0] sm:$0xf]
        %v2107 = vld [vmem:[#allocation7 + $0xb4] sm:$0xf]
        %v2108 = vld [vmem:[#allocation7 + $0xb8] sm:$0xf]
        %v2109 = vld [vmem:[#allocation7 + $0xbc] sm:$0xf]
        %v2110 = vld [vmem:[#allocation7 + $0xc0] sm:$0xf]
        %v2111 = vld [vmem:[#allocation7 + $0xc4] sm:$0xf]
        %v2112 = vld [vmem:[#allocation7 + $0xc8] sm:$0xf]
        %v2113 = vld [vmem:[#allocation7 + $0xcc] sm:$0xf]
        %v2114 = vld [vmem:[#allocation7 + $0xd0] sm:$0xf]
        %v2115 = vld [vmem:[#allocation7 + $0xd4] sm:$0xf]
        %v2116 = vld [vmem:[#allocation7 + $0xd8] sm:$0xf]
        %v2117 = vld [vmem:[#allocation7 + $0xdc] sm:$0xf]
        %v2118 = vld [vmem:[#allocation7 + $0xe0] sm:$0xf]
        %v2119 = vld [vmem:[#allocation7 + $0xe4] sm:$0xf]
        %v2120 = vld [vmem:[#allocation7 + $0xe8] sm:$0xf]
        %v2121 = vld [vmem:[#allocation7 + $0xec] sm:$0xf]
        %v2122 = vld [vmem:[#allocation7 + $0xf0] sm:$0xf]
        %v2123 = vld [vmem:[#allocation7 + $0xf4] sm:$0xf]
        %v2124 = vld [vmem:[#allocation7 + $0xf8] sm:$0xf]
        %v2125 = vld [vmem:[#allocation7 + $0xfc] sm:$0xf]
        %v2126 = vld [vmem:[#allocation7 + $0x100] sm:$0xf]
        %v2127 = vld [vmem:[#allocation7 + $0x104] sm:$0xf]
        %v2128 = vld [vmem:[#allocation7 + $0x108] sm:$0xf]
        %v2129 = vld [vmem:[#allocation7 + $0x10c] sm:$0xf]
        %v2130 = vld [vmem:[#allocation7 + $0x110] sm:$0xf]
        %v2131 = vld [vmem:[#allocation7 + $0x114] sm:$0xf]
        %v2132 = vld [vmem:[#allocation7 + $0x118] sm:$0xf]
        %v2133 = vld [vmem:[#allocation7 + $0x11c] sm:$0xf]
        %v2134 = vld [vmem:[#allocation7 + $0x120] sm:$0xf]
        %v2135 = vld [vmem:[#allocation7 + $0x124] sm:$0xf]
        %v2136 = vld [vmem:[#allocation7 + $0x128] sm:$0xf]
        %v2137 = vld [vmem:[#allocation7 + $0x12c] sm:$0xf]
        %v2138 = vld [vmem:[#allocation7 + $0x130] sm:$0xf]
        %v2139 = vld [vmem:[#allocation7 + $0x134] sm:$0xf]
        %v2140 = vld [vmem:[#allocation7 + $0x138] sm:$0xf]
        %v2141 = vld [vmem:[#allocation7 + $0x13c] sm:$0xf]
        %v2142 = vld [vmem:[#allocation7 + $0x140] sm:$0xf]
        %v2143 = vld [vmem:[#allocation7 + $0x144] sm:$0xf]
        %v2144 = vld [vmem:[#allocation7 + $0x148] sm:$0xf]
        %v2145 = vld [vmem:[#allocation7 + $0x14c] sm:$0xf]
        %v2146 = vld [vmem:[#allocation7 + $0x150] sm:$0xf]
        %v2147 = vld [vmem:[#allocation7 + $0x154] sm:$0xf]
        %v2148 = vld [vmem:[#allocation7 + $0x158] sm:$0xf]
        %v2149 = vld [vmem:[#allocation7 + $0x15c] sm:$0xf]
        %v2150 = vld [vmem:[#allocation7 + $0x160] sm:$0xf]
        %v2151 = vld [vmem:[#allocation7 + $0x164] sm:$0xf]
        %v2152 = vld [vmem:[#allocation7 + $0x168] sm:$0xf]
        %v2153 = vld [vmem:[#allocation7 + $0x16c] sm:$0xf]
        %v2154 = vld [vmem:[#allocation7 + $0x170] sm:$0xf]
        %v2155 = vld [vmem:[#allocation7 + $0x174] sm:$0xf]
        %v2156 = vld [vmem:[#allocation7 + $0x178] sm:$0xf]
        %v2157 = vld [vmem:[#allocation7 + $0x17c] sm:$0xf]
        %v2158 = vld [vmem:[#allocation7 + $0x180] sm:$0xf]
        %v2159 = vld [vmem:[#allocation7 + $0x184] sm:$0xf]
        %v2160 = vld [vmem:[#allocation7 + $0x188] sm:$0xf]
        %v2161 = vld [vmem:[#allocation7 + $0x18c] sm:$0xf]
        %v2162 = vld [vmem:[#allocation7 + $0x190] sm:$0xf]
        %v2163 = vld [vmem:[#allocation7 + $0x194] sm:$0xf]
        %v2164 = vld [vmem:[#allocation7 + $0x198] sm:$0xf]
        %v2165 = vld [vmem:[#allocation7 + $0x19c] sm:$0xf]
        %v2166 = vld [vmem:[#allocation7 + $0x1a0] sm:$0xf]
        %v2167 = vld [vmem:[#allocation7 + $0x1a4] sm:$0xf]
        %v2168 = vld [vmem:[#allocation7 + $0x1a8] sm:$0xf]
        %v2169 = vld [vmem:[#allocation7 + $0x1ac] sm:$0xf]
        %v2170 = vld [vmem:[#allocation7 + $0x1b0] sm:$0xf]
        %v2171 = vld [vmem:[#allocation7 + $0x1b4] sm:$0xf]
        %v2172 = vld [vmem:[#allocation7 + $0x1b8] sm:$0xf]
        %v2173 = vld [vmem:[#allocation7 + $0x1bc] sm:$0xf]
        %v2174 = vld [vmem:[#allocation7 + $0x1c0] sm:$0xf]
        %v2175 = vld [vmem:[#allocation7 + $0x1c4] sm:$0xf]
        %v2176 = vld [vmem:[#allocation7 + $0x1c8] sm:$0xf]
        %v2177 = vld [vmem:[#allocation7 + $0x1cc] sm:$0xf]
        %v2178 = vld [vmem:[#allocation7 + $0x1d0] sm:$0xf]
        %v2179 = vld [vmem:[#allocation7 + $0x1d4] sm:$0xf]
        %v2180 = vld [vmem:[#allocation7 + $0x1d8] sm:$0xf]
        %v2181 = vld [vmem:[#allocation7 + $0x1dc] sm:$0xf]
        %v2182 = vld [vmem:[#allocation7 + $0x1e0] sm:$0xf]
        %v2183 = vld [vmem:[#allocation7 + $0x1e4] sm:$0xf]
        %v2184 = vld [vmem:[#allocation7 + $0x1e8] sm:$0xf]
        %v2185 = vld [vmem:[#allocation7 + $0x1ec] sm:$0xf]
        %v2186 = vld [vmem:[#allocation7 + $0x1f0] sm:$0xf]
        %v2187 = vld [vmem:[#allocation7 + $0x1f4] sm:$0xf]
        %v2188 = vld [vmem:[#allocation7 + $0x1f8] sm:$0xf]
        %v2189 = vld [vmem:[#allocation7 + $0x1fc] sm:$0xf]
        %v2190 = vld [vmem:[#allocation7 + $0x200] sm:$0xf]
        %v2191 = vld [vmem:[#allocation7 + $0x204] sm:$0xf]
        %v2192 = vld [vmem:[#allocation7 + $0x208] sm:$0xf]
        %v2193 = vld [vmem:[#allocation7 + $0x20c] sm:$0xf]
        %v2194 = vld [vmem:[#allocation7 + $0x210] sm:$0xf]
        %v2195 = vld [vmem:[#allocation7 + $0x214] sm:$0xf]
        %v2196 = vld [vmem:[#allocation7 + $0x218] sm:$0xf]
        %v2197 = vld [vmem:[#allocation7 + $0x21c] sm:$0xf]
        %v2198 = vld [vmem:[#allocation7 + $0x220] sm:$0xf]
        %v2199 = vld [vmem:[#allocation7 + $0x224] sm:$0xf]
        %v2200 = vld [vmem:[#allocation7 + $0x228] sm:$0xf]
        %v2201 = vld [vmem:[#allocation7 + $0x22c] sm:$0xf]
        %v2202 = vld [vmem:[#allocation7 + $0x230] sm:$0xf]
        %v2203 = vld [vmem:[#allocation7 + $0x234] sm:$0xf]
        %v2204 = vld [vmem:[#allocation7 + $0x238] sm:$0xf]
        %v2205 = vld [vmem:[#allocation7 + $0x23c] sm:$0xf]
        %v2206 = vld [vmem:[#allocation7 + $0x240] sm:$0xf]
        %v2207 = vld [vmem:[#allocation7 + $0x244] sm:$0xf]
        %v2208 = vld [vmem:[#allocation7 + $0x248] sm:$0xf]
        %v2209 = vld [vmem:[#allocation7 + $0x24c] sm:$0xf]
        %v2210 = vld [vmem:[#allocation7 + $0x250] sm:$0xf]
        %v2211 = vld [vmem:[#allocation7 + $0x254] sm:$0xf]
        %v2212 = vld [vmem:[#allocation7 + $0x258] sm:$0xf]
        %v2213 = vld [vmem:[#allocation7 + $0x25c] sm:$0xf]
        %v2214 = vld [vmem:[#allocation7 + $0x260] sm:$0xf]
        %v2215 = vld [vmem:[#allocation7 + $0x264] sm:$0xf]
        %v2216 = vld [vmem:[#allocation7 + $0x268] sm:$0xf]
        %v2217 = vld [vmem:[#allocation7 + $0x26c] sm:$0xf]
        %v2218 = vld [vmem:[#allocation7 + $0x270] sm:$0xf]
        %v2219 = vld [vmem:[#allocation7 + $0x274] sm:$0xf]
        %v2220 = vld [vmem:[#allocation7 + $0x278] sm:$0xf]
        %v2221 = vld [vmem:[#allocation7 + $0x27c] sm:$0xf]
        %v2222 = vld [vmem:[#allocation7 + $0x280] sm:$0xf]
        %v2223 = vld [vmem:[#allocation7 + $0x284] sm:$0xf]
        %v2224 = vld [vmem:[#allocation7 + $0x288] sm:$0xf]
        %v2225 = vld [vmem:[#allocation7 + $0x28c] sm:$0xf]
        %v2226 = vld [vmem:[#allocation7 + $0x290] sm:$0xf]
        %v2227 = vld [vmem:[#allocation7 + $0x294] sm:$0xf]
        %v2228 = vld [vmem:[#allocation7 + $0x298] sm:$0xf]
        %v2229 = vld [vmem:[#allocation7 + $0x29c] sm:$0xf]
        %v2230 = vld [vmem:[#allocation7 + $0x2a0] sm:$0xf]
        %v2231 = vld [vmem:[#allocation7 + $0x2a4] sm:$0xf]
        %v2232 = vld [vmem:[#allocation7 + $0x2a8] sm:$0xf]
        %v2233 = vld [vmem:[#allocation7 + $0x2ac] sm:$0xf]
        %v2234 = vld [vmem:[#allocation7 + $0x2b0] sm:$0xf]
        %v2235 = vld [vmem:[#allocation7 + $0x2b4] sm:$0xf]
        %v2236 = vld [vmem:[#allocation7 + $0x2b8] sm:$0xf]
        %v2237 = vld [vmem:[#allocation7 + $0x2bc] sm:$0xf]
        %v2238 = vld [vmem:[#allocation7 + $0x2c0] sm:$0xf]
        %v2239 = vld [vmem:[#allocation7 + $0x2c4] sm:$0xf]
        %v2240 = vld [vmem:[#allocation7 + $0x2c8] sm:$0xf]
        %v2241 = vld [vmem:[#allocation7 + $0x2cc] sm:$0xf]
        %v2242 = vld [vmem:[#allocation7 + $0x2d0] sm:$0xf]
        %v2243 = vld [vmem:[#allocation7 + $0x2d4] sm:$0xf]
        %v2244 = vld [vmem:[#allocation7 + $0x2d8] sm:$0xf]
        %v2245 = vld [vmem:[#allocation7 + $0x2dc] sm:$0xf]
        %v2246 = vld [vmem:[#allocation7 + $0x2e0] sm:$0xf]
        %v2247 = vld [vmem:[#allocation7 + $0x2e4] sm:$0xf]
        %v2248 = vld [vmem:[#allocation7 + $0x2e8] sm:$0xf]
        %v2249 = vld [vmem:[#allocation7 + $0x2ec] sm:$0xf]
        %v2250 = vld [vmem:[#allocation7 + $0x2f0] sm:$0xf]
        %v2251 = vld [vmem:[#allocation7 + $0x2f4] sm:$0xf]
        %v2252 = vld [vmem:[#allocation7 + $0x2f8] sm:$0xf]
        %v2253 = vld [vmem:[#allocation7 + $0x2fc] sm:$0xf]
        %v2254 = vld [vmem:[#allocation7 + $0x300] sm:$0xf]
        %v2255 = vld [vmem:[#allocation7 + $0x304] sm:$0xf]
        %v2256 = vld [vmem:[#allocation7 + $0x308] sm:$0xf]
        %v2257 = vld [vmem:[#allocation7 + $0x30c] sm:$0xf]
        %v2258 = vld [vmem:[#allocation7 + $0x310] sm:$0xf]
        %v2259 = vld [vmem:[#allocation7 + $0x314] sm:$0xf]
        %v2260 = vld [vmem:[#allocation7 + $0x318] sm:$0xf]
        %v2261 = vld [vmem:[#allocation7 + $0x31c] sm:$0xf]
        %v2262 = vld [vmem:[#allocation8] sm:$0x1]
        %v2264 = vlaneseq
        %v2265 = vshrl.u32 %v2264, 7
        %v2266 = vsub.s32 0, %v2265
        %v2267 = vrot.slane %v2262, %v2266
        %v2469 = vunpack.c.l.b16 %v2062
        %v2470 = vunpack.c.l.b16 %v2063
        %v2471 = vunpack.c.l.b16 %v2064
        %v2472 = vunpack.c.l.b16 %v2065
        %v2473 = vunpack.c.l.b16 %v2066
        %v2474 = vunpack.c.l.b16 %v2067
        %v2475 = vunpack.c.l.b16 %v2068
        %v2476 = vunpack.c.l.b16 %v2069
        %v2477 = vunpack.c.l.b16 %v2070
        %v2478 = vunpack.c.l.b16 %v2071
        %v2479 = vunpack.c.l.b16 %v2072
        %v2480 = vunpack.c.l.b16 %v2073
        %v2481 = vunpack.c.l.b16 %v2074
        %v2482 = vunpack.c.l.b16 %v2075
        %v2483 = vunpack.c.l.b16 %v2076
        %v2484 = vunpack.c.l.b16 %v2077
        %v2485 = vunpack.c.l.b16 %v2078
        %v2486 = vunpack.c.l.b16 %v2079
        %v2487 = vunpack.c.l.b16 %v2080
        %v2488 = vunpack.c.l.b16 %v2081
        %v2489 = vunpack.c.l.b16 %v2082
        %v2490 = vunpack.c.l.b16 %v2083
        %v2491 = vunpack.c.l.b16 %v2084
        %v2492 = vunpack.c.l.b16 %v2085
        %v2493 = vunpack.c.l.b16 %v2086
        %v2494 = vunpack.c.l.b16 %v2087
        %v2495 = vunpack.c.l.b16 %v2088
        %v2496 = vunpack.c.l.b16 %v2089
        %v2497 = vunpack.c.l.b16 %v2090
        %v2498 = vunpack.c.l.b16 %v2091
        %v2499 = vunpack.c.l.b16 %v2092
        %v2500 = vunpack.c.l.b16 %v2093
        %v2501 = vunpack.c.l.b16 %v2094
        %v2502 = vunpack.c.l.b16 %v2095
        %v2503 = vunpack.c.l.b16 %v2096
        %v2504 = vunpack.c.l.b16 %v2097
        %v2505 = vunpack.c.l.b16 %v2098
        %v2506 = vunpack.c.l.b16 %v2099
        %v2507 = vunpack.c.l.b16 %v2100
        %v2508 = vunpack.c.l.b16 %v2101
        %v2509 = vunpack.c.l.b16 %v2102
        %v2510 = vunpack.c.l.b16 %v2103
        %v2511 = vunpack.c.l.b16 %v2104
        %v2512 = vunpack.c.l.b16 %v2105
        %v2513 = vunpack.c.l.b16 %v2106
        %v2514 = vunpack.c.l.b16 %v2107
        %v2515 = vunpack.c.l.b16 %v2108
        %v2516 = vunpack.c.l.b16 %v2109
        %v2517 = vunpack.c.l.b16 %v2110
        %v2518 = vunpack.c.l.b16 %v2111
        %v2519 = vunpack.c.l.b16 %v2112
        %v2520 = vunpack.c.l.b16 %v2113
        %v2521 = vunpack.c.l.b16 %v2114
        %v2522 = vunpack.c.l.b16 %v2115
        %v2523 = vunpack.c.l.b16 %v2116
        %v2524 = vunpack.c.l.b16 %v2117
        %v2525 = vunpack.c.l.b16 %v2118
        %v2526 = vunpack.c.l.b16 %v2119
        %v2527 = vunpack.c.l.b16 %v2120
        %v2528 = vunpack.c.l.b16 %v2121
        %v2529 = vunpack.c.l.b16 %v2122
        %v2530 = vunpack.c.l.b16 %v2123
        %v2531 = vunpack.c.l.b16 %v2124
        %v2532 = vunpack.c.l.b16 %v2125
        %v2533 = vunpack.c.l.b16 %v2126
        %v2534 = vunpack.c.l.b16 %v2127
        %v2535 = vunpack.c.l.b16 %v2128
        %v2536 = vunpack.c.l.b16 %v2129
        %v2537 = vunpack.c.l.b16 %v2130
        %v2538 = vunpack.c.l.b16 %v2131
        %v2539 = vunpack.c.l.b16 %v2132
        %v2540 = vunpack.c.l.b16 %v2133
        %v2541 = vunpack.c.l.b16 %v2134
        %v2542 = vunpack.c.l.b16 %v2135
        %v2543 = vunpack.c.l.b16 %v2136
        %v2544 = vunpack.c.l.b16 %v2137
        %v2545 = vunpack.c.l.b16 %v2138
        %v2546 = vunpack.c.l.b16 %v2139
        %v2547 = vunpack.c.l.b16 %v2140
        %v2548 = vunpack.c.l.b16 %v2141
        %v2549 = vunpack.c.l.b16 %v2142
        %v2550 = vunpack.c.l.b16 %v2143
        %v2551 = vunpack.c.l.b16 %v2144
        %v2552 = vunpack.c.l.b16 %v2145
        %v2553 = vunpack.c.l.b16 %v2146
        %v2554 = vunpack.c.l.b16 %v2147
        %v2555 = vunpack.c.l.b16 %v2148
        %v2556 = vunpack.c.l.b16 %v2149
        %v2557 = vunpack.c.l.b16 %v2150
        %v2558 = vunpack.c.l.b16 %v2151
        %v2559 = vunpack.c.l.b16 %v2152
        %v2560 = vunpack.c.l.b16 %v2153
        %v2561 = vunpack.c.l.b16 %v2154
        %v2562 = vunpack.c.l.b16 %v2155
        %v2563 = vunpack.c.l.b16 %v2156
        %v2564 = vunpack.c.l.b16 %v2157
        %v2565 = vunpack.c.l.b16 %v2158
        %v2566 = vunpack.c.l.b16 %v2159
        %v2567 = vunpack.c.l.b16 %v2160
        %v2568 = vunpack.c.l.b16 %v2161
        %v2569 = vunpack.c.l.b16 %v2162
        %v2570 = vunpack.c.l.b16 %v2163
        %v2571 = vunpack.c.l.b16 %v2164
        %v2572 = vunpack.c.l.b16 %v2165
        %v2573 = vunpack.c.l.b16 %v2166
        %v2574 = vunpack.c.l.b16 %v2167
        %v2575 = vunpack.c.l.b16 %v2168
        %v2576 = vunpack.c.l.b16 %v2169
        %v2577 = vunpack.c.l.b16 %v2170
        %v2578 = vunpack.c.l.b16 %v2171
        %v2579 = vunpack.c.l.b16 %v2172
        %v2580 = vunpack.c.l.b16 %v2173
        %v2581 = vunpack.c.l.b16 %v2174
        %v2582 = vunpack.c.l.b16 %v2175
        %v2583 = vunpack.c.l.b16 %v2176
        %v2584 = vunpack.c.l.b16 %v2177
        %v2585 = vunpack.c.l.b16 %v2178
        %v2586 = vunpack.c.l.b16 %v2179
        %v2587 = vunpack.c.l.b16 %v2180
        %v2588 = vunpack.c.l.b16 %v2181
        %v2589 = vunpack.c.l.b16 %v2182
        %v2590 = vunpack.c.l.b16 %v2183
        %v2591 = vunpack.c.l.b16 %v2184
        %v2592 = vunpack.c.l.b16 %v2185
        %v2593 = vunpack.c.l.b16 %v2186
        %v2594 = vunpack.c.l.b16 %v2187
        %v2595 = vunpack.c.l.b16 %v2188
        %v2596 = vunpack.c.l.b16 %v2189
        %v2597 = vunpack.c.l.b16 %v2190
        %v2598 = vunpack.c.l.b16 %v2191
        %v2599 = vunpack.c.l.b16 %v2192
        %v2600 = vunpack.c.l.b16 %v2193
        %v2601 = vunpack.c.l.b16 %v2194
        %v2602 = vunpack.c.l.b16 %v2195
        %v2603 = vunpack.c.l.b16 %v2196
        %v2604 = vunpack.c.l.b16 %v2197
        %v2605 = vunpack.c.l.b16 %v2198
        %v2606 = vunpack.c.l.b16 %v2199
        %v2607 = vunpack.c.l.b16 %v2200
        %v2608 = vunpack.c.l.b16 %v2201
        %v2609 = vunpack.c.l.b16 %v2202
        %v2610 = vunpack.c.l.b16 %v2203
        %v2611 = vunpack.c.l.b16 %v2204
        %v2612 = vunpack.c.l.b16 %v2205
        %v2613 = vunpack.c.l.b16 %v2206
        %v2614 = vunpack.c.l.b16 %v2207
        %v2615 = vunpack.c.l.b16 %v2208
        %v2616 = vunpack.c.l.b16 %v2209
        %v2617 = vunpack.c.l.b16 %v2210
        %v2618 = vunpack.c.l.b16 %v2211
        %v2619 = vunpack.c.l.b16 %v2212
        %v2620 = vunpack.c.l.b16 %v2213
        %v2621 = vunpack.c.l.b16 %v2214
        %v2622 = vunpack.c.l.b16 %v2215
        %v2623 = vunpack.c.l.b16 %v2216
        %v2624 = vunpack.c.l.b16 %v2217
        %v2625 = vunpack.c.l.b16 %v2218
        %v2626 = vunpack.c.l.b16 %v2219
        %v2627 = vunpack.c.l.b16 %v2220
        %v2628 = vunpack.c.l.b16 %v2221
        %v2629 = vunpack.c.l.b16 %v2222
        %v2630 = vunpack.c.l.b16 %v2223
        %v2631 = vunpack.c.l.b16 %v2224
        %v2632 = vunpack.c.l.b16 %v2225
        %v2633 = vunpack.c.l.b16 %v2226
        %v2634 = vunpack.c.l.b16 %v2227
        %v2635 = vunpack.c.l.b16 %v2228
        %v2636 = vunpack.c.l.b16 %v2229
        %v2637 = vunpack.c.l.b16 %v2230
        %v2638 = vunpack.c.l.b16 %v2231
        %v2639 = vunpack.c.l.b16 %v2232
        %v2640 = vunpack.c.l.b16 %v2233
        %v2641 = vunpack.c.l.b16 %v2234
        %v2642 = vunpack.c.l.b16 %v2235
        %v2643 = vunpack.c.l.b16 %v2236
        %v2644 = vunpack.c.l.b16 %v2237
        %v2645 = vunpack.c.l.b16 %v2238
        %v2646 = vunpack.c.l.b16 %v2239
        %v2647 = vunpack.c.l.b16 %v2240
        %v2648 = vunpack.c.l.b16 %v2241
        %v2649 = vunpack.c.l.b16 %v2242
        %v2650 = vunpack.c.l.b16 %v2243
        %v2651 = vunpack.c.l.b16 %v2244
        %v2652 = vunpack.c.l.b16 %v2245
        %v2653 = vunpack.c.l.b16 %v2246
        %v2654 = vunpack.c.l.b16 %v2247
        %v2655 = vunpack.c.l.b16 %v2248
        %v2656 = vunpack.c.l.b16 %v2249
        %v2657 = vunpack.c.l.b16 %v2250
        %v2658 = vunpack.c.l.b16 %v2251
        %v2659 = vunpack.c.l.b16 %v2252
        %v2660 = vunpack.c.l.b16 %v2253
        %v2661 = vunpack.c.l.b16 %v2254
        %v2662 = vunpack.c.l.b16 %v2255
        %v2663 = vunpack.c.l.b16 %v2256
        %v2664 = vunpack.c.l.b16 %v2257
        %v2665 = vunpack.c.l.b16 %v2258
        %v2666 = vunpack.c.l.b16 %v2259
        %v2667 = vunpack.c.l.b16 %v2260
        %v2668 = vunpack.c.l.b16 %v2261
        %v2669 = vpack.c.b16 %v2470, %v2469
        %v2670 = vpack.c.b16 %v2472, %v2471
        %v2671 = vpack.c.b16 %v2474, %v2473
        %v2672 = vpack.c.b16 %v2476, %v2475
        %v2673 = vpack.c.b16 %v2478, %v2477
        %v2674 = vpack.c.b16 %v2480, %v2479
        %v2675 = vpack.c.b16 %v2482, %v2481
        %v2676 = vpack.c.b16 %v2484, %v2483
        %v2677 = vpack.c.b16 %v2486, %v2485
        %v2678 = vpack.c.b16 %v2488, %v2487
        %v2679 = vpack.c.b16 %v2490, %v2489
        %v2680 = vpack.c.b16 %v2492, %v2491
        %v2681 = vpack.c.b16 %v2494, %v2493
        %v2682 = vpack.c.b16 %v2496, %v2495
        %v2683 = vpack.c.b16 %v2498, %v2497
        %v2684 = vpack.c.b16 %v2500, %v2499
        %v2685 = vpack.c.b16 %v2502, %v2501
        %v2686 = vpack.c.b16 %v2504, %v2503
        %v2687 = vpack.c.b16 %v2506, %v2505
        %v2688 = vpack.c.b16 %v2508, %v2507
        %v2689 = vpack.c.b16 %v2510, %v2509
        %v2690 = vpack.c.b16 %v2512, %v2511
        %v2691 = vpack.c.b16 %v2514, %v2513
        %v2692 = vpack.c.b16 %v2516, %v2515
        %v2693 = vpack.c.b16 %v2518, %v2517
        %v2694 = vpack.c.b16 %v2520, %v2519
        %v2695 = vpack.c.b16 %v2522, %v2521
        %v2696 = vpack.c.b16 %v2524, %v2523
        %v2697 = vpack.c.b16 %v2526, %v2525
        %v2698 = vpack.c.b16 %v2528, %v2527
        %v2699 = vpack.c.b16 %v2530, %v2529
        %v2700 = vpack.c.b16 %v2532, %v2531
        %v2701 = vpack.c.b16 %v2534, %v2533
        %v2702 = vpack.c.b16 %v2536, %v2535
        %v2703 = vpack.c.b16 %v2538, %v2537
        %v2704 = vpack.c.b16 %v2540, %v2539
        %v2705 = vpack.c.b16 %v2542, %v2541
        %v2706 = vpack.c.b16 %v2544, %v2543
        %v2707 = vpack.c.b16 %v2546, %v2545
        %v2708 = vpack.c.b16 %v2548, %v2547
        %v2709 = vpack.c.b16 %v2550, %v2549
        %v2710 = vpack.c.b16 %v2552, %v2551
        %v2711 = vpack.c.b16 %v2554, %v2553
        %v2712 = vpack.c.b16 %v2556, %v2555
        %v2713 = vpack.c.b16 %v2558, %v2557
        %v2714 = vpack.c.b16 %v2560, %v2559
        %v2715 = vpack.c.b16 %v2562, %v2561
        %v2716 = vpack.c.b16 %v2564, %v2563
        %v2717 = vpack.c.b16 %v2566, %v2565
        %v2718 = vpack.c.b16 %v2568, %v2567
        %v2719 = vpack.c.b16 %v2570, %v2569
        %v2720 = vpack.c.b16 %v2572, %v2571
        %v2721 = vpack.c.b16 %v2574, %v2573
        %v2722 = vpack.c.b16 %v2576, %v2575
        %v2723 = vpack.c.b16 %v2578, %v2577
        %v2724 = vpack.c.b16 %v2580, %v2579
        %v2725 = vpack.c.b16 %v2582, %v2581
        %v2726 = vpack.c.b16 %v2584, %v2583
        %v2727 = vpack.c.b16 %v2586, %v2585
        %v2728 = vpack.c.b16 %v2588, %v2587
        %v2729 = vpack.c.b16 %v2590, %v2589
        %v2730 = vpack.c.b16 %v2592, %v2591
        %v2731 = vpack.c.b16 %v2594, %v2593
        %v2732 = vpack.c.b16 %v2596, %v2595
        %v2733 = vpack.c.b16 %v2598, %v2597
        %v2734 = vpack.c.b16 %v2600, %v2599
        %v2735 = vpack.c.b16 %v2602, %v2601
        %v2736 = vpack.c.b16 %v2604, %v2603
        %v2737 = vpack.c.b16 %v2606, %v2605
        %v2738 = vpack.c.b16 %v2608, %v2607
        %v2739 = vpack.c.b16 %v2610, %v2609
        %v2740 = vpack.c.b16 %v2612, %v2611
        %v2741 = vpack.c.b16 %v2614, %v2613
        %v2742 = vpack.c.b16 %v2616, %v2615
        %v2743 = vpack.c.b16 %v2618, %v2617
        %v2744 = vpack.c.b16 %v2620, %v2619
        %v2745 = vpack.c.b16 %v2622, %v2621
        %v2746 = vpack.c.b16 %v2624, %v2623
        %v2747 = vpack.c.b16 %v2626, %v2625
        %v2748 = vpack.c.b16 %v2628, %v2627
        %v2749 = vpack.c.b16 %v2630, %v2629
        %v2750 = vpack.c.b16 %v2632, %v2631
        %v2751 = vpack.c.b16 %v2634, %v2633
        %v2752 = vpack.c.b16 %v2636, %v2635
        %v2753 = vpack.c.b16 %v2638, %v2637
        %v2754 = vpack.c.b16 %v2640, %v2639
        %v2755 = vpack.c.b16 %v2642, %v2641
        %v2756 = vpack.c.b16 %v2644, %v2643
        %v2757 = vpack.c.b16 %v2646, %v2645
        %v2758 = vpack.c.b16 %v2648, %v2647
        %v2759 = vpack.c.b16 %v2650, %v2649
        %v2760 = vpack.c.b16 %v2652, %v2651
        %v2761 = vpack.c.b16 %v2654, %v2653
        %v2762 = vpack.c.b16 %v2656, %v2655
        %v2763 = vpack.c.b16 %v2658, %v2657
        %v2764 = vpack.c.b16 %v2660, %v2659
        %v2765 = vpack.c.b16 %v2662, %v2661
        %v2766 = vpack.c.b16 %v2664, %v2663
        %v2767 = vpack.c.b16 %v2666, %v2665
        %v2768 = vpack.c.b16 %v2668, %v2667
        %v2870 = vsel %vm813, %v2061, 0
        %2872 = vmatprep.subr.bf16.mxu0 0
        %2873 = vmatpush1.bf16.msra.mxu0 %v2676
        %2874 = vmatprep.subr.bf16.mxu0 0
        %2875 = vmatpush1.bf16.msra.mxu0 %v2675
        %2876 = vmatprep.subr.bf16.mxu0 0
        %2877 = vmatpush1.bf16.msra.mxu0 %v2674
        %2878 = vmatprep.subr.bf16.mxu0 0
        %2879 = vmatpush1.bf16.msra.mxu0 %v2673
        %2880 = vmatprep.subr.bf16.mxu0 0
        %2881 = vmatpush1.bf16.msra.mxu0 %v2672
        %2882 = vmatprep.subr.bf16.mxu0 0
        %2883 = vmatpush1.bf16.msra.mxu0 %v2671
        %2884 = vmatprep.subr.bf16.mxu0 0
        %2885 = vmatpush1.bf16.msra.mxu0 %v2670
        %2886 = vmatprep.subr.bf16.mxu0 0
        %2887 = vmatpush1.bf16.msra.mxu0 %v2669
        %2888 = vmatprep.subr.bf16.mxu0 0
        %2889 = vmatpush2.bf16.msra.mxu0 %v2684
        %2890 = vmatprep.subr.bf16.mxu0 0
        %2891 = vmatpush2.bf16.msra.mxu0 %v2683
        %2892 = vmatprep.subr.bf16.mxu0 0
        %2893 = vmatpush2.bf16.msra.mxu0 %v2682
        %2894 = vmatprep.subr.bf16.mxu0 0
        %2895 = vmatpush2.bf16.msra.mxu0 %v2681
        %2896 = vmatprep.subr.bf16.mxu0 0
        %2897 = vmatpush2.bf16.msra.mxu0 %v2680
        %2898 = vmatprep.subr.bf16.mxu0 0
        %2899 = vmatpush2.bf16.msra.mxu0 %v2679
        %2900 = vmatprep.subr.bf16.mxu0 0
        %2901 = vmatpush2.bf16.msra.mxu0 %v2678
        %2902 = vmatprep.subr.bf16.mxu0 0
        %2903 = vmatpush2.bf16.msra.mxu0 %v2677
        %2904 = vmatprep.mubr.bf16.mxu0 %v2050
        %2905 = vmatmul.mubr.bf16.gmra.mxu0 %v2049
        %v2906 = vpop.f32.mrf.mxu0
        %v2907 = vadd.f32 %v2267, %v2906
        %v2908 = vpop.f32.mrf.mxu0
        %v2909 = vpop.f32.mrf.mxu0
        %v2910 = vpop.f32.mrf.mxu0
        %2911 = vdwg.mxu0
        %2912 = vmatprep.subr.bf16.mxu0 0
        %2913 = vmatpush1.bf16.msra.mxu0 %v2692
        %2914 = vmatprep.subr.bf16.mxu0 0
        %2915 = vmatpush1.bf16.msra.mxu0 %v2691
        %2916 = vmatprep.subr.bf16.mxu0 0
        %2917 = vmatpush1.bf16.msra.mxu0 %v2690
        %2918 = vmatprep.subr.bf16.mxu0 0
        %2919 = vmatpush1.bf16.msra.mxu0 %v2689
        %2920 = vmatprep.subr.bf16.mxu0 0
        %2921 = vmatpush1.bf16.msra.mxu0 %v2688
        %2922 = vmatprep.subr.bf16.mxu0 0
        %2923 = vmatpush1.bf16.msra.mxu0 %v2687
        %2924 = vmatprep.subr.bf16.mxu0 0
        %2925 = vmatpush1.bf16.msra.mxu0 %v2686
        %2926 = vmatprep.subr.bf16.mxu0 0
        %2927 = vmatpush1.bf16.msra.mxu0 %v2685
        %2928 = vmatprep.subr.bf16.mxu0 0
        %2929 = vmatpush2.bf16.msra.mxu0 %v2700
        %2930 = vmatprep.subr.bf16.mxu0 0
        %2931 = vmatpush2.bf16.msra.mxu0 %v2699
        %2932 = vmatprep.subr.bf16.mxu0 0
        %2933 = vmatpush2.bf16.msra.mxu0 %v2698
        %2934 = vmatprep.subr.bf16.mxu0 0
        %2935 = vmatpush2.bf16.msra.mxu0 %v2697
        %2936 = vmatprep.subr.bf16.mxu0 0
        %2937 = vmatpush2.bf16.msra.mxu0 %v2696
        %2938 = vmatprep.subr.bf16.mxu0 0
        %2939 = vmatpush2.bf16.msra.mxu0 %v2695
        %2940 = vmatprep.subr.bf16.mxu0 0
        %2941 = vmatpush2.bf16.msra.mxu0 %v2694
        %2942 = vmatprep.subr.bf16.mxu0 0
        %2943 = vmatpush2.bf16.msra.mxu0 %v2693
        %2944 = vmatprep.mubr.bf16.mxu0 %v2052
        %2945 = vmatmul.mubr.bf16.gmra.mxu0 %v2051
        %v2946 = vpop.f32.mrf.mxu0
        %v2947 = vadd.f32 %v2907, %v2946
        %v2948 = vpop.f32.mrf.mxu0
        %v2949 = vpop.f32.mrf.mxu0
        %v2950 = vpop.f32.mrf.mxu0
        %2951 = vdwg.mxu0
        %2952 = vmatprep.subr.bf16.mxu0 0
        %2953 = vmatpush1.bf16.msra.mxu0 %v2708
        %2954 = vmatprep.subr.bf16.mxu0 0
        %2955 = vmatpush1.bf16.msra.mxu0 %v2707
        %2956 = vmatprep.subr.bf16.mxu0 0
        %2957 = vmatpush1.bf16.msra.mxu0 %v2706
        %2958 = vmatprep.subr.bf16.mxu0 0
        %2959 = vmatpush1.bf16.msra.mxu0 %v2705
        %2960 = vmatprep.subr.bf16.mxu0 0
        %2961 = vmatpush1.bf16.msra.mxu0 %v2704
        %2962 = vmatprep.subr.bf16.mxu0 0
        %2963 = vmatpush1.bf16.msra.mxu0 %v2703
        %2964 = vmatprep.subr.bf16.mxu0 0
        %2965 = vmatpush1.bf16.msra.mxu0 %v2702
        %2966 = vmatprep.subr.bf16.mxu0 0
        %2967 = vmatpush1.bf16.msra.mxu0 %v2701
        %2968 = vmatprep.subr.bf16.mxu0 0
        %2969 = vmatpush2.bf16.msra.mxu0 %v2716
        %2970 = vmatprep.subr.bf16.mxu0 0
        %2971 = vmatpush2.bf16.msra.mxu0 %v2715
        %2972 = vmatprep.subr.bf16.mxu0 0
        %2973 = vmatpush2.bf16.msra.mxu0 %v2714
        %2974 = vmatprep.subr.bf16.mxu0 0
        %2975 = vmatpush2.bf16.msra.mxu0 %v2713
        %2976 = vmatprep.subr.bf16.mxu0 0
        %2977 = vmatpush2.bf16.msra.mxu0 %v2712
        %2978 = vmatprep.subr.bf16.mxu0 0
        %2979 = vmatpush2.bf16.msra.mxu0 %v2711
        %2980 = vmatprep.subr.bf16.mxu0 0
        %2981 = vmatpush2.bf16.msra.mxu0 %v2710
        %2982 = vmatprep.subr.bf16.mxu0 0
        %2983 = vmatpush2.bf16.msra.mxu0 %v2709
        %2984 = vmatprep.mubr.bf16.mxu0 %v2054
        %2985 = vmatmul.mubr.bf16.gmra.mxu0 %v2053
        %v2986 = vpop.f32.mrf.mxu0
        %v2987 = vadd.f32 %v2947, %v2986
        %v2988 = vpop.f32.mrf.mxu0
        %v2989 = vpop.f32.mrf.mxu0
        %v2990 = vpop.f32.mrf.mxu0
        %2991 = vdwg.mxu0
        %2992 = vmatprep.subr.bf16.mxu0 0
        %2993 = vmatpush1.bf16.msra.mxu0 %v2724
        %2994 = vmatprep.subr.bf16.mxu0 0
        %2995 = vmatpush1.bf16.msra.mxu0 %v2723
        %2996 = vmatprep.subr.bf16.mxu0 0
        %2997 = vmatpush1.bf16.msra.mxu0 %v2722
        %2998 = vmatprep.subr.bf16.mxu0 0
        %2999 = vmatpush1.bf16.msra.mxu0 %v2721
        %3000 = vmatprep.subr.bf16.mxu0 0
        %3001 = vmatpush1.bf16.msra.mxu0 %v2720
        %3002 = vmatprep.subr.bf16.mxu0 0
        %3003 = vmatpush1.bf16.msra.mxu0 %v2719
        %3004 = vmatprep.subr.bf16.mxu0 0
        %3005 = vmatpush1.bf16.msra.mxu0 %v2718
        %3006 = vmatprep.subr.bf16.mxu0 0
        %3007 = vmatpush1.bf16.msra.mxu0 %v2717
        %3008 = vmatprep.subr.bf16.mxu0 0
        %3009 = vmatpush2.bf16.msra.mxu0 %v2732
        %3010 = vmatprep.subr.bf16.mxu0 0
        %3011 = vmatpush2.bf16.msra.mxu0 %v2731
        %3012 = vmatprep.subr.bf16.mxu0 0
        %3013 = vmatpush2.bf16.msra.mxu0 %v2730
        %3014 = vmatprep.subr.bf16.mxu0 0
        %3015 = vmatpush2.bf16.msra.mxu0 %v2729
        %3016 = vmatprep.subr.bf16.mxu0 0
        %3017 = vmatpush2.bf16.msra.mxu0 %v2728
        %3018 = vmatprep.subr.bf16.mxu0 0
        %3019 = vmatpush2.bf16.msra.mxu0 %v2727
        %3020 = vmatprep.subr.bf16.mxu0 0
        %3021 = vmatpush2.bf16.msra.mxu0 %v2726
        %3022 = vmatprep.subr.bf16.mxu0 0
        %3023 = vmatpush2.bf16.msra.mxu0 %v2725
        %3024 = vmatprep.mubr.bf16.mxu0 %v2056
        %3025 = vmatmul.mubr.bf16.gmra.mxu0 %v2055
        %v3026 = vpop.f32.mrf.mxu0
        %v3027 = vadd.f32 %v2987, %v3026
        %v3028 = vpop.f32.mrf.mxu0
        %v3029 = vpop.f32.mrf.mxu0
        %v3030 = vpop.f32.mrf.mxu0
        %3031 = vdwg.mxu0
        %3032 = vmatprep.subr.bf16.mxu0 0
        %3033 = vmatpush1.bf16.msra.mxu0 %v2740
        %3034 = vmatprep.subr.bf16.mxu0 0
        %3035 = vmatpush1.bf16.msra.mxu0 %v2739
        %3036 = vmatprep.subr.bf16.mxu0 0
        %3037 = vmatpush1.bf16.msra.mxu0 %v2738
        %3038 = vmatprep.subr.bf16.mxu0 0
        %3039 = vmatpush1.bf16.msra.mxu0 %v2737
        %3040 = vmatprep.subr.bf16.mxu0 0
        %3041 = vmatpush1.bf16.msra.mxu0 %v2736
        %3042 = vmatprep.subr.bf16.mxu0 0
        %3043 = vmatpush1.bf16.msra.mxu0 %v2735
        %3044 = vmatprep.subr.bf16.mxu0 0
        %3045 = vmatpush1.bf16.msra.mxu0 %v2734
        %3046 = vmatprep.subr.bf16.mxu0 0
        %3047 = vmatpush1.bf16.msra.mxu0 %v2733
        %3048 = vmatprep.subr.bf16.mxu0 0
        %3049 = vmatpush2.bf16.msra.mxu0 %v2748
        %3050 = vmatprep.subr.bf16.mxu0 0
        %3051 = vmatpush2.bf16.msra.mxu0 %v2747
        %3052 = vmatprep.subr.bf16.mxu0 0
        %3053 = vmatpush2.bf16.msra.mxu0 %v2746
        %3054 = vmatprep.subr.bf16.mxu0 0
        %3055 = vmatpush2.bf16.msra.mxu0 %v2745
        %3056 = vmatprep.subr.bf16.mxu0 0
        %3057 = vmatpush2.bf16.msra.mxu0 %v2744
        %3058 = vmatprep.subr.bf16.mxu0 0
        %3059 = vmatpush2.bf16.msra.mxu0 %v2743
        %3060 = vmatprep.subr.bf16.mxu0 0
        %3061 = vmatpush2.bf16.msra.mxu0 %v2742
        %3062 = vmatprep.subr.bf16.mxu0 0
        %3063 = vmatpush2.bf16.msra.mxu0 %v2741
        %3064 = vmatprep.mubr.bf16.mxu0 %v2058
        %3065 = vmatmul.mubr.bf16.gmra.mxu0 %v2057
        %v3066 = vpop.f32.mrf.mxu0
        %v3067 = vadd.f32 %v3027, %v3066
        %v3068 = vpop.f32.mrf.mxu0
        %v3069 = vpop.f32.mrf.mxu0
        %v3070 = vpop.f32.mrf.mxu0
        %3071 = vdwg.mxu0
        %3072 = vmatprep.subr.bf16.mxu0 0
        %3073 = vmatpush1.bf16.msra.mxu0 %v2756
        %3074 = vmatprep.subr.bf16.mxu0 0
        %3075 = vmatpush1.bf16.msra.mxu0 %v2755
        %3076 = vmatprep.subr.bf16.mxu0 0
        %3077 = vmatpush1.bf16.msra.mxu0 %v2754
        %3078 = vmatprep.subr.bf16.mxu0 0
        %3079 = vmatpush1.bf16.msra.mxu0 %v2753
        %3080 = vmatprep.subr.bf16.mxu0 0
        %3081 = vmatpush1.bf16.msra.mxu0 %v2752
        %3082 = vmatprep.subr.bf16.mxu0 0
        %3083 = vmatpush1.bf16.msra.mxu0 %v2751
        %3084 = vmatprep.subr.bf16.mxu0 0
        %3085 = vmatpush1.bf16.msra.mxu0 %v2750
        %3086 = vmatprep.subr.bf16.mxu0 0
        %3087 = vmatpush1.bf16.msra.mxu0 %v2749
        %3088 = vmatprep.subr.bf16.mxu0 0
        %3089 = vmatpush2.bf16.msra.mxu0 %v2764
        %3090 = vmatprep.subr.bf16.mxu0 0
        %3091 = vmatpush2.bf16.msra.mxu0 %v2763
        %3092 = vmatprep.subr.bf16.mxu0 0
        %3093 = vmatpush2.bf16.msra.mxu0 %v2762
        %3094 = vmatprep.subr.bf16.mxu0 0
        %3095 = vmatpush2.bf16.msra.mxu0 %v2761
        %3096 = vmatprep.subr.bf16.mxu0 0
        %3097 = vmatpush2.bf16.msra.mxu0 %v2760
        %3098 = vmatprep.subr.bf16.mxu0 0
        %3099 = vmatpush2.bf16.msra.mxu0 %v2759
        %3100 = vmatprep.subr.bf16.mxu0 0
        %3101 = vmatpush2.bf16.msra.mxu0 %v2758
        %3102 = vmatprep.subr.bf16.mxu0 0
        %3103 = vmatpush2.bf16.msra.mxu0 %v2757
        %3104 = vmatprep.mubr.bf16.mxu0 %v2060
        %3105 = vmatmul.mubr.bf16.gmra.mxu0 %v2059
        %v3106 = vpop.f32.mrf.mxu0
        %v3107 = vadd.f32 %v3067, %v3106
        %v3108 = vpop.f32.mrf.mxu0
        %v3109 = vpop.f32.mrf.mxu0
        %v3110 = vpop.f32.mrf.mxu0
        %3111 = vdwg.mxu0
        %3112 = vmatprep.subr.bf16.mxu0 0
        %3113 = vmatpush1.bf16.msra.mxu0 0
        %3114 = vmatprep.subr.bf16.mxu0 0
        %3115 = vmatpush1.bf16.msra.mxu0 0
        %3116 = vmatprep.subr.bf16.mxu0 0
        %3117 = vmatpush1.bf16.msra.mxu0 0
        %3118 = vmatprep.subr.bf16.mxu0 0
        %3119 = vmatpush1.bf16.msra.mxu0 0
        %3120 = vmatprep.subr.bf16.mxu0 0
        %3121 = vmatpush1.bf16.msra.mxu0 %v2768
        %3122 = vmatprep.subr.bf16.mxu0 0
        %3123 = vmatpush1.bf16.msra.mxu0 %v2767
        %3124 = vmatprep.subr.bf16.mxu0 0
        %3125 = vmatpush1.bf16.msra.mxu0 %v2766
        %3126 = vmatprep.subr.bf16.mxu0 0
        %3127 = vmatpush1.bf16.msra.mxu0 %v2765
        %3128 = vmatprep.subr.bf16.mxu0 0
        %3129 = vmatpush2.bf16.msra.mxu0 0
        %3130 = vmatprep.subr.bf16.mxu0 0
        %3131 = vmatpush2.bf16.msra.mxu0 0
        %3132 = vmatprep.subr.bf16.mxu0 0
        %3133 = vmatpush2.bf16.msra.mxu0 0
        %3134 = vmatprep.subr.bf16.mxu0 0
        %3135 = vmatpush2.bf16.msra.mxu0 0
        %3136 = vmatprep.subr.bf16.mxu0 0
        %3137 = vmatpush2.bf16.msra.mxu0 0
        %3138 = vmatprep.subr.bf16.mxu0 0
        %3139 = vmatpush2.bf16.msra.mxu0 0
        %3140 = vmatprep.subr.bf16.mxu0 0
        %3141 = vmatpush2.bf16.msra.mxu0 0
        %3142 = vmatprep.subr.bf16.mxu0 0
        %3143 = vmatpush2.bf16.msra.mxu0 0
        %3144 = vmatprep.mubr.bf16.mxu0 0
        %3145 = vmatmul.mubr.bf16.gmra.mxu0 %v2870
        %v3146 = vpop.f32.mrf.mxu0
        %v3147 = vadd.f32 %v3107, %v3146
        %v3148 = vpop.f32.mrf.mxu0
        %v3149 = vpop.f32.mrf.mxu0
        %v3150 = vpop.f32.mrf.mxu0
        %3151 = vdwg.mxu0
        %v3152 = vmax.f32 %v3147, 0.0
        %3154 = vrot.lane.b32.xlu0 %v3152, 112
        %v3155 = vpop.permute.xlu0 %3154
        %v3157 = vmax.f32 %v3152, %v3155
        %v3158 = vld [vmem:[#allocation10] sm:$0xff]
        %v3159 = vld [vmem:[#allocation10 + $0x8] sm:$0xff]
        %v3160 = vld [vmem:[#allocation10 + $0x10] sm:$0xff]
        %v3161 = vld [vmem:[#allocation10 + $0x18] sm:$0xff]
        %v3162 = vld [vmem:[#allocation10 + $0x20] sm:$0xff]
        %v3163 = vld [vmem:[#allocation10 + $0x28] sm:$0xff]
        %v3164 = vld [vmem:[#allocation10 + $0x30] sm:$0xff]
        %v3165 = vld [vmem:[#allocation10 + $0x38] sm:$0xff]
        %v3166 = vld [vmem:[#allocation10 + $0x40] sm:$0xff]
        %v3167 = vld [vmem:[#allocation10 + $0x48] sm:$0xff]
        %v3168 = vld [vmem:[#allocation10 + $0x50] sm:$0xff]
        %v3169 = vld [vmem:[#allocation10 + $0x58] sm:$0xff]
        %v3170 = vld [vmem:[#allocation10 + $0x60] sm:$0xff]
        %v3171 = vld [vmem:[#allocation10 + $0x68] sm:$0xff]
        %v3173 = vsel %vm821, %v3157, 0
        %3175 = vmatprep.subr.mxu0 0.0
        %3176 = vmatpush1.msra.mxu0 0.0
        %3177 = vmatprep.subr.mxu0 0.0
        %3178 = vmatpush1.msra.mxu0 0.0
        %3179 = vmatprep.subr.mxu0 0.0
        %3180 = vmatpush1.msra.mxu0 %v3171
        %3181 = vmatprep.subr.mxu0 0.0
        %3182 = vmatpush1.msra.mxu0 %v3170
        %3183 = vmatprep.subr.mxu0 0.0
        %3184 = vmatpush1.msra.mxu0 %v3169
        %3185 = vmatprep.subr.mxu0 0.0
        %3186 = vmatpush1.msra.mxu0 %v3168
        %3187 = vmatprep.subr.mxu0 0.0
        %3188 = vmatpush1.msra.mxu0 %v3167
        %3189 = vmatprep.subr.mxu0 0.0
        %3190 = vmatpush1.msra.mxu0 %v3166
        %3191 = vmatprep.subr.mxu0 0.0
        %3192 = vmatpush1.msra.mxu0 %v3165
        %3193 = vmatprep.subr.mxu0 0.0
        %3194 = vmatpush1.msra.mxu0 %v3164
        %3195 = vmatprep.subr.mxu0 0.0
        %3196 = vmatpush1.msra.mxu0 %v3163
        %3197 = vmatprep.subr.mxu0 0.0
        %3198 = vmatpush1.msra.mxu0 %v3162
        %3199 = vmatprep.subr.mxu0 0.0
        %3200 = vmatpush1.msra.mxu0 %v3161
        %3201 = vmatprep.subr.mxu0 0.0
        %3202 = vmatpush1.msra.mxu0 %v3160
        %3203 = vmatprep.subr.mxu0 0.0
        %3204 = vmatpush1.msra.mxu0 %v3159
        %3205 = vmatprep.subr.mxu0 0.0
        %3206 = vmatpush1.msra.mxu0 %v3158
        %3207 = vmatprep.subr.mxu0 0.0
        %3208 = vmatpush2.msra.mxu0 0.0
        %3209 = vmatprep.subr.mxu0 0.0
        %3210 = vmatpush2.msra.mxu0 0.0
        %3211 = vmatprep.subr.mxu0 0.0
        %3212 = vmatpush2.msra.mxu0 0.0
        %3213 = vmatprep.subr.mxu0 0.0
        %3214 = vmatpush2.msra.mxu0 0.0
        %3215 = vmatprep.subr.mxu0 0.0
        %3216 = vmatpush2.msra.mxu0 0.0
        %3217 = vmatprep.subr.mxu0 0.0
        %3218 = vmatpush2.msra.mxu0 0.0
        %3219 = vmatprep.subr.mxu0 0.0
        %3220 = vmatpush2.msra.mxu0 0.0
        %3221 = vmatprep.subr.mxu0 0.0
        %3222 = vmatpush2.msra.mxu0 0.0
        %3223 = vmatprep.subr.mxu0 0.0
        %3224 = vmatpush2.msra.mxu0 0.0
        %3225 = vmatprep.subr.mxu0 0.0
        %3226 = vmatpush2.msra.mxu0 0.0
        %3227 = vmatprep.subr.mxu0 0.0
        %3228 = vmatpush2.msra.mxu0 0.0
        %3229 = vmatprep.subr.mxu0 0.0
        %3230 = vmatpush2.msra.mxu0 0.0
        %3231 = vmatprep.subr.mxu0 0.0
        %3232 = vmatpush2.msra.mxu0 0.0
        %3233 = vmatprep.subr.mxu0 0.0
        %3234 = vmatpush2.msra.mxu0 0.0
        %3235 = vmatprep.subr.mxu0 0.0
        %3236 = vmatpush2.msra.mxu0 0.0
        %3237 = vmatprep.subr.mxu0 0.0
        %3238 = vmatpush2.msra.mxu0 0.0
        %3239 = vmatprep.mubr.f32.mxu0 0.0
        %3240 = vmatmul.mubr.f32.gmra.mxu0 %v3173
        %v3241 = vpop.f32.mrf.mxu0
        %v3242 = vadd.f32 0.0, %v3241
        %v3243 = vpop.f32.mrf.mxu0
        %3244 = vdwg.mxu0
        %v3246 = vrot.slane %v3242, 1
        %v3248 = vmax.f32 %v3242, %v3246
        %v3249 = vld [vmem:[#allocation11] sm:$0xf]
        %vm3250 = vcmask 56320
        %v3252 = vsel %vm3250, %v3249, 0
        %v3255 = vsel %vm662, %v3248, 0
        %3257 = vmatprep.subr.mxu0 0.0
        %3258 = vmatpush1.msra.mxu0 0.0
        %3259 = vmatprep.subr.mxu0 0.0
        %3260 = vmatpush1.msra.mxu0 0.0
        %3261 = vmatprep.subr.mxu0 0.0
        %3262 = vmatpush1.msra.mxu0 0.0
        %3263 = vmatprep.subr.mxu0 0.0
        %3264 = vmatpush1.msra.mxu0 0.0
        %3265 = vmatprep.subr.mxu0 0.0
        %3266 = vmatpush1.msra.mxu0 0.0
        %3267 = vmatprep.subr.mxu0 0.0
        %3268 = vmatpush1.msra.mxu0 0.0
        %3269 = vmatprep.subr.mxu0 0.0
        %3270 = vmatpush1.msra.mxu0 0.0
        %3271 = vmatprep.subr.mxu0 0.0
        %3272 = vmatpush1.msra.mxu0 0.0
        %3273 = vmatprep.subr.mxu0 0.0
        %3274 = vmatpush1.msra.mxu0 0.0
        %3275 = vmatprep.subr.mxu0 0.0
        %3276 = vmatpush1.msra.mxu0 0.0
        %3277 = vmatprep.subr.mxu0 0.0
        %3278 = vmatpush1.msra.mxu0 0.0
        %3279 = vmatprep.subr.mxu0 0.0
        %3280 = vmatpush1.msra.mxu0 0.0
        %3281 = vmatprep.subr.mxu0 0.0
        %3282 = vmatpush1.msra.mxu0 0.0
        %3283 = vmatprep.subr.mxu0 0.0
        %3284 = vmatpush1.msra.mxu0 0.0
        %3285 = vmatprep.subr.mxu0 0.0
        %3286 = vmatpush1.msra.mxu0 0.0
        %3287 = vmatprep.subr.mxu0 0.0
        %3288 = vmatpush1.msra.mxu0 %v3255
        %3289 = vmatprep.subr.mxu0 0.0
        %3290 = vmatpush2.msra.mxu0 0.0
        %3291 = vmatprep.subr.mxu0 0.0
        %3292 = vmatpush2.msra.mxu0 0.0
        %3293 = vmatprep.subr.mxu0 0.0
        %3294 = vmatpush2.msra.mxu0 0.0
        %3295 = vmatprep.subr.mxu0 0.0
        %3296 = vmatpush2.msra.mxu0 0.0
        %3297 = vmatprep.subr.mxu0 0.0
        %3298 = vmatpush2.msra.mxu0 0.0
        %3299 = vmatprep.subr.mxu0 0.0
        %3300 = vmatpush2.msra.mxu0 0.0
        %3301 = vmatprep.subr.mxu0 0.0
        %3302 = vmatpush2.msra.mxu0 0.0
        %3303 = vmatprep.subr.mxu0 0.0
        %3304 = vmatpush2.msra.mxu0 0.0
        %3305 = vmatprep.subr.mxu0 0.0
        %3306 = vmatpush2.msra.mxu0 0.0
        %3307 = vmatprep.subr.mxu0 0.0
        %3308 = vmatpush2.msra.mxu0 0.0
        %3309 = vmatprep.subr.mxu0 0.0
        %3310 = vmatpush2.msra.mxu0 0.0
        %3311 = vmatprep.subr.mxu0 0.0
        %3312 = vmatpush2.msra.mxu0 0.0
        %3313 = vmatprep.subr.mxu0 0.0
        %3314 = vmatpush2.msra.mxu0 0.0
        %3315 = vmatprep.subr.mxu0 0.0
        %3316 = vmatpush2.msra.mxu0 0.0
        %3317 = vmatprep.subr.mxu0 0.0
        %3318 = vmatpush2.msra.mxu0 0.0
        %3319 = vmatprep.subr.mxu0 0.0
        %3320 = vmatpush2.msra.mxu0 0.0
        %3321 = vmatprep.mubr.f32.mxu0 0.0
        %3322 = vmatmul.mubr.f32.gmra.mxu0 %v3252
        %v3323 = vpop.f32.mrf.mxu0
        %v3324 = vadd.f32 0.0, %v3323
        %v3325 = vpop.f32.mrf.mxu0
        %3326 = vdwg.mxu0
        %v3327 = vpack.c.bf16 %v3324, %v3324
        %v3328 = vld [vmem:[#allocation13] sm:$0xf]
        %v3329 = vld [vmem:[#allocation13 + $0x4] sm:$0xf]
        %v3330 = vld [vmem:[#allocation13 + $0x8] sm:$0xf]
        %v3331 = vld [vmem:[#allocation13 + $0xc] sm:$0xf]
        %v3332 = vld [vmem:[#allocation13 + $0x10] sm:$0xf]
        %v3333 = vld [vmem:[#allocation13 + $0x14] sm:$0xf]
        %v3334 = vld [vmem:[#allocation13 + $0x18] sm:$0xf]
        %v3335 = vld [vmem:[#allocation13 + $0x1c] sm:$0xf]
        %v3336 = vld [vmem:[#allocation13 + $0x20] sm:$0xf]
        %v3337 = vld [vmem:[#allocation13 + $0x24] sm:$0xf]
        %v3338 = vld [vmem:[#allocation13 + $0x28] sm:$0xf]
        %v3339 = vld [vmem:[#allocation13 + $0x2c] sm:$0xf]
        %v3340 = vld [vmem:[#allocation13 + $0x30] sm:$0xf]
        %v3341 = vld [vmem:[#allocation13 + $0x34] sm:$0xf]
        %v3342 = vld [vmem:[#allocation13 + $0x38] sm:$0xf]
        %v3343 = vld [vmem:[#allocation13 + $0x3c] sm:$0xf]
        %v3345 = vshrl.u32 %v3327, 16
        %v3355 = vunpack.c.l.b16 %v3336
        %v3356 = vunpack.c.l.b16 %v3337
        %v3357 = vunpack.c.l.b16 %v3338
        %v3358 = vunpack.c.l.b16 %v3339
        %v3359 = vunpack.c.l.b16 %v3340
        %v3360 = vunpack.c.l.b16 %v3341
        %v3361 = vunpack.c.l.b16 %v3342
        %v3362 = vunpack.c.l.b16 %v3343
        %v3363 = vpack.c.b16 %v3356, %v3355
        %v3364 = vpack.c.b16 %v3358, %v3357
        %v3365 = vpack.c.b16 %v3360, %v3359
        %v3366 = vpack.c.b16 %v3362, %v3361
        %v3372 = vsel %vm813, %v3345, 0
        %3374 = vmatprep.subr.bf16.mxu0 0
        %3375 = vmatpush1.bf16.msra.mxu0 0
        %3376 = vmatprep.subr.bf16.mxu0 0
        %3377 = vmatpush1.bf16.msra.mxu0 0
        %3378 = vmatprep.subr.bf16.mxu0 0
        %3379 = vmatpush1.bf16.msra.mxu0 0
        %3380 = vmatprep.subr.bf16.mxu0 0
        %3381 = vmatpush1.bf16.msra.mxu0 0
        %3382 = vmatprep.subr.bf16.mxu0 0
        %3383 = vmatpush1.bf16.msra.mxu0 %v3366
        %3384 = vmatprep.subr.bf16.mxu0 0
        %3385 = vmatpush1.bf16.msra.mxu0 %v3365
        %3386 = vmatprep.subr.bf16.mxu0 0
        %3387 = vmatpush1.bf16.msra.mxu0 %v3364
        %3388 = vmatprep.subr.bf16.mxu0 0
        %3389 = vmatpush1.bf16.msra.mxu0 %v3363
        %3390 = vmatprep.subr.bf16.mxu0 0
        %3391 = vmatpush2.bf16.msra.mxu0 0
        %3392 = vmatprep.subr.bf16.mxu0 0
        %3393 = vmatpush2.bf16.msra.mxu0 0
        %3394 = vmatprep.subr.bf16.mxu0 0
        %3395 = vmatpush2.bf16.msra.mxu0 0
        %3396 = vmatprep.subr.bf16.mxu0 0
        %3397 = vmatpush2.bf16.msra.mxu0 0
        %3398 = vmatprep.subr.bf16.mxu0 0
        %3399 = vmatpush2.bf16.msra.mxu0 0
        %3400 = vmatprep.subr.bf16.mxu0 0
        %3401 = vmatpush2.bf16.msra.mxu0 0
        %3402 = vmatprep.subr.bf16.mxu0 0
        %3403 = vmatpush2.bf16.msra.mxu0 0
        %3404 = vmatprep.subr.bf16.mxu0 0
        %3405 = vmatpush2.bf16.msra.mxu0 0
        %3406 = vmatprep.mubr.bf16.mxu0 0
        %3407 = vmatmul.mubr.bf16.gmra.mxu0 %v3372
        %v3408 = vpop.f32.mrf.mxu0
        %v3409 = vadd.f32 0.0, %v3408
        %v3410 = vpop.f32.mrf.mxu0
        %v3411 = vpop.f32.mrf.mxu0
        %v3412 = vpop.f32.mrf.mxu0
        %3413 = vdwg.mxu0
        %v3422 = vunpack.c.l.b16 %v3328
        %v3423 = vunpack.c.l.b16 %v3329
        %v3424 = vunpack.c.l.b16 %v3330
        %v3425 = vunpack.c.l.b16 %v3331
        %v3426 = vunpack.c.l.b16 %v3332
        %v3427 = vunpack.c.l.b16 %v3333
        %v3428 = vunpack.c.l.b16 %v3334
        %v3429 = vunpack.c.l.b16 %v3335
        %v3430 = vpack.c.b16 %v3423, %v3422
        %v3431 = vpack.c.b16 %v3425, %v3424
        %v3432 = vpack.c.b16 %v3427, %v3426
        %v3433 = vpack.c.b16 %v3429, %v3428
        %v3438 = vsel %vm813, %v3327, 0
        %3440 = vmatprep.subr.bf16.mxu0 0
        %3441 = vmatpush1.bf16.msra.mxu0 0
        %3442 = vmatprep.subr.bf16.mxu0 0
        %3443 = vmatpush1.bf16.msra.mxu0 0
        %3444 = vmatprep.subr.bf16.mxu0 0
        %3445 = vmatpush1.bf16.msra.mxu0 0
        %3446 = vmatprep.subr.bf16.mxu0 0
        %3447 = vmatpush1.bf16.msra.mxu0 0
        %3448 = vmatprep.subr.bf16.mxu0 0
        %3449 = vmatpush1.bf16.msra.mxu0 %v3433
        %3450 = vmatprep.subr.bf16.mxu0 0
        %3451 = vmatpush1.bf16.msra.mxu0 %v3432
        %3452 = vmatprep.subr.bf16.mxu0 0
        %3453 = vmatpush1.bf16.msra.mxu0 %v3431
        %3454 = vmatprep.subr.bf16.mxu0 0
        %3455 = vmatpush1.bf16.msra.mxu0 %v3430
        %3456 = vmatprep.subr.bf16.mxu0 0
        %3457 = vmatpush2.bf16.msra.mxu0 0
        %3458 = vmatprep.subr.bf16.mxu0 0
        %3459 = vmatpush2.bf16.msra.mxu0 0
        %3460 = vmatprep.subr.bf16.mxu0 0
        %3461 = vmatpush2.bf16.msra.mxu0 0
        %3462 = vmatprep.subr.bf16.mxu0 0
        %3463 = vmatpush2.bf16.msra.mxu0 0
        %3464 = vmatprep.subr.bf16.mxu0 0
        %3465 = vmatpush2.bf16.msra.mxu0 0
        %3466 = vmatprep.subr.bf16.mxu0 0
        %3467 = vmatpush2.bf16.msra.mxu0 0
        %3468 = vmatprep.subr.bf16.mxu0 0
        %3469 = vmatpush2.bf16.msra.mxu0 0
        %3470 = vmatprep.subr.bf16.mxu0 0
        %3471 = vmatpush2.bf16.msra.mxu0 0
        %3472 = vmatprep.mubr.bf16.mxu0 0
        %3473 = vmatmul.mubr.bf16.gmra.mxu0 %v3438
        %v3474 = vpop.f32.mrf.mxu0
        %v3475 = vadd.f32 %v3409, %v3474
        %v3476 = vpop.f32.mrf.mxu0
        %v3477 = vpop.f32.mrf.mxu0
        %v3478 = vpop.f32.mrf.mxu0
        %3479 = vdwg.mxu0
        %v3480 = vld [vmem:[#allocation13 + $0x40] sm:$0xf]
        %v3481 = vld [vmem:[#allocation13 + $0x44] sm:$0xf]
        %v3482 = vld [vmem:[#allocation13 + $0x48] sm:$0xf]
        %v3483 = vld [vmem:[#allocation13 + $0x4c] sm:$0xf]
        %v3484 = vld [vmem:[#allocation13 + $0x50] sm:$0xf]
        %v3485 = vld [vmem:[#allocation13 + $0x54] sm:$0xf]
        %v3486 = vld [vmem:[#allocation13 + $0x58] sm:$0xf]
        %v3487 = vld [vmem:[#allocation13 + $0x5c] sm:$0xf]
        %v3489 = vrot.slane %v3327, 1
        %v3498 = vunpack.c.l.b16 %v3480
        %v3499 = vunpack.c.l.b16 %v3481
        %v3500 = vunpack.c.l.b16 %v3482
        %v3501 = vunpack.c.l.b16 %v3483
        %v3502 = vunpack.c.l.b16 %v3484
        %v3503 = vunpack.c.l.b16 %v3485
        %v3504 = vunpack.c.l.b16 %v3486
        %v3505 = vunpack.c.l.b16 %v3487
        %v3506 = vpack.c.b16 %v3499, %v3498
        %v3507 = vpack.c.b16 %v3501, %v3500
        %v3508 = vpack.c.b16 %v3503, %v3502
        %v3509 = vpack.c.b16 %v3505, %v3504
        %v3515 = vsel %vm813, %v3489, 0
        %3517 = vmatprep.subr.bf16.mxu0 0
        %3518 = vmatpush1.bf16.msra.mxu0 0
        %3519 = vmatprep.subr.bf16.mxu0 0
        %3520 = vmatpush1.bf16.msra.mxu0 0
        %3521 = vmatprep.subr.bf16.mxu0 0
        %3522 = vmatpush1.bf16.msra.mxu0 0
        %3523 = vmatprep.subr.bf16.mxu0 0
        %3524 = vmatpush1.bf16.msra.mxu0 0
        %3525 = vmatprep.subr.bf16.mxu0 0
        %3526 = vmatpush1.bf16.msra.mxu0 %v3509
        %3527 = vmatprep.subr.bf16.mxu0 0
        %3528 = vmatpush1.bf16.msra.mxu0 %v3508
        %3529 = vmatprep.subr.bf16.mxu0 0
        %3530 = vmatpush1.bf16.msra.mxu0 %v3507
        %3531 = vmatprep.subr.bf16.mxu0 0
        %3532 = vmatpush1.bf16.msra.mxu0 %v3506
        %3533 = vmatprep.subr.bf16.mxu0 0
        %3534 = vmatpush2.bf16.msra.mxu0 0
        %3535 = vmatprep.subr.bf16.mxu0 0
        %3536 = vmatpush2.bf16.msra.mxu0 0
        %3537 = vmatprep.subr.bf16.mxu0 0
        %3538 = vmatpush2.bf16.msra.mxu0 0
        %3539 = vmatprep.subr.bf16.mxu0 0
        %3540 = vmatpush2.bf16.msra.mxu0 0
        %3541 = vmatprep.subr.bf16.mxu0 0
        %3542 = vmatpush2.bf16.msra.mxu0 0
        %3543 = vmatprep.subr.bf16.mxu0 0
        %3544 = vmatpush2.bf16.msra.mxu0 0
        %3545 = vmatprep.subr.bf16.mxu0 0
        %3546 = vmatpush2.bf16.msra.mxu0 0
        %3547 = vmatprep.subr.bf16.mxu0 0
        %3548 = vmatpush2.bf16.msra.mxu0 0
        %3549 = vmatprep.mubr.bf16.mxu0 0
        %3550 = vmatmul.mubr.bf16.gmra.mxu0 %v3515
        %v3551 = vpop.f32.mrf.mxu0
        %v3552 = vadd.f32 0.0, %v3551
        %v3553 = vpop.f32.mrf.mxu0
        %v3554 = vpop.f32.mrf.mxu0
        %v3555 = vpop.f32.mrf.mxu0
        %3556 = vdwg.mxu0
        %v3557 = vadd.f32 %v3475, %v3552
        %v3558 = vld [vmem:[#allocation13 + $0x60] sm:$0xf]
        %v3559 = vld [vmem:[#allocation13 + $0x64] sm:$0xf]
        %v3560 = vld [vmem:[#allocation13 + $0x68] sm:$0xf]
        %v3561 = vld [vmem:[#allocation13 + $0x6c] sm:$0xf]
        %v3562 = vld [vmem:[#allocation13 + $0x70] sm:$0xf]
        %v3563 = vld [vmem:[#allocation13 + $0x74] sm:$0xf]
        %v3564 = vld [vmem:[#allocation13 + $0x78] sm:$0xf]
        %v3565 = vld [vmem:[#allocation13 + $0x7c] sm:$0xf]
        %v3566 = vrot.slane %v3345, 1
        %v3575 = vunpack.c.l.b16 %v3558
        %v3576 = vunpack.c.l.b16 %v3559
        %v3577 = vunpack.c.l.b16 %v3560
        %v3578 = vunpack.c.l.b16 %v3561
        %v3579 = vunpack.c.l.b16 %v3562
        %v3580 = vunpack.c.l.b16 %v3563
        %v3581 = vunpack.c.l.b16 %v3564
        %v3582 = vunpack.c.l.b16 %v3565
        %v3583 = vpack.c.b16 %v3576, %v3575
        %v3584 = vpack.c.b16 %v3578, %v3577
        %v3585 = vpack.c.b16 %v3580, %v3579
        %v3586 = vpack.c.b16 %v3582, %v3581
        %v3592 = vsel %vm813, %v3566, 0
        %3594 = vmatprep.subr.bf16.mxu0 0
        %3595 = vmatpush1.bf16.msra.mxu0 0
        %3596 = vmatprep.subr.bf16.mxu0 0
        %3597 = vmatpush1.bf16.msra.mxu0 0
        %3598 = vmatprep.subr.bf16.mxu0 0
        %3599 = vmatpush1.bf16.msra.mxu0 0
        %3600 = vmatprep.subr.bf16.mxu0 0
        %3601 = vmatpush1.bf16.msra.mxu0 0
        %3602 = vmatprep.subr.bf16.mxu0 0
        %3603 = vmatpush1.bf16.msra.mxu0 %v3586
        %3604 = vmatprep.subr.bf16.mxu0 0
        %3605 = vmatpush1.bf16.msra.mxu0 %v3585
        %3606 = vmatprep.subr.bf16.mxu0 0
        %3607 = vmatpush1.bf16.msra.mxu0 %v3584
        %3608 = vmatprep.subr.bf16.mxu0 0
        %3609 = vmatpush1.bf16.msra.mxu0 %v3583
        %3610 = vmatprep.subr.bf16.mxu0 0
        %3611 = vmatpush2.bf16.msra.mxu0 0
        %3612 = vmatprep.subr.bf16.mxu0 0
        %3613 = vmatpush2.bf16.msra.mxu0 0
        %3614 = vmatprep.subr.bf16.mxu0 0
        %3615 = vmatpush2.bf16.msra.mxu0 0
        %3616 = vmatprep.subr.bf16.mxu0 0
        %3617 = vmatpush2.bf16.msra.mxu0 0
        %3618 = vmatprep.subr.bf16.mxu0 0
        %3619 = vmatpush2.bf16.msra.mxu0 0
        %3620 = vmatprep.subr.bf16.mxu0 0
        %3621 = vmatpush2.bf16.msra.mxu0 0
        %3622 = vmatprep.subr.bf16.mxu0 0
        %3623 = vmatpush2.bf16.msra.mxu0 0
        %3624 = vmatprep.subr.bf16.mxu0 0
        %3625 = vmatpush2.bf16.msra.mxu0 0
        %3626 = vmatprep.mubr.bf16.mxu0 0
        %3627 = vmatmul.mubr.bf16.gmra.mxu0 %v3592
        %v3628 = vpop.f32.mrf.mxu0
        %v3629 = vadd.f32 0.0, %v3628
        %v3630 = vpop.f32.mrf.mxu0
        %v3631 = vpop.f32.mrf.mxu0
        %v3632 = vpop.f32.mrf.mxu0
        %3633 = vdwg.mxu0
        %v3634 = vadd.f32 %v3557, %v3629
        %v3635 = vld [vmem:[#allocation14] sm:$0x1]
        %v3636 = vadd.f32 %v3634, %v3635
        %v3637 = vmax.f32 %v3636, 0.0
        %v3638 = vpack.c.bf16 %v3637, %v3637
        %v3639 = vld [vmem:[%s11] sm:$0xf]
        %v3640 = vld [vmem:[%s11 + $0x4] sm:$0xf]
        %v3641 = vld [vmem:[%s11 + $0x8] sm:$0xf]
        %v3642 = vld [vmem:[%s11 + $0xc] sm:$0xf]
        %v3643 = vld [vmem:[%s11 + $0x10] sm:$0xf]
        %v3644 = vld [vmem:[%s11 + $0x14] sm:$0xf]
        %v3645 = vld [vmem:[%s11 + $0x18] sm:$0xf]
        %v3646 = vld [vmem:[%s11 + $0x1c] sm:$0xf]
        %v3647 = vld [vmem:[%s11 + $0x20] sm:$0xf]
        %v3648 = vld [vmem:[%s11 + $0x24] sm:$0xf]
        %v3649 = vld [vmem:[%s11 + $0x28] sm:$0xf]
        %v3650 = vld [vmem:[%s11 + $0x2c] sm:$0xf]
        %v3651 = vld [vmem:[%s11 + $0x30] sm:$0xf]
        %v3652 = vld [vmem:[%s11 + $0x34] sm:$0xf]
        %v3653 = vld [vmem:[%s11 + $0x38] sm:$0xf]
        %v3654 = vld [vmem:[%s11 + $0x3c] sm:$0xf]
        %v3655 = vld [vmem:[%s12] sm:$0x1]
        %v3672 = vunpack.c.l.b16 %v3639
        %v3673 = vunpack.c.l.b16 %v3640
        %v3674 = vunpack.c.l.b16 %v3641
        %v3675 = vunpack.c.l.b16 %v3642
        %v3676 = vunpack.c.l.b16 %v3643
        %v3677 = vunpack.c.l.b16 %v3644
        %v3678 = vunpack.c.l.b16 %v3645
        %v3679 = vunpack.c.l.b16 %v3646
        %v3680 = vunpack.c.l.b16 %v3647
        %v3681 = vunpack.c.l.b16 %v3648
        %v3682 = vunpack.c.l.b16 %v3649
        %v3683 = vunpack.c.l.b16 %v3650
        %v3684 = vunpack.c.l.b16 %v3651
        %v3685 = vunpack.c.l.b16 %v3652
        %v3686 = vunpack.c.l.b16 %v3653
        %v3687 = vunpack.c.l.b16 %v3654
        %v3688 = vpack.c.b16 %v3673, %v3672
        %v3689 = vpack.c.b16 %v3675, %v3674
        %v3690 = vpack.c.b16 %v3677, %v3676
        %v3691 = vpack.c.b16 %v3679, %v3678
        %v3692 = vpack.c.b16 %v3681, %v3680
        %v3693 = vpack.c.b16 %v3683, %v3682
        %v3694 = vpack.c.b16 %v3685, %v3684
        %v3695 = vpack.c.b16 %v3687, %v3686
        %3704 = vmatprep.subr.bf16.mxu0 0
        %3705 = vmatpush1.bf16.msra.mxu0 %v3695
        %3706 = vmatprep.subr.bf16.mxu0 0
        %3707 = vmatpush1.bf16.msra.mxu0 %v3694
        %3708 = vmatprep.subr.bf16.mxu0 0
        %3709 = vmatpush1.bf16.msra.mxu0 %v3693
        %3710 = vmatprep.subr.bf16.mxu0 0
        %3711 = vmatpush1.bf16.msra.mxu0 %v3692
        %3712 = vmatprep.subr.bf16.mxu0 0
        %3713 = vmatpush1.bf16.msra.mxu0 %v3691
        %3714 = vmatprep.subr.bf16.mxu0 0
        %3715 = vmatpush1.bf16.msra.mxu0 %v3690
        %3716 = vmatprep.subr.bf16.mxu0 0
        %3717 = vmatpush1.bf16.msra.mxu0 %v3689
        %3718 = vmatprep.subr.bf16.mxu0 0
        %3719 = vmatpush1.bf16.msra.mxu0 %v3688
        %3720 = vmatprep.subr.bf16.mxu0 0
        %3721 = vmatpush2.bf16.msra.mxu0 0
        %3722 = vmatprep.subr.bf16.mxu0 0
        %3723 = vmatpush2.bf16.msra.mxu0 0
        %3724 = vmatprep.subr.bf16.mxu0 0
        %3725 = vmatpush2.bf16.msra.mxu0 0
        %3726 = vmatprep.subr.bf16.mxu0 0
        %3727 = vmatpush2.bf16.msra.mxu0 0
        %3728 = vmatprep.subr.bf16.mxu0 0
        %3729 = vmatpush2.bf16.msra.mxu0 0
        %3730 = vmatprep.subr.bf16.mxu0 0
        %3731 = vmatpush2.bf16.msra.mxu0 0
        %3732 = vmatprep.subr.bf16.mxu0 0
        %3733 = vmatpush2.bf16.msra.mxu0 0
        %3734 = vmatprep.subr.bf16.mxu0 0
        %3735 = vmatpush2.bf16.msra.mxu0 0
        %3736 = vmatprep.mubr.bf16.mxu0 0
        %3737 = vmatmul.mubr.bf16.gmra.mxu0 %v3638
        %v3738 = vpop.f32.mrf.mxu0
        %v3739 = vadd.f32 %v3655, %v3738
        %v3740 = vpop.f32.mrf.mxu0
        %v3741 = vpop.f32.mrf.mxu0
        %v3742 = vpop.f32.mrf.mxu0
        %3743 = vdwg.mxu0
        %v3744 = vmax.f32 %v3739, 0.0
        %v3745 = vpack.c.bf16 %v3744, %v3744
        %v3746 = vld [vmem:[#allocation16] sm:$0xf]
        %v3747 = vld [vmem:[#allocation16 + $0x4] sm:$0xf]
        %v3748 = vld [vmem:[#allocation16 + $0x8] sm:$0xf]
        %v3749 = vld [vmem:[#allocation16 + $0xc] sm:$0xf]
        %v3750 = vld [vmem:[#allocation16 + $0x10] sm:$0xf]
        %v3751 = vld [vmem:[#allocation16 + $0x14] sm:$0xf]
        %v3752 = vld [vmem:[#allocation16 + $0x18] sm:$0xf]
        %v3753 = vld [vmem:[#allocation16 + $0x1c] sm:$0xf]
        %v3754 = vld [vmem:[%s14] sm:$0x1]
        %v3763 = vunpack.c.l.b16 %v3746
        %v3764 = vunpack.c.l.b16 %v3747
        %v3765 = vunpack.c.l.b16 %v3748
        %v3766 = vunpack.c.l.b16 %v3749
        %v3767 = vunpack.c.l.b16 %v3750
        %v3768 = vunpack.c.l.b16 %v3751
        %v3769 = vunpack.c.l.b16 %v3752
        %v3770 = vunpack.c.l.b16 %v3753
        %v3771 = vpack.c.b16 %v3764, %v3763
        %v3772 = vpack.c.b16 %v3766, %v3765
        %v3773 = vpack.c.b16 %v3768, %v3767
        %v3774 = vpack.c.b16 %v3770, %v3769
        %v3780 = vsel %vm813, %v3745, 0
        %3782 = vmatprep.subr.bf16.mxu0 0
        %3783 = vmatpush1.bf16.msra.mxu0 0
        %3784 = vmatprep.subr.bf16.mxu0 0
        %3785 = vmatpush1.bf16.msra.mxu0 0
        %3786 = vmatprep.subr.bf16.mxu0 0
        %3787 = vmatpush1.bf16.msra.mxu0 0
        %3788 = vmatprep.subr.bf16.mxu0 0
        %3789 = vmatpush1.bf16.msra.mxu0 0
        %3790 = vmatprep.subr.bf16.mxu0 0
        %3791 = vmatpush1.bf16.msra.mxu0 %v3774
        %3792 = vmatprep.subr.bf16.mxu0 0
        %3793 = vmatpush1.bf16.msra.mxu0 %v3773
        %3794 = vmatprep.subr.bf16.mxu0 0
        %3795 = vmatpush1.bf16.msra.mxu0 %v3772
        %3796 = vmatprep.subr.bf16.mxu0 0
        %3797 = vmatpush1.bf16.msra.mxu0 %v3771
        %3798 = vmatprep.subr.bf16.mxu0 0
        %3799 = vmatpush2.bf16.msra.mxu0 0
        %3800 = vmatprep.subr.bf16.mxu0 0
        %3801 = vmatpush2.bf16.msra.mxu0 0
        %3802 = vmatprep.subr.bf16.mxu0 0
        %3803 = vmatpush2.bf16.msra.mxu0 0
        %3804 = vmatprep.subr.bf16.mxu0 0
        %3805 = vmatpush2.bf16.msra.mxu0 0
        %3806 = vmatprep.subr.bf16.mxu0 0
        %3807 = vmatpush2.bf16.msra.mxu0 0
        %3808 = vmatprep.subr.bf16.mxu0 0
        %3809 = vmatpush2.bf16.msra.mxu0 0
        %3810 = vmatprep.subr.bf16.mxu0 0
        %3811 = vmatpush2.bf16.msra.mxu0 0
        %3812 = vmatprep.subr.bf16.mxu0 0
        %3813 = vmatpush2.bf16.msra.mxu0 0
        %3814 = vmatprep.mubr.bf16.mxu0 0
        %3815 = vmatmul.mubr.bf16.gmra.mxu0 %v3780
        %v3816 = vpop.f32.mrf.mxu0
        %v3817 = vadd.f32 %v3754, %v3816
        %v3818 = vpop.f32.mrf.mxu0
        %v3819 = vpop.f32.mrf.mxu0
        %v3820 = vpop.f32.mrf.mxu0
        %3821 = vdwg.mxu0
        %3822 = vst [vmem:[%s611] sm:$0x1] %v3817
        %s3823 = sand.u32 %s362, 1
        %s3824 = scalar_lea.sflag [#allocation4], %s3823
        %s3825 = sand.u32 %s362, 1
        %s3826 = scalar_lea.vmem [#allocation17], %s3825
        // Predicated region
        $region117: #{_lambda_.1} parent=79 // pred_check
          %p3827 = pneg %p372
        $region118: #{_lambda_.1} parent=79 // pred_check_branch
          %3829 = sbr.rel (%p3827) target = $region120
        $region119: #{_lambda_.1} parent=79 // pred_region
          %s3831 = ssub.s32 16, 16
          %3832 = vsyncadd %s3824, %s3831
          %s3833 = smul.addr %s34, 16
          %s3834 = scalar_lea.hbm %s15, %s3833
          %s3836 = sshll.u32 %s3826, 4
          %s3837 = int_to_ptr.vmem [resolvable:$true] %s3836
          %3839 = dma.vmem_to_hbm [thread:$0]  %s3837, 16, %s3834, %s3824
        $region120: #{_lambda_.1} parent=79 // pred_fallthru
          _
      $region80: #{_lambda_.1} parent=5 // pred_fallthru
        _
      %p3840 = scmp.le.s32.totalorder 2, %s29
      // Predicated region
      $region121: #{_lambda_.1} parent=5 // pred_check
        %p3841 = pneg %p3840
      $region122: #{_lambda_.1} parent=5 // pred_check_branch
        %3843 = sbr.rel (%p3841) target = $region124
      $region123: #{_lambda_.1} parent=5 // pred_region
        %s3844 = ssub.s32 %s29, 2
        // Predicated region
        $region125: #{_lambda_.1} parent=123 // pred_check
          %p3845 = pneg %p378
        $region126: #{_lambda_.1} parent=123 // pred_check_branch
          %3847 = sbr.rel (%p3845) target = $region128
        $region127: #{_lambda_.1} parent=123 // pred_region
          %s3848 = sand.u32 %s363, 1
          %s3849 = scalar_lea.sflag [#allocation4], %s3848
          %s3850 = sand.u32 %s363, 1
          %s3851 = scalar_lea.vmem [#allocation17], %s3850
          %3852 = dma.done %s3849, 16
        $region128: #{_lambda_.1} parent=123 // pred_fallthru
          _
      $region124: #{_lambda_.1} parent=5 // pred_fallthru
        _
    $region6: #{_lambda_.1} parent=1 // loop_footer
      %s33 = sadd.s32 1, %s29
    $region7: #{_lambda_.1} parent=1 // loop_footer_branch
      %28 = sbr.rel target = $region3
    $region8: #{_lambda_.1} parent=1 // loop_exit
      _
    %3853 = vsyncpa [#allocation3], 1
    %s3854 = scalar_lea.sflag [#allocation3], 1
    %3855 = vsyncpa %s3854, 1
    %3856 = vsyncpa [#allocation6], 1
    %3857 = vsyncpa [#allocation9], 1
    %3858 = vsyncpa [#allocation12], 1
    %3859 = vsyncpa [#allocation15], 1
    %3860 = vsyncpa [#allocation4], 1
    %s3861 = scalar_lea.sflag [#allocation4], 1
    %3862 = vsyncpa %s3861, 1

</llo_original>
